<compile_context>
chip_gen: v7x
topology: tpu7x:2x2x1
jax: 0.10.0
libtpu: 0.0.40
codegen_flags: <defaults>
</compile_context>

<pallas_src>
import functools

import jax
import jax.numpy as jnp
import numpy as np
from jax.experimental import pallas as pl
from jax.experimental.pallas import tpu as pltpu

_EPS = 1e-5     # nn.BatchNorm2d default
_LANE = 128     # TPU lane width


def _round_up(x, m):
    return ((x + m - 1) // m) * m


# ------------------------------ Pallas kernels ------------------------------ #

def _conv3x3_stats_kernel(x_ref, w_ref, y_ref, sum_ref, ssq_ref):
    """Pass 1: 3x3 conv (9 accumulated MXU matmuls) + per-channel sum / sumsq.

    x_ref   : (1, H+2, W+2, Cp)  spatially zero-padded NHWC block (f32/bf16)
    w_ref   : (9, Cp, Cp)        per-tap weight matrices, tap = ky*3 + kx
    y_ref   : (1, H*W, Cp)       conv pre-activations (spilled for pass 2)
    sum_ref : (1, 8, Cp) f32     per-channel partial sum (broadcast over 8 rows)
    ssq_ref : (1, 8, Cp) f32     per-channel partial sum of squares
    """
    hp2, wp2, cp = x_ref.shape[1], x_ref.shape[2], x_ref.shape[3]
    h, w = hp2 - 2, wp2 - 2

    acc = None
    for ky in range(3):
        for kx in range(3):
            xt = x_ref[0, ky:ky + h, kx:kx + w, :].reshape(h * w, cp)
            part = jnp.dot(xt, w_ref[ky * 3 + kx],
                           preferred_element_type=jnp.float32)
            acc = part if acc is None else acc + part

    # NOTE: no conv-bias add here — under training-mode BN it is cancelled
    # exactly by the batch mean, so skipping it is a zero-error optimization.
    y_ref[0] = acc.astype(y_ref.dtype)
    s = jnp.sum(acc, axis=0, keepdims=True)              # (1, Cp)
    q = jnp.sum(acc * acc, axis=0, keepdims=True)        # (1, Cp)
    sum_ref[0] = jnp.broadcast_to(s, (8, cp))
    ssq_ref[0] = jnp.broadcast_to(q, (8, cp))


def _bn_relu_pad_kernel(y_ref, scale_ref, shift_ref, o_ref):
    """Pass 2 (branch 1): y*scale + shift, ReLU, written into a spatially
    zero-padded NHWC buffer so it directly feeds the next conv.

    y_ref : (1, H*W, Cp); scale/shift : (1, Cp) f32; o_ref : (1, H+2, W+2, Cp)
    """
    h, w, cp = o_ref.shape[1] - 2, o_ref.shape[2] - 2, o_ref.shape[3]
    a = jnp.maximum(y_ref[0] * scale_ref[...] + shift_ref[...], 0.0)
    o_ref[...] = jnp.zeros_like(o_ref)                               # zero halo
    o_ref[0, 1:h + 1, 1:w + 1, :] = a.reshape(h, w, cp).astype(o_ref.dtype)


def _bn_add_relu_kernel(y_ref, scale_ref, shift_ref, r_ref, o_ref):
    """Pass 2 (branch 2): y*scale + shift + residual, ReLU."""
    a = y_ref[0] * scale_ref[...] + shift_ref[...] + r_ref[0]
    o_ref[0] = jnp.maximum(a, 0.0)


# --------------------------------- JAX glue --------------------------------- #

def _pack_weight(w_oihw, cp):
    """(Cout, Cin, 3, 3) -> (9, Cp, Cp), tap = ky*3 + kx, matrix (Cin, Cout)."""
    cout, cin = w_oihw.shape[0], w_oihw.shape[1]
    w = jnp.transpose(w_oihw, (2, 3, 1, 0)).reshape(9, cin, cout)
    return jnp.pad(w.astype(jnp.float32), ((0, 0), (0, cp - cin), (0, cp - cout)))


def _pad_vec(v, cp):
    return jnp.pad(v.astype(jnp.float32), (0, cp - v.shape[0]))


def _conv_bn_stats(x_pad, w_taps, h, w):
    """Pass 1 wrapper: conv pre-activations + full-batch channel sum / sumsq."""
    n, cp = x_pad.shape[0], x_pad.shape[-1]
    hw = h * w
    itemsize = x_pad.dtype.itemsize
    flops = 2 * n * hw * 9 * cp * cp
    bytes_accessed = (x_pad.size * itemsize + w_taps.size * w_taps.dtype.itemsize
                      + n * hw * cp * itemsize + 2 * n * 8 * cp * 4)

    y, psum, pssq = pl.pallas_call(
        _conv3x3_stats_kernel,
        out_shape=(
            jax.ShapeDtypeStruct((n, hw, cp), x_pad.dtype),   # conv spill
            jax.ShapeDtypeStruct((n, 8, cp), jnp.float32),    # partial sums
            jax.ShapeDtypeStruct((n, 8, cp), jnp.float32),    # partial sumsq
        ),
        grid=(n,),
        in_specs=[
            pl.BlockSpec((1, h + 2, w + 2, cp), lambda i: (i, 0, 0, 0)),
            pl.BlockSpec((9, cp, cp), lambda i: (0, 0, 0)),   # weights resident
        ],
        out_specs=(
            pl.BlockSpec((1, hw, cp), lambda i: (i, 0, 0)),
            pl.BlockSpec((1, 8, cp), lambda i: (i, 0, 0)),
            pl.BlockSpec((1, 8, cp), lambda i: (i, 0, 0)),
        ),
        compiler_params=pltpu.CompilerParams(dimension_semantics=("parallel",)),
        cost_estimate=pl.CostEstimate(flops=flops, transcendentals=0,
                                      bytes_accessed=bytes_accessed),
    )(x_pad, w_taps)

    return y, psum[:, 0, :].sum(axis=0), pssq[:, 0, :].sum(axis=0)


def _bn_scale_shift(csum, cssq, count, gamma_p, beta_p):
    """Fold training-mode BN into one per-channel scale/shift (tiny vectors)."""
    mean = csum / count
    var = jnp.maximum(cssq / count - mean * mean, 0.0)
    scale = gamma_p * jax.lax.rsqrt(var + _EPS)
    shift = beta_p - mean * scale
    return scale.reshape(1, -1), shift.reshape(1, -1)


@functools.partial(jax.jit, static_argnames=("compute_dtype",))
def residual_block(x_nchw, params, *, compute_dtype=jnp.bfloat16):
    """Forward of ResidualBlock(in_ch == out_ch, stride=1, downsample=None)."""
    n, c, h, w = x_nchw.shape
    cp = _round_up(c, _LANE)
    hw = h * w
    count = float(n * hw)

    # One-time layout prep: NCHW -> channel-padded NHWC (+ spatial halo pad).
    x_nhwc = jnp.transpose(x_nchw, (0, 2, 3, 1)).astype(jnp.float32)
    x_cp = jnp.pad(x_nhwc, ((0, 0), (0, 0), (0, 0), (0, cp - c)))
    x_sp = jnp.pad(x_cp, ((0, 0), (1, 1), (1, 1), (0, 0))).astype(compute_dtype)

    w1 = _pack_weight(params["w1"], cp).astype(compute_dtype)
    w2 = _pack_weight(params["w2"], cp).astype(compute_dtype)
    g1, be1 = _pad_vec(params["g1"], cp), _pad_vec(params["be1"], cp)
    g2, be2 = _pad_vec(params["g2"], cp), _pad_vec(params["be2"], cp)
    # params["b1"] / params["b2"] intentionally unused (cancelled by BN mean).

    # ---- branch 1: conv3x3 -> BN -> ReLU (output stored with zero halo) ----
    y1, s1, q1 = _conv_bn_stats(x_sp, w1, h, w)
    sc1, sh1 = _bn_scale_shift(s1, q1, count, g1, be1)
    a1_pad = pl.pallas_call(
        _bn_relu_pad_kernel,
        out_shape=jax.ShapeDtypeStruct((n, h + 2, w + 2, cp), compute_dtype),
        grid=(n,),
        in_specs=[
            pl.BlockSpec((1, hw, cp), lambda i: (i, 0, 0)),
            pl.BlockSpec((1, cp), lambda i: (0, 0)),
            pl.BlockSpec((1, cp), lambda i: (0, 0)),
        ],
        out_specs=pl.BlockSpec((1, h + 2, w + 2, cp), lambda i: (i, 0, 0, 0)),
        compiler_params=pltpu.CompilerParams(dimension_semantics=("parallel",)),
    )(y1, sc1, sh1)

    # ---- branch 2: conv3x3 -> BN -> +residual -> ReLU ----
    y2, s2, q2 = _conv_bn_stats(a1_pad, w2, h, w)
    sc2, sh2 = _bn_scale_shift(s2, q2, count, g2, be2)
    resid = x_cp.reshape(n, hw, cp)                       # f32, channel-padded
    out = pl.pallas_call(
        _bn_add_relu_kernel,
        out_shape=jax.ShapeDtypeStruct((n, hw, cp), jnp.float32),
        grid=(n,),
        in_specs=[
            pl.BlockSpec((1, hw, cp), lambda i: (i, 0, 0)),
            pl.BlockSpec((1, cp), lambda i: (0, 0)),
            pl.BlockSpec((1, cp), lambda i: (0, 0)),
            pl.BlockSpec((1, hw, cp), lambda i: (i, 0, 0)),
        ],
        out_specs=pl.BlockSpec((1, hw, cp), lambda i: (i, 0, 0)),
        compiler_params=pltpu.CompilerParams(dimension_semantics=("parallel",)),
    )(y2, sc2, sh2, resid)

    out = out.reshape(n, h, w, cp)[:, :, :, :c]
    return jnp.transpose(out, (0, 3, 1, 2))               # NHWC -> NCHW


# ------------------------------- pure-JAX ref ------------------------------- #

def _ref_conv(x_nchw, w, b):
    y = jax.lax.conv_general_dilated(
        x_nchw, w, window_strides=(1, 1), padding="SAME",
        dimension_numbers=("NCHW", "OIHW", "NCHW"))
    return y + b.reshape(1, -1, 1, 1)


def _ref_bn_train(x_nchw, g, be):
    mean = jnp.mean(x_nchw, axis=(0, 2, 3), keepdims=True)
    var = jnp.mean((x_nchw - mean) ** 2, axis=(0, 2, 3), keepdims=True)
    return (x_nchw - mean) * jax.lax.rsqrt(var + _EPS) * g.reshape(1, -1, 1, 1) \
        + be.reshape(1, -1, 1, 1)


def residual_block_ref(x_nchw, p):
    out = jax.nn.relu(_ref_bn_train(_ref_conv(x_nchw, p["w1"], p["b1"]),
                                    p["g1"], p["be1"]))
    out = _ref_bn_train(_ref_conv(out, p["w2"], p["b2"]), p["g2"], p["be2"])
    return jax.nn.relu(out + x_nchw)


# ----------------------------------- main ------------------------------------ #

if __name__ == "__main__":
    N, C, H, W = 2, 4, 16, 16            # in_channels == out_channels == 4
    key = jax.random.PRNGKey(0)
    ks = jax.random.split(key, 9)

    x = jax.random.normal(ks[0], (N, C, H, W), jnp.float32)
    params = {
        "w1": 0.1 * jax.random.normal(ks[1], (C, C, 3, 3), jnp.float32),
        "b1": 0.1 * jax.random.normal(ks[2], (C,), jnp.float32),
        "g1": 1.0 + 0.1 * jax.random.normal(ks[3], (C,), jnp.float32),
        "be1": 0.1 * jax.random.normal(ks[4], (C,), jnp.float32),
        "w2": 0.1 * jax.random.normal(ks[5], (C, C, 3, 3), jnp.float32),
        "b2": 0.1 * jax.random.normal(ks[6], (C,), jnp.float32),
        "g2": 1.0 + 0.1 * jax.random.normal(ks[7], (C,), jnp.float32),
        "be2": 0.1 * jax.random.normal(ks[8], (C,), jnp.float32),
    }

    ref = jax.block_until_ready(residual_block_ref(x, params))

    # Exact (f32 MXU) path: tight tolerance.
    out_f32 = jax.block_until_ready(
        residual_block(x, params, compute_dtype=jnp.float32))
    assert out_f32.shape == (N, C, H, W), out_f32.shape
    np.testing.assert_allclose(np.asarray(out_f32), np.asarray(ref),
                               atol=2e-3, rtol=2e-3)

    # bf16-MXU path (default, recommended for v6e/v7x): bf16-level tolerance.
    out_bf16 = jax.block_until_ready(residual_block(x, params))
    assert out_bf16.shape == (N, C, H, W), out_bf16.shape
    np.testing.assert_allclose(np.asarray(out_bf16), np.asarray(ref),
                               atol=2e-2, rtol=2e-2)

    print("KERNEL_OK")
</pallas_src>

<mosaic_0001>
module attributes {stable_mosaic.version = 11 : i64} {
  func.func @_conv3x3_stats_kernel(%arg0: i32, %arg1: memref<1x18x18x128xf32, #tpu.memory_space<vmem>>, %arg2: memref<9x128x128xf32, #tpu.memory_space<vmem>>, %arg3: memref<1x256x128xf32, #tpu.memory_space<vmem>>, %arg4: memref<1x8x128xf32, #tpu.memory_space<vmem>>, %arg5: memref<1x8x128xf32, #tpu.memory_space<vmem>>) attributes {dimension_semantics = [#tpu.dimension_semantics<parallel>], iteration_bounds = array<i64: 2>, scalar_prefetch = 0 : i64, scratch_operands = 0 : i64, tpu.core_type = #tpu.core_type<tc>, window_params = [{transform_indices = @transform_0, window_bounds = array<i64: 1, 18, 18, 128>}, {pipeline_mode = #tpu.pipeline_mode<synchronous>, transform_indices = @transform_1, window_bounds = array<i64: 9, 128, 128>}, {transform_indices = @transform_2, window_bounds = array<i64: 1, 256, 128>}, {transform_indices = @transform_3, window_bounds = array<i64: 1, 8, 128>}, {transform_indices = @transform_4, window_bounds = array<i64: 1, 8, 128>}]} {
    %c0 = arith.constant 0 : index
    %c0_0 = arith.constant 0 : index
    %c0_1 = arith.constant 0 : index
    %c0_2 = arith.constant 0 : index
    %0 = vector.load %arg1[%c0, %c0_0, %c0_1, %c0_2] : memref<1x18x18x128xf32, #tpu.memory_space<vmem>>, vector<1x16x16x128xf32>
    %1 = vector.shape_cast %0 : vector<1x16x16x128xf32> to vector<16x16x128xf32>
    %2 = vector.shape_cast %1 : vector<16x16x128xf32> to vector<256x128xf32>
    %c0_3 = arith.constant 0 : index
    %c0_4 = arith.constant 0 : index
    %c0_5 = arith.constant 0 : index
    %3 = vector.load %arg2[%c0_3, %c0_4, %c0_5] : memref<9x128x128xf32, #tpu.memory_space<vmem>>, vector<1x128x128xf32>
    %4 = vector.shape_cast %3 : vector<1x128x128xf32> to vector<128x128xf32>
    %cst = arith.constant dense<0.000000e+00> : vector<256x128xf32>
    %5 = tpu.matmul %2, %4, %cst {dimension_numbers = #tpu.dot_dimension_numbers<[1], [0], [0], [1], [0, 0, 1, 1], [], []>} : vector<256x128xf32>, vector<128x128xf32>, vector<256x128xf32> -> vector<256x128xf32>
    %c0_6 = arith.constant 0 : index
    %c0_7 = arith.constant 0 : index
    %c1 = arith.constant 1 : index
    %c0_8 = arith.constant 0 : index
    %6 = vector.load %arg1[%c0_6, %c0_7, %c1, %c0_8] : memref<1x18x18x128xf32, #tpu.memory_space<vmem>>, vector<1x16x16x128xf32>
    %7 = vector.shape_cast %6 : vector<1x16x16x128xf32> to vector<16x16x128xf32>
    %8 = vector.shape_cast %7 : vector<16x16x128xf32> to vector<256x128xf32>
    %c1_9 = arith.constant 1 : index
    %c0_10 = arith.constant 0 : index
    %c0_11 = arith.constant 0 : index
    %9 = vector.load %arg2[%c1_9, %c0_10, %c0_11] : memref<9x128x128xf32, #tpu.memory_space<vmem>>, vector<1x128x128xf32>
    %10 = vector.shape_cast %9 : vector<1x128x128xf32> to vector<128x128xf32>
    %cst_12 = arith.constant dense<0.000000e+00> : vector<256x128xf32>
    %11 = tpu.matmul %8, %10, %cst_12 {dimension_numbers = #tpu.dot_dimension_numbers<[1], [0], [0], [1], [0, 0, 1, 1], [], []>} : vector<256x128xf32>, vector<128x128xf32>, vector<256x128xf32> -> vector<256x128xf32>
    %12 = arith.addf %5, %11 : vector<256x128xf32>
    %c0_13 = arith.constant 0 : index
    %c0_14 = arith.constant 0 : index
    %c2 = arith.constant 2 : index
    %c0_15 = arith.constant 0 : index
    %13 = vector.load %arg1[%c0_13, %c0_14, %c2, %c0_15] : memref<1x18x18x128xf32, #tpu.memory_space<vmem>>, vector<1x16x16x128xf32>
    %14 = vector.shape_cast %13 : vector<1x16x16x128xf32> to vector<16x16x128xf32>
    %15 = vector.shape_cast %14 : vector<16x16x128xf32> to vector<256x128xf32>
    %c2_16 = arith.constant 2 : index
    %c0_17 = arith.constant 0 : index
    %c0_18 = arith.constant 0 : index
    %16 = vector.load %arg2[%c2_16, %c0_17, %c0_18] : memref<9x128x128xf32, #tpu.memory_space<vmem>>, vector<1x128x128xf32>
    %17 = vector.shape_cast %16 : vector<1x128x128xf32> to vector<128x128xf32>
    %cst_19 = arith.constant dense<0.000000e+00> : vector<256x128xf32>
    %18 = tpu.matmul %15, %17, %cst_19 {dimension_numbers = #tpu.dot_dimension_numbers<[1], [0], [0], [1], [0, 0, 1, 1], [], []>} : vector<256x128xf32>, vector<128x128xf32>, vector<256x128xf32> -> vector<256x128xf32>
    %19 = arith.addf %12, %18 : vector<256x128xf32>
    %c0_20 = arith.constant 0 : index
    %c1_21 = arith.constant 1 : index
    %c0_22 = arith.constant 0 : index
    %c0_23 = arith.constant 0 : index
    %20 = vector.load %arg1[%c0_20, %c1_21, %c0_22, %c0_23] : memref<1x18x18x128xf32, #tpu.memory_space<vmem>>, vector<1x16x16x128xf32>
    %21 = vector.shape_cast %20 : vector<1x16x16x128xf32> to vector<16x16x128xf32>
    %22 = vector.shape_cast %21 : vector<16x16x128xf32> to vector<256x128xf32>
    %c3 = arith.constant 3 : index
    %c0_24 = arith.constant 0 : index
    %c0_25 = arith.constant 0 : index
    %23 = vector.load %arg2[%c3, %c0_24, %c0_25] : memref<9x128x128xf32, #tpu.memory_space<vmem>>, vector<1x128x128xf32>
    %24 = vector.shape_cast %23 : vector<1x128x128xf32> to vector<128x128xf32>
    %cst_26 = arith.constant dense<0.000000e+00> : vector<256x128xf32>
    %25 = tpu.matmul %22, %24, %cst_26 {dimension_numbers = #tpu.dot_dimension_numbers<[1], [0], [0], [1], [0, 0, 1, 1], [], []>} : vector<256x128xf32>, vector<128x128xf32>, vector<256x128xf32> -> vector<256x128xf32>
    %26 = arith.addf %19, %25 : vector<256x128xf32>
    %c0_27 = arith.constant 0 : index
    %c1_28 = arith.constant 1 : index
    %c1_29 = arith.constant 1 : index
    %c0_30 = arith.constant 0 : index
    %27 = vector.load %arg1[%c0_27, %c1_28, %c1_29, %c0_30] : memref<1x18x18x128xf32, #tpu.memory_space<vmem>>, vector<1x16x16x128xf32>
    %28 = vector.shape_cast %27 : vector<1x16x16x128xf32> to vector<16x16x128xf32>
    %29 = vector.shape_cast %28 : vector<16x16x128xf32> to vector<256x128xf32>
    %c4 = arith.constant 4 : index
    %c0_31 = arith.constant 0 : index
    %c0_32 = arith.constant 0 : index
    %30 = vector.load %arg2[%c4, %c0_31, %c0_32] : memref<9x128x128xf32, #tpu.memory_space<vmem>>, vector<1x128x128xf32>
    %31 = vector.shape_cast %30 : vector<1x128x128xf32> to vector<128x128xf32>
    %cst_33 = arith.constant dense<0.000000e+00> : vector<256x128xf32>
    %32 = tpu.matmul %29, %31, %cst_33 {dimension_numbers = #tpu.dot_dimension_numbers<[1], [0], [0], [1], [0, 0, 1, 1], [], []>} : vector<256x128xf32>, vector<128x128xf32>, vector<256x128xf32> -> vector<256x128xf32>
    %33 = arith.addf %26, %32 : vector<256x128xf32>
    %c0_34 = arith.constant 0 : index
    %c1_35 = arith.constant 1 : index
    %c2_36 = arith.constant 2 : index
    %c0_37 = arith.constant 0 : index
    %34 = vector.load %arg1[%c0_34, %c1_35, %c2_36, %c0_37] : memref<1x18x18x128xf32, #tpu.memory_space<vmem>>, vector<1x16x16x128xf32>
    %35 = vector.shape_cast %34 : vector<1x16x16x128xf32> to vector<16x16x128xf32>
    %36 = vector.shape_cast %35 : vector<16x16x128xf32> to vector<256x128xf32>
    %c5 = arith.constant 5 : index
    %c0_38 = arith.constant 0 : index
    %c0_39 = arith.constant 0 : index
    %37 = vector.load %arg2[%c5, %c0_38, %c0_39] : memref<9x128x128xf32, #tpu.memory_space<vmem>>, vector<1x128x128xf32>
    %38 = vector.shape_cast %37 : vector<1x128x128xf32> to vector<128x128xf32>
    %cst_40 = arith.constant dense<0.000000e+00> : vector<256x128xf32>
    %39 = tpu.matmul %36, %38, %cst_40 {dimension_numbers = #tpu.dot_dimension_numbers<[1], [0], [0], [1], [0, 0, 1, 1], [], []>} : vector<256x128xf32>, vector<128x128xf32>, vector<256x128xf32> -> vector<256x128xf32>
    %40 = arith.addf %33, %39 : vector<256x128xf32>
    %c0_41 = arith.constant 0 : index
    %c2_42 = arith.constant 2 : index
    %c0_43 = arith.constant 0 : index
    %c0_44 = arith.constant 0 : index
    %41 = vector.load %arg1[%c0_41, %c2_42, %c0_43, %c0_44] : memref<1x18x18x128xf32, #tpu.memory_space<vmem>>, vector<1x16x16x128xf32>
    %42 = vector.shape_cast %41 : vector<1x16x16x128xf32> to vector<16x16x128xf32>
    %43 = vector.shape_cast %42 : vector<16x16x128xf32> to vector<256x128xf32>
    %c6 = arith.constant 6 : index
    %c0_45 = arith.constant 0 : index
    %c0_46 = arith.constant 0 : index
    %44 = vector.load %arg2[%c6, %c0_45, %c0_46] : memref<9x128x128xf32, #tpu.memory_space<vmem>>, vector<1x128x128xf32>
    %45 = vector.shape_cast %44 : vector<1x128x128xf32> to vector<128x128xf32>
    %cst_47 = arith.constant dense<0.000000e+00> : vector<256x128xf32>
    %46 = tpu.matmul %43, %45, %cst_47 {dimension_numbers = #tpu.dot_dimension_numbers<[1], [0], [0], [1], [0, 0, 1, 1], [], []>} : vector<256x128xf32>, vector<128x128xf32>, vector<256x128xf32> -> vector<256x128xf32>
    %47 = arith.addf %40, %46 : vector<256x128xf32>
    %c0_48 = arith.constant 0 : index
    %c2_49 = arith.constant 2 : index
    %c1_50 = arith.constant 1 : index
    %c0_51 = arith.constant 0 : index
    %48 = vector.load %arg1[%c0_48, %c2_49, %c1_50, %c0_51] : memref<1x18x18x128xf32, #tpu.memory_space<vmem>>, vector<1x16x16x128xf32>
    %49 = vector.shape_cast %48 : vector<1x16x16x128xf32> to vector<16x16x128xf32>
    %50 = vector.shape_cast %49 : vector<16x16x128xf32> to vector<256x128xf32>
    %c7 = arith.constant 7 : index
    %c0_52 = arith.constant 0 : index
    %c0_53 = arith.constant 0 : index
    %51 = vector.load %arg2[%c7, %c0_52, %c0_53] : memref<9x128x128xf32, #tpu.memory_space<vmem>>, vector<1x128x128xf32>
    %52 = vector.shape_cast %51 : vector<1x128x128xf32> to vector<128x128xf32>
    %cst_54 = arith.constant dense<0.000000e+00> : vector<256x128xf32>
    %53 = tpu.matmul %50, %52, %cst_54 {dimension_numbers = #tpu.dot_dimension_numbers<[1], [0], [0], [1], [0, 0, 1, 1], [], []>} : vector<256x128xf32>, vector<128x128xf32>, vector<256x128xf32> -> vector<256x128xf32>
    %54 = arith.addf %47, %53 : vector<256x128xf32>
    %c0_55 = arith.constant 0 : index
    %c2_56 = arith.constant 2 : index
    %c2_57 = arith.constant 2 : index
    %c0_58 = arith.constant 0 : index
    %55 = vector.load %arg1[%c0_55, %c2_56, %c2_57, %c0_58] : memref<1x18x18x128xf32, #tpu.memory_space<vmem>>, vector<1x16x16x128xf32>
    %56 = vector.shape_cast %55 : vector<1x16x16x128xf32> to vector<16x16x128xf32>
    %57 = vector.shape_cast %56 : vector<16x16x128xf32> to vector<256x128xf32>
    %c8 = arith.constant 8 : index
    %c0_59 = arith.constant 0 : index
    %c0_60 = arith.constant 0 : index
    %58 = vector.load %arg2[%c8, %c0_59, %c0_60] : memref<9x128x128xf32, #tpu.memory_space<vmem>>, vector<1x128x128xf32>
    %59 = vector.shape_cast %58 : vector<1x128x128xf32> to vector<128x128xf32>
    %cst_61 = arith.constant dense<0.000000e+00> : vector<256x128xf32>
    %60 = tpu.matmul %57, %59, %cst_61 {dimension_numbers = #tpu.dot_dimension_numbers<[1], [0], [0], [1], [0, 0, 1, 1], [], []>} : vector<256x128xf32>, vector<128x128xf32>, vector<256x128xf32> -> vector<256x128xf32>
    %61 = arith.addf %54, %60 : vector<256x128xf32>
    %c0_62 = arith.constant 0 : index
    %c0_63 = arith.constant 0 : index
    %c0_64 = arith.constant 0 : index
    %62 = vector.load %arg3[%c0_62, %c0_63, %c0_64] : memref<1x256x128xf32, #tpu.memory_space<vmem>>, vector<1x256x128xf32>
    %63 = vector.shape_cast %62 : vector<1x256x128xf32> to vector<256x128xf32>
    %64 = vector.shape_cast %61 : vector<256x128xf32> to vector<1x256x128xf32>
    tpu.vector_store %arg3[%c0_62, %c0_63, %c0_64], %64 {strides = array<i32>} : memref<1x256x128xf32, #tpu.memory_space<vmem>>, vector<1x256x128xf32>,
    %cst_65 = arith.constant dense<0.000000e+00> : vector<128xf32>
    %65 = vector.multi_reduction <add>, %61, %cst_65 [0] : vector<256x128xf32> to vector<128xf32>
    %66 = vector.shape_cast %65 : vector<128xf32> to vector<1x128xf32>
    %67 = arith.mulf %61, %61 : vector<256x128xf32>
    %cst_66 = arith.constant dense<0.000000e+00> : vector<128xf32>
    %68 = vector.multi_reduction <add>, %67, %cst_66 [0] : vector<256x128xf32> to vector<128xf32>
    %69 = vector.shape_cast %68 : vector<128xf32> to vector<1x128xf32>
    %70 = vector.shape_cast %66 : vector<1x128xf32> to vector<1x128xf32>
    %71 = vector.broadcast %70 : vector<1x128xf32> to vector<8x128xf32>
    %c0_67 = arith.constant 0 : index
    %c0_68 = arith.constant 0 : index
    %c0_69 = arith.constant 0 : index
    %72 = vector.load %arg4[%c0_67, %c0_68, %c0_69] : memref<1x8x128xf32, #tpu.memory_space<vmem>>, vector<1x8x128xf32>
    %73 = vector.shape_cast %72 : vector<1x8x128xf32> to vector<8x128xf32>
    %74 = vector.shape_cast %71 : vector<8x128xf32> to vector<1x8x128xf32>
    tpu.vector_store %arg4[%c0_67, %c0_68, %c0_69], %74 {strides = array<i32>} : memref<1x8x128xf32, #tpu.memory_space<vmem>>, vector<1x8x128xf32>,
    %75 = vector.shape_cast %69 : vector<1x128xf32> to vector<1x128xf32>
    %76 = vector.broadcast %75 : vector<1x128xf32> to vector<8x128xf32>
    %c0_70 = arith.constant 0 : index
    %c0_71 = arith.constant 0 : index
    %c0_72 = arith.constant 0 : index
    %77 = vector.load %arg5[%c0_70, %c0_71, %c0_72] : memref<1x8x128xf32, #tpu.memory_space<vmem>>, vector<1x8x128xf32>
    %78 = vector.shape_cast %77 : vector<1x8x128xf32> to vector<8x128xf32>
    %79 = vector.shape_cast %76 : vector<8x128xf32> to vector<1x8x128xf32>
    tpu.vector_store %arg5[%c0_70, %c0_71, %c0_72], %79 {strides = array<i32>} : memref<1x8x128xf32, #tpu.memory_space<vmem>>, vector<1x8x128xf32>,
    return
  }
  func.func @transform_0(%arg0: i32) -> (i32, i32, i32, i32) {
    %c0_i32 = arith.constant 0 : i32
    %c0_i32_0 = arith.constant 0 : i32
    %c0_i32_1 = arith.constant 0 : i32
    %c0_i32_2 = arith.constant 0 : i32
    return %arg0, %c0_i32, %c0_i32_0, %c0_i32_1 : i32, i32, i32, i32
  }
  func.func @transform_1(%arg0: i32) -> (i32, i32, i32) {
    %c0_i32 = arith.constant 0 : i32
    %c0_i32_0 = arith.constant 0 : i32
    %c0_i32_1 = arith.constant 0 : i32
    %c0_i32_2 = arith.constant 0 : i32
    return %c0_i32, %c0_i32_0, %c0_i32_1 : i32, i32, i32
  }
  func.func @transform_2(%arg0: i32) -> (i32, i32, i32) {
    %c0_i32 = arith.constant 0 : i32
    %c0_i32_0 = arith.constant 0 : i32
    %c0_i32_1 = arith.constant 0 : i32
    return %arg0, %c0_i32, %c0_i32_0 : i32, i32, i32
  }
  func.func @transform_3(%arg0: i32) -> (i32, i32, i32) {
    %c0_i32 = arith.constant 0 : i32
    %c0_i32_0 = arith.constant 0 : i32
    %c0_i32_1 = arith.constant 0 : i32
    return %arg0, %c0_i32, %c0_i32_0 : i32, i32, i32
  }
  func.func @transform_4(%arg0: i32) -> (i32, i32, i32) {
    %c0_i32 = arith.constant 0 : i32
    %c0_i32_0 = arith.constant 0 : i32
    %c0_i32_1 = arith.constant 0 : i32
    return %arg0, %c0_i32, %c0_i32_0 : i32, i32, i32
  }
}

module attributes {stable_mosaic.version = 11 : i64} {
  func.func @_bn_relu_pad_kernel(%arg0: i32, %arg1: memref<1x256x128xf32, #tpu.memory_space<vmem>>, %arg2: memref<1x128xf32, #tpu.memory_space<vmem>>, %arg3: memref<1x128xf32, #tpu.memory_space<vmem>>, %arg4: memref<1x18x18x128xf32, #tpu.memory_space<vmem>>) attributes {dimension_semantics = [#tpu.dimension_semantics<parallel>], iteration_bounds = array<i64: 2>, scalar_prefetch = 0 : i64, scratch_operands = 0 : i64, tpu.core_type = #tpu.core_type<tc>, window_params = [{transform_indices = @transform_0, window_bounds = array<i64: 1, 256, 128>}, {pipeline_mode = #tpu.pipeline_mode<synchronous>, transform_indices = @transform_1, window_bounds = array<i64: 1, 128>}, {pipeline_mode = #tpu.pipeline_mode<synchronous>, transform_indices = @transform_2, window_bounds = array<i64: 1, 128>}, {transform_indices = @transform_3, window_bounds = array<i64: 1, 18, 18, 128>}]} {
    %c0 = arith.constant 0 : index
    %c0_0 = arith.constant 0 : index
    %c0_1 = arith.constant 0 : index
    %0 = vector.load %arg1[%c0, %c0_0, %c0_1] : memref<1x256x128xf32, #tpu.memory_space<vmem>>, vector<1x256x128xf32>
    %1 = vector.shape_cast %0 : vector<1x256x128xf32> to vector<256x128xf32>
    %c0_2 = arith.constant 0 : index
    %c0_3 = arith.constant 0 : index
    %2 = vector.load %arg2[%c0_2, %c0_3] : memref<1x128xf32, #tpu.memory_space<vmem>>, vector<1x128xf32>
    %3 = vector.broadcast %2 : vector<1x128xf32> to vector<256x128xf32>
    %4 = arith.mulf %1, %3 : vector<256x128xf32>
    %c0_4 = arith.constant 0 : index
    %c0_5 = arith.constant 0 : index
    %5 = vector.load %arg3[%c0_4, %c0_5] : memref<1x128xf32, #tpu.memory_space<vmem>>, vector<1x128xf32>
    %6 = vector.broadcast %5 : vector<1x128xf32> to vector<256x128xf32>
    %7 = arith.addf %4, %6 : vector<256x128xf32>
    %cst = arith.constant 0.000000e+00 : f32
    %8 = vector.broadcast %cst : f32 to vector<256x128xf32>
    %9 = arith.maximumf %7, %8 : vector<256x128xf32>
    %cst_6 = arith.constant 0.000000e+00 : f32
    %10 = vector.broadcast %cst_6 : f32 to vector<1x18x18x128xf32>
    %c0_7 = arith.constant 0 : index
    %c0_8 = arith.constant 0 : index
    %c0_9 = arith.constant 0 : index
    %c0_10 = arith.constant 0 : index
    %11 = vector.load %arg4[%c0_7, %c0_8, %c0_9, %c0_10] : memref<1x18x18x128xf32, #tpu.memory_space<vmem>>, vector<1x18x18x128xf32>
    tpu.vector_store %arg4[%c0_7, %c0_8, %c0_9, %c0_10], %10 {strides = array<i32>} : memref<1x18x18x128xf32, #tpu.memory_space<vmem>>, vector<1x18x18x128xf32>,
    %12 = vector.shape_cast %9 : vector<256x128xf32> to vector<16x16x128xf32>
    %c0_11 = arith.constant 0 : index
    %c1 = arith.constant 1 : index
    %c1_12 = arith.constant 1 : index
    %c0_13 = arith.constant 0 : index
    %13 = vector.load %arg4[%c0_11, %c1, %c1_12, %c0_13] : memref<1x18x18x128xf32, #tpu.memory_space<vmem>>, vector<1x16x16x128xf32>
    %14 = vector.shape_cast %13 : vector<1x16x16x128xf32> to vector<16x16x128xf32>
    %15 = vector.shape_cast %12 : vector<16x16x128xf32> to vector<1x16x16x128xf32>
    tpu.vector_store %arg4[%c0_11, %c1, %c1_12, %c0_13], %15 {strides = array<i32>} : memref<1x18x18x128xf32, #tpu.memory_space<vmem>>, vector<1x16x16x128xf32>,
    return
  }
  func.func @transform_0(%arg0: i32) -> (i32, i32, i32) {
    %c0_i32 = arith.constant 0 : i32
    %c0_i32_0 = arith.constant 0 : i32
    %c0_i32_1 = arith.constant 0 : i32
    return %arg0, %c0_i32, %c0_i32_0 : i32, i32, i32
  }
  func.func @transform_1(%arg0: i32) -> (i32, i32) {
    %c0_i32 = arith.constant 0 : i32
    %c0_i32_0 = arith.constant 0 : i32
    %c0_i32_1 = arith.constant 0 : i32
    return %c0_i32, %c0_i32_0 : i32, i32
  }
  func.func @transform_2(%arg0: i32) -> (i32, i32) {
    %c0_i32 = arith.constant 0 : i32
    %c0_i32_0 = arith.constant 0 : i32
    %c0_i32_1 = arith.constant 0 : i32
    return %c0_i32, %c0_i32_0 : i32, i32
  }
  func.func @transform_3(%arg0: i32) -> (i32, i32, i32, i32) {
    %c0_i32 = arith.constant 0 : i32
    %c0_i32_0 = arith.constant 0 : i32
    %c0_i32_1 = arith.constant 0 : i32
    %c0_i32_2 = arith.constant 0 : i32
    return %arg0, %c0_i32, %c0_i32_0, %c0_i32_1 : i32, i32, i32, i32
  }
}

module attributes {stable_mosaic.version = 11 : i64} {
  func.func @_bn_add_relu_kernel(%arg0: i32, %arg1: memref<1x256x128xf32, #tpu.memory_space<vmem>>, %arg2: memref<1x128xf32, #tpu.memory_space<vmem>>, %arg3: memref<1x128xf32, #tpu.memory_space<vmem>>, %arg4: memref<1x256x128xf32, #tpu.memory_space<vmem>>, %arg5: memref<1x256x128xf32, #tpu.memory_space<vmem>>) attributes {dimension_semantics = [#tpu.dimension_semantics<parallel>], iteration_bounds = array<i64: 2>, scalar_prefetch = 0 : i64, scratch_operands = 0 : i64, tpu.core_type = #tpu.core_type<tc>, window_params = [{transform_indices = @transform_0, window_bounds = array<i64: 1, 256, 128>}, {pipeline_mode = #tpu.pipeline_mode<synchronous>, transform_indices = @transform_1, window_bounds = array<i64: 1, 128>}, {pipeline_mode = #tpu.pipeline_mode<synchronous>, transform_indices = @transform_2, window_bounds = array<i64: 1, 128>}, {transform_indices = @transform_3, window_bounds = array<i64: 1, 256, 128>}, {transform_indices = @transform_4, window_bounds = array<i64: 1, 256, 128>}]} {
    %c0 = arith.constant 0 : index
    %c0_0 = arith.constant 0 : index
    %c0_1 = arith.constant 0 : index
    %0 = vector.load %arg1[%c0, %c0_0, %c0_1] : memref<1x256x128xf32, #tpu.memory_space<vmem>>, vector<1x256x128xf32>
    %1 = vector.shape_cast %0 : vector<1x256x128xf32> to vector<256x128xf32>
    %c0_2 = arith.constant 0 : index
    %c0_3 = arith.constant 0 : index
    %2 = vector.load %arg2[%c0_2, %c0_3] : memref<1x128xf32, #tpu.memory_space<vmem>>, vector<1x128xf32>
    %3 = vector.broadcast %2 : vector<1x128xf32> to vector<256x128xf32>
    %4 = arith.mulf %1, %3 : vector<256x128xf32>
    %c0_4 = arith.constant 0 : index
    %c0_5 = arith.constant 0 : index
    %5 = vector.load %arg3[%c0_4, %c0_5] : memref<1x128xf32, #tpu.memory_space<vmem>>, vector<1x128xf32>
    %6 = vector.broadcast %5 : vector<1x128xf32> to vector<256x128xf32>
    %7 = arith.addf %4, %6 : vector<256x128xf32>
    %c0_6 = arith.constant 0 : index
    %c0_7 = arith.constant 0 : index
    %c0_8 = arith.constant 0 : index
    %8 = vector.load %arg4[%c0_6, %c0_7, %c0_8] : memref<1x256x128xf32, #tpu.memory_space<vmem>>, vector<1x256x128xf32>
    %9 = vector.shape_cast %8 : vector<1x256x128xf32> to vector<256x128xf32>
    %10 = arith.addf %7, %9 : vector<256x128xf32>
    %cst = arith.constant 0.000000e+00 : f32
    %11 = vector.broadcast %cst : f32 to vector<256x128xf32>
    %12 = arith.maximumf %10, %11 : vector<256x128xf32>
    %c0_9 = arith.constant 0 : index
    %c0_10 = arith.constant 0 : index
    %c0_11 = arith.constant 0 : index
    %13 = vector.load %arg5[%c0_9, %c0_10, %c0_11] : memref<1x256x128xf32, #tpu.memory_space<vmem>>, vector<1x256x128xf32>
    %14 = vector.shape_cast %13 : vector<1x256x128xf32> to vector<256x128xf32>
    %15 = vector.shape_cast %12 : vector<256x128xf32> to vector<1x256x128xf32>
    tpu.vector_store %arg5[%c0_9, %c0_10, %c0_11], %15 {strides = array<i32>} : memref<1x256x128xf32, #tpu.memory_space<vmem>>, vector<1x256x128xf32>,
    return
  }
  func.func @transform_0(%arg0: i32) -> (i32, i32, i32) {
    %c0_i32 = arith.constant 0 : i32
    %c0_i32_0 = arith.constant 0 : i32
    %c0_i32_1 = arith.constant 0 : i32
    return %arg0, %c0_i32, %c0_i32_0 : i32, i32, i32
  }
  func.func @transform_1(%arg0: i32) -> (i32, i32) {
    %c0_i32 = arith.constant 0 : i32
    %c0_i32_0 = arith.constant 0 : i32
    %c0_i32_1 = arith.constant 0 : i32
    return %c0_i32, %c0_i32_0 : i32, i32
  }
  func.func @transform_2(%arg0: i32) -> (i32, i32) {
    %c0_i32 = arith.constant 0 : i32
    %c0_i32_0 = arith.constant 0 : i32
    %c0_i32_1 = arith.constant 0 : i32
    return %c0_i32, %c0_i32_0 : i32, i32
  }
  func.func @transform_3(%arg0: i32) -> (i32, i32, i32) {
    %c0_i32 = arith.constant 0 : i32
    %c0_i32_0 = arith.constant 0 : i32
    %c0_i32_1 = arith.constant 0 : i32
    return %arg0, %c0_i32, %c0_i32_0 : i32, i32, i32
  }
  func.func @transform_4(%arg0: i32) -> (i32, i32, i32) {
    %c0_i32 = arith.constant 0 : i32
    %c0_i32_0 = arith.constant 0 : i32
    %c0_i32_1 = arith.constant 0 : i32
    return %arg0, %c0_i32, %c0_i32_0 : i32, i32, i32
  }
}

</mosaic_0001>

<llo_original>
// kernel: residual_block.5
$region0: #{residual_block.5}
  #allocation0 [shape = 'u32[]', space=smem, size = 0x4, offset = 0x4, fixed_abs, tag = 'smem constant byte address 0x4 - core index']
  #allocation1 [shape = 'u32[144,128]{1,0:T(1,128)}', space=vmem, size = 0x12000, scoped, tag = 'internal scratch']
  %s0 = inlined_call_operand.vmem [shape: f32[2,256,128], index: 0, kind: input, shape index: {}]
  %s1 = inlined_call_operand.vmem [shape: f32[1,128], index: 1, kind: input, shape index: {}]
  %s2 = inlined_call_operand.vmem [shape: f32[1,128], index: 2, kind: input, shape index: {}]
  %s3 = inlined_call_operand.vmem [shape: f32[2,18,18,128], index: 3, kind: output, shape index: {}]
  %s4 = sld [smem:[#allocation0]]
  $region45: #{residual_block.5} parent=0
    _
  %s6 = ssub.s32 1, %s4
  %s7 = scalar_select 0, %s6, %s4
  loop: start=0, step=1, limit=4
  $region2: #{residual_block.5} parent=0 // loop_pre_header
    _
  $region3: #{residual_block.5} parent=0 // loop_header
    %s9 = sphi 0, %s13
    %p10 = scmp.ge.s32.totalorder %s9, 4
    %s19 = sphi 0, %s21
    %s22 = sphi 0, %s19
    %s23 = sphi 0, %s22
    %s39 = sphi 0, %s23
    %s43 = sphi 0, %s43
    %s45 = sphi 0, %s43
    %s46 = sphi 0, %s45
    %s60 = sphi 0, %s46
    %s64 = sphi 0, %s64
    %s66 = sphi 0, %s64
    %s67 = sphi 0, %s66
    %s81 = sphi 0, %s67
    %s87 = sphi 0, %s89
    %s90 = sphi 0, %s87
    %s91 = sphi 0, %s90
    %s107 = sphi 0, %s91
  $region4: #{residual_block.5} parent=0 // loop_header_branch
    %12 = sbr.rel (%p10) target = $region8
  $region5: #{residual_block.5} parent=0 // loop_body
    %s14 = ssub.s32 %s9, 1
    %s15 = ssub.s32 %s9, 2
    %s16 = sadd.s32 %s9, 1
    %s17 = ssub.s32 %s9, %s16
    %p18 = scmp.eq.s32.totalorder %s17, 0
    %s20 = sadd.s32 %s19, 1
    %s21 = scalar_select %p18, %s19, %s20
    %p24 = pneg %p18
    %p25 = scmp.eq.s32.totalorder %s9, 1
    %p26 = por %p24, %p25
    %p27 = scmp.ne.s32.totalorder %s19, %s22
    %p28 = scmp.eq.s32.totalorder %s9, 0
    %p29 = por %p27, %p28
    %p30 = scmp.ne.s32.totalorder %s19, %s22
    %p31 = scmp.eq.s32.totalorder %s14, 1
    %p32 = por %p30, %p31
    %p33 = scmp.ne.s32.totalorder %s22, %s23
    %p34 = scmp.eq.s32.totalorder %s14, 0
    %p35 = por %p33, %p34
    %p36 = scmp.ne.s32.totalorder %s22, %s23
    %p37 = scmp.eq.s32.totalorder %s15, 1
    %p38 = por %p36, %p37
    %p40 = scmp.ne.s32.totalorder %s23, %s39
    %p41 = scmp.eq.s32.totalorder %s15, 0
    %p42 = por %p40, %p41
    %s44 = sadd.s32 %s43, 1
    %p47 = scmp.eq.s32.totalorder %s9, 1
    %p48 = scmp.ne.s32.totalorder %s43, %s45
    %p49 = scmp.eq.s32.totalorder %s9, 0
    %p50 = por %p48, %p49
    %p51 = scmp.ne.s32.totalorder %s43, %s45
    %p52 = scmp.eq.s32.totalorder %s14, 1
    %p53 = por %p51, %p52
    %p54 = scmp.ne.s32.totalorder %s45, %s46
    %p55 = scmp.eq.s32.totalorder %s14, 0
    %p56 = por %p54, %p55
    %p57 = scmp.ne.s32.totalorder %s45, %s46
    %p58 = scmp.eq.s32.totalorder %s15, 1
    %p59 = por %p57, %p58
    %p61 = scmp.ne.s32.totalorder %s46, %s60
    %p62 = scmp.eq.s32.totalorder %s15, 0
    %p63 = por %p61, %p62
    %s65 = sadd.s32 %s64, 1
    %p68 = scmp.eq.s32.totalorder %s9, 1
    %p69 = scmp.ne.s32.totalorder %s64, %s66
    %p70 = scmp.eq.s32.totalorder %s9, 0
    %p71 = por %p69, %p70
    %p72 = scmp.ne.s32.totalorder %s64, %s66
    %p73 = scmp.eq.s32.totalorder %s14, 1
    %p74 = por %p72, %p73
    %p75 = scmp.ne.s32.totalorder %s66, %s67
    %p76 = scmp.eq.s32.totalorder %s14, 0
    %p77 = por %p75, %p76
    %p78 = scmp.ne.s32.totalorder %s66, %s67
    %p79 = scmp.eq.s32.totalorder %s15, 1
    %p80 = por %p78, %p79
    %p82 = scmp.ne.s32.totalorder %s67, %s81
    %p83 = scmp.eq.s32.totalorder %s15, 0
    %p84 = por %p82, %p83
    %s85 = ssub.s32 %s9, %s16
    %p86 = scmp.eq.s32.totalorder %s85, 0
    %s88 = sadd.s32 %s87, 1
    %s89 = scalar_select %p86, %s87, %s88
    %p92 = pneg %p86
    %p93 = scmp.eq.s32.totalorder %s9, 1
    %p94 = por %p92, %p93
    %p95 = scmp.ne.s32.totalorder %s87, %s90
    %p96 = scmp.eq.s32.totalorder %s9, 0
    %p97 = por %p95, %p96
    %p98 = scmp.ne.s32.totalorder %s87, %s90
    %p99 = scmp.eq.s32.totalorder %s14, 1
    %p100 = por %p98, %p99
    %p101 = scmp.ne.s32.totalorder %s90, %s91
    %p102 = scmp.eq.s32.totalorder %s14, 0
    %p103 = por %p101, %p102
    %p104 = scmp.ne.s32.totalorder %s90, %s91
    %p105 = scmp.eq.s32.totalorder %s15, 1
    %p106 = por %p104, %p105
    %p108 = scmp.ne.s32.totalorder %s91, %s107
    %p109 = scmp.eq.s32.totalorder %s15, 0
    %p110 = por %p108, %p109
    %p111 = scmp.le.s32.totalorder 1, %s9
    %p112 = scmp.lt.s32.totalorder %s9, 3
    %p113 = pnand %p111, %p112
    %p114 = pneg %p113
    // Predicated region
    $region9: #{residual_block.5} parent=5 // pred_check
      _
    $region10: #{residual_block.5} parent=5 // pred_check_branch
      %116 = sbr.rel (%p113) target = $region12
    $region11: #{residual_block.5} parent=5 // pred_region
      %s117 = ssub.s32 %s9, 1
      // Predicated region
      $region13: #{residual_block.5} parent=11 // pred_check
        %p118 = pneg %p56
      $region14: #{residual_block.5} parent=11 // pred_check_branch
        %120 = sbr.rel (%p118) target = $region16
      $region15: #{residual_block.5} parent=11 // pred_region
        _
      $region16: #{residual_block.5} parent=11 // pred_fallthru
        _
      // Predicated region
      $region17: #{residual_block.5} parent=11 // pred_check
        %p121 = pneg %p77
      $region18: #{residual_block.5} parent=11 // pred_check_branch
        %123 = sbr.rel (%p121) target = $region20
      $region19: #{residual_block.5} parent=11 // pred_region
        _
      $region20: #{residual_block.5} parent=11 // pred_fallthru
        _
    $region12: #{residual_block.5} parent=5 // pred_fallthru
      _
    %p124 = scmp.lt.s32.totalorder %s9, 2
    // Predicated region
    $region21: #{residual_block.5} parent=5 // pred_check
      %p125 = pneg %p124
    $region22: #{residual_block.5} parent=5 // pred_check_branch
      %127 = sbr.rel (%p125) target = $region24
    $region23: #{residual_block.5} parent=5 // pred_region
      // Predicated region
      $region25: #{residual_block.5} parent=23 // pred_check
        %p128 = pneg %p29
      $region26: #{residual_block.5} parent=23 // pred_check_branch
        %130 = sbr.rel (%p128) target = $region28
      $region27: #{residual_block.5} parent=23 // pred_region
        %p131 = scmp.lt.s32.totalorder %s9, 1
        %s132 = scalar_select %p131, %s9, 1
        %s133 = smul.addr %s132, 32
        %s134 = smul.addr %s133, 8
        %s135 = scalar_lea.vmem %s0, %s134
      $region28: #{residual_block.5} parent=23 // pred_fallthru
        _
    $region24: #{residual_block.5} parent=5 // pred_fallthru
      _
    %p136 = scmp.le.s32.totalorder 1, %s9
    %p137 = scmp.lt.s32.totalorder %s9, 3
    %p138 = pnand %p136, %p137
    %p139 = pneg %p138
    // Predicated region
    $region29: #{residual_block.5} parent=5 // pred_check
      _
    $region30: #{residual_block.5} parent=5 // pred_check_branch
      %141 = sbr.rel (%p138) target = $region32
    $region31: #{residual_block.5} parent=5 // pred_region
      %s142 = ssub.s32 %s9, 1
      %p143 = scmp.lt.s32.totalorder %s14, 1
      %s144 = scalar_select %p143, %s14, 1
      %s145 = smul.addr %s144, 32
      %s146 = smul.addr %s145, 8
      %s147 = scalar_lea.vmem %s0, %s146
      %p148 = pneg %p35
      %p149 = pneg %p32
      %p150 = pneg %p56
      %p151 = pneg %p53
      %p152 = pneg %p77
      %p153 = pneg %p74
      %p154 = pneg %p103
      %p155 = pneg %p100
      %p156 = scmp.lt.s32.totalorder %s14, 1
      %s157 = scalar_select %p156, %s14, 1
      %s158 = smul.addr %s157, 54
      %s159 = smul.addr %s158, 8
      %s160 = scalar_lea.vmem %s3, %s159
      %p161 = scmp.lt.s32.totalorder %s14, 1
      %s162 = scalar_select %p161, %s14, 1
      %s163 = smul.addr %s162, 32
      %s164 = smul.addr %s163, 8
      %s165 = scalar_lea.vmem %s0, %s164
      %p166 = scmp.lt.s32.totalorder %s14, 1
      %s167 = scalar_select %p166, %s14, 1
      %s168 = smul.addr %s167, 54
      %s169 = smul.addr %s168, 8
      %s170 = scalar_lea.vmem %s3, %s169
      %v171 = vld [vmem:[%s165] sm:$0xff]
      %v172 = vld [vmem:[%s165 + $0x8] sm:$0xff]
      %v173 = vld [vmem:[%s165 + $0x10] sm:$0xff]
      %v174 = vld [vmem:[%s165 + $0x18] sm:$0xff]
      %v175 = vld [vmem:[%s165 + $0x20] sm:$0xff]
      %v176 = vld [vmem:[%s165 + $0x28] sm:$0xff]
      %v177 = vld [vmem:[%s165 + $0x30] sm:$0xff]
      %v178 = vld [vmem:[%s165 + $0x38] sm:$0xff]
      %v179 = vld [vmem:[%s165 + $0x40] sm:$0xff]
      %v180 = vld [vmem:[%s165 + $0x48] sm:$0xff]
      %v181 = vld [vmem:[%s165 + $0x50] sm:$0xff]
      %v182 = vld [vmem:[%s165 + $0x58] sm:$0xff]
      %v183 = vld [vmem:[%s165 + $0x60] sm:$0xff]
      %v184 = vld [vmem:[%s165 + $0x68] sm:$0xff]
      %v185 = vld [vmem:[%s165 + $0x70] sm:$0xff]
      %v186 = vld [vmem:[%s165 + $0x78] sm:$0xff]
      %v187 = vld [vmem:[%s165 + $0x80] sm:$0xff]
      %v188 = vld [vmem:[%s165 + $0x88] sm:$0xff]
      %v189 = vld [vmem:[%s165 + $0x90] sm:$0xff]
      %v190 = vld [vmem:[%s165 + $0x98] sm:$0xff]
      %v191 = vld [vmem:[%s165 + $0xa0] sm:$0xff]
      %v192 = vld [vmem:[%s165 + $0xa8] sm:$0xff]
      %v193 = vld [vmem:[%s165 + $0xb0] sm:$0xff]
      %v194 = vld [vmem:[%s165 + $0xb8] sm:$0xff]
      %v195 = vld [vmem:[%s165 + $0xc0] sm:$0xff]
      %v196 = vld [vmem:[%s165 + $0xc8] sm:$0xff]
      %v197 = vld [vmem:[%s165 + $0xd0] sm:$0xff]
      %v198 = vld [vmem:[%s165 + $0xd8] sm:$0xff]
      %v199 = vld [vmem:[%s165 + $0xe0] sm:$0xff]
      %v200 = vld [vmem:[%s165 + $0xe8] sm:$0xff]
      %v201 = vld [vmem:[%s165 + $0xf0] sm:$0xff]
      %v202 = vld [vmem:[%s165 + $0xf8] sm:$0xff]
      %v203 = vld [vmem:[%s1] sm:$0x1]
      %v205 = vlaneseq
      %v206 = vshrl.u32 %v205, 7
      %v207 = vsub.s32 0, %v206
      %v208 = vrot.slane %v203, %v207
      %v210 = vmul.f32 %v171, %v208
      %v211 = vmul.f32 %v172, %v208
      %v212 = vmul.f32 %v173, %v208
      %v213 = vmul.f32 %v174, %v208
      %v214 = vmul.f32 %v175, %v208
      %v215 = vmul.f32 %v176, %v208
      %v216 = vmul.f32 %v177, %v208
      %v217 = vmul.f32 %v178, %v208
      %v218 = vmul.f32 %v179, %v208
      %v219 = vmul.f32 %v180, %v208
      %v220 = vmul.f32 %v181, %v208
      %v221 = vmul.f32 %v182, %v208
      %v222 = vmul.f32 %v183, %v208
      %v223 = vmul.f32 %v184, %v208
      %v224 = vmul.f32 %v185, %v208
      %v225 = vmul.f32 %v186, %v208
      %v226 = vmul.f32 %v187, %v208
      %v227 = vmul.f32 %v188, %v208
      %v228 = vmul.f32 %v189, %v208
      %v229 = vmul.f32 %v190, %v208
      %v230 = vmul.f32 %v191, %v208
      %v231 = vmul.f32 %v192, %v208
      %v232 = vmul.f32 %v193, %v208
      %v233 = vmul.f32 %v194, %v208
      %v234 = vmul.f32 %v195, %v208
      %v235 = vmul.f32 %v196, %v208
      %v236 = vmul.f32 %v197, %v208
      %v237 = vmul.f32 %v198, %v208
      %v238 = vmul.f32 %v199, %v208
      %v239 = vmul.f32 %v200, %v208
      %v240 = vmul.f32 %v201, %v208
      %v241 = vmul.f32 %v202, %v208
      %v242 = vld [vmem:[%s2] sm:$0x1]
      %v244 = vlaneseq
      %v245 = vshrl.u32 %v244, 7
      %v246 = vsub.s32 0, %v245
      %v247 = vrot.slane %v242, %v246
      %v249 = vadd.f32 %v210, %v247
      %v250 = vadd.f32 %v211, %v247
      %v251 = vadd.f32 %v212, %v247
      %v252 = vadd.f32 %v213, %v247
      %v253 = vadd.f32 %v214, %v247
      %v254 = vadd.f32 %v215, %v247
      %v255 = vadd.f32 %v216, %v247
      %v256 = vadd.f32 %v217, %v247
      %v257 = vadd.f32 %v218, %v247
      %v258 = vadd.f32 %v219, %v247
      %v259 = vadd.f32 %v220, %v247
      %v260 = vadd.f32 %v221, %v247
      %v261 = vadd.f32 %v222, %v247
      %v262 = vadd.f32 %v223, %v247
      %v263 = vadd.f32 %v224, %v247
      %v264 = vadd.f32 %v225, %v247
      %v265 = vadd.f32 %v226, %v247
      %v266 = vadd.f32 %v227, %v247
      %v267 = vadd.f32 %v228, %v247
      %v268 = vadd.f32 %v229, %v247
      %v269 = vadd.f32 %v230, %v247
      %v270 = vadd.f32 %v231, %v247
      %v271 = vadd.f32 %v232, %v247
      %v272 = vadd.f32 %v233, %v247
      %v273 = vadd.f32 %v234, %v247
      %v274 = vadd.f32 %v235, %v247
      %v275 = vadd.f32 %v236, %v247
      %v276 = vadd.f32 %v237, %v247
      %v277 = vadd.f32 %v238, %v247
      %v278 = vadd.f32 %v239, %v247
      %v279 = vadd.f32 %v240, %v247
      %v280 = vadd.f32 %v241, %v247
      %v281 = vmax.f32 %v249, 0.0
      %v282 = vmax.f32 %v250, 0.0
      %v283 = vmax.f32 %v251, 0.0
      %v284 = vmax.f32 %v252, 0.0
      %v285 = vmax.f32 %v253, 0.0
      %v286 = vmax.f32 %v254, 0.0
      %v287 = vmax.f32 %v255, 0.0
      %v288 = vmax.f32 %v256, 0.0
      %v289 = vmax.f32 %v257, 0.0
      %v290 = vmax.f32 %v258, 0.0
      %v291 = vmax.f32 %v259, 0.0
      %v292 = vmax.f32 %v260, 0.0
      %v293 = vmax.f32 %v261, 0.0
      %v294 = vmax.f32 %v262, 0.0
      %v295 = vmax.f32 %v263, 0.0
      %v296 = vmax.f32 %v264, 0.0
      %v297 = vmax.f32 %v265, 0.0
      %v298 = vmax.f32 %v266, 0.0
      %v299 = vmax.f32 %v267, 0.0
      %v300 = vmax.f32 %v268, 0.0
      %v301 = vmax.f32 %v269, 0.0
      %v302 = vmax.f32 %v270, 0.0
      %v303 = vmax.f32 %v271, 0.0
      %v304 = vmax.f32 %v272, 0.0
      %v305 = vmax.f32 %v273, 0.0
      %v306 = vmax.f32 %v274, 0.0
      %v307 = vmax.f32 %v275, 0.0
      %v308 = vmax.f32 %v276, 0.0
      %v309 = vmax.f32 %v277, 0.0
      %v310 = vmax.f32 %v278, 0.0
      %v311 = vmax.f32 %v279, 0.0
      %v312 = vmax.f32 %v280, 0.0
      %313 = vst [vmem:[%s170] sm:$0xff] 0.0
      %314 = vst [vmem:[%s170 + $0x8] sm:$0xff] 0.0
      %315 = vst [vmem:[%s170 + $0x10] sm:$0x3] 0.0
      %316 = vst [vmem:[%s170 + $0x18] sm:$0xff] 0.0
      %317 = vst [vmem:[%s170 + $0x20] sm:$0xff] 0.0
      %318 = vst [vmem:[%s170 + $0x28] sm:$0x3] 0.0
      %319 = vst [vmem:[%s170 + $0x30] sm:$0xff] 0.0
      %320 = vst [vmem:[%s170 + $0x38] sm:$0xff] 0.0
      %321 = vst [vmem:[%s170 + $0x40] sm:$0x3] 0.0
      %322 = vst [vmem:[%s170 + $0x48] sm:$0xff] 0.0
      %323 = vst [vmem:[%s170 + $0x50] sm:$0xff] 0.0
      %324 = vst [vmem:[%s170 + $0x58] sm:$0x3] 0.0
      %325 = vst [vmem:[%s170 + $0x60] sm:$0xff] 0.0
      %326 = vst [vmem:[%s170 + $0x68] sm:$0xff] 0.0
      %327 = vst [vmem:[%s170 + $0x70] sm:$0x3] 0.0
      %328 = vst [vmem:[%s170 + $0x78] sm:$0xff] 0.0
      %329 = vst [vmem:[%s170 + $0x80] sm:$0xff] 0.0
      %330 = vst [vmem:[%s170 + $0x88] sm:$0x3] 0.0
      %331 = vst [vmem:[%s170 + $0x90] sm:$0xff] 0.0
      %332 = vst [vmem:[%s170 + $0x98] sm:$0xff] 0.0
      %333 = vst [vmem:[%s170 + $0xa0] sm:$0x3] 0.0
      %334 = vst [vmem:[%s170 + $0xa8] sm:$0xff] 0.0
      %335 = vst [vmem:[%s170 + $0xb0] sm:$0xff] 0.0
      %336 = vst [vmem:[%s170 + $0xb8] sm:$0x3] 0.0
      %337 = vst [vmem:[%s170 + $0xc0] sm:$0xff] 0.0
      %338 = vst [vmem:[%s170 + $0xc8] sm:$0xff] 0.0
      %339 = vst [vmem:[%s170 + $0xd0] sm:$0x3] 0.0
      %340 = vst [vmem:[%s170 + $0xd8] sm:$0xff] 0.0
      %341 = vst [vmem:[%s170 + $0xe0] sm:$0xff] 0.0
      %342 = vst [vmem:[%s170 + $0xe8] sm:$0x3] 0.0
      %343 = vst [vmem:[%s170 + $0xf0] sm:$0xff] 0.0
      %344 = vst [vmem:[%s170 + $0xf8] sm:$0xff] 0.0
      %345 = vst [vmem:[%s170 + $0x100] sm:$0x3] 0.0
      %346 = vst [vmem:[%s170 + $0x108] sm:$0xff] 0.0
      %347 = vst [vmem:[%s170 + $0x110] sm:$0xff] 0.0
      %348 = vst [vmem:[%s170 + $0x118] sm:$0x3] 0.0
      %349 = vst [vmem:[%s170 + $0x120] sm:$0xff] 0.0
      %350 = vst [vmem:[%s170 + $0x128] sm:$0xff] 0.0
      %351 = vst [vmem:[%s170 + $0x130] sm:$0x3] 0.0
      %352 = vst [vmem:[%s170 + $0x138] sm:$0xff] 0.0
      %353 = vst [vmem:[%s170 + $0x140] sm:$0xff] 0.0
      %354 = vst [vmem:[%s170 + $0x148] sm:$0x3] 0.0
      %355 = vst [vmem:[%s170 + $0x150] sm:$0xff] 0.0
      %356 = vst [vmem:[%s170 + $0x158] sm:$0xff] 0.0
      %357 = vst [vmem:[%s170 + $0x160] sm:$0x3] 0.0
      %358 = vst [vmem:[%s170 + $0x168] sm:$0xff] 0.0
      %359 = vst [vmem:[%s170 + $0x170] sm:$0xff] 0.0
      %360 = vst [vmem:[%s170 + $0x178] sm:$0x3] 0.0
      %361 = vst [vmem:[%s170 + $0x180] sm:$0xff] 0.0
      %362 = vst [vmem:[%s170 + $0x188] sm:$0xff] 0.0
      %363 = vst [vmem:[%s170 + $0x190] sm:$0x3] 0.0
      %364 = vst [vmem:[%s170 + $0x198] sm:$0xff] 0.0
      %365 = vst [vmem:[%s170 + $0x1a0] sm:$0xff] 0.0
      %366 = vst [vmem:[%s170 + $0x1a8] sm:$0x3] 0.0
      %s367 = scalar_lea.vmem %s170, 24
      %368 = vst [vmem:[%s367 + $0x1] sm:$0xff] %v281
      %369 = vst [vmem:[%s367 + $0x9] sm:$0xff] %v282
      %370 = vst [vmem:[%s367 + $0x19] sm:$0xff] %v283
      %371 = vst [vmem:[%s367 + $0x21] sm:$0xff] %v284
      %372 = vst [vmem:[%s367 + $0x31] sm:$0xff] %v285
      %373 = vst [vmem:[%s367 + $0x39] sm:$0xff] %v286
      %374 = vst [vmem:[%s367 + $0x49] sm:$0xff] %v287
      %375 = vst [vmem:[%s367 + $0x51] sm:$0xff] %v288
      %376 = vst [vmem:[%s367 + $0x61] sm:$0xff] %v289
      %377 = vst [vmem:[%s367 + $0x69] sm:$0xff] %v290
      %378 = vst [vmem:[%s367 + $0x79] sm:$0xff] %v291
      %379 = vst [vmem:[%s367 + $0x81] sm:$0xff] %v292
      %380 = vst [vmem:[%s367 + $0x91] sm:$0xff] %v293
      %381 = vst [vmem:[%s367 + $0x99] sm:$0xff] %v294
      %382 = vst [vmem:[%s367 + $0xa9] sm:$0xff] %v295
      %383 = vst [vmem:[%s367 + $0xb1] sm:$0xff] %v296
      %384 = vst [vmem:[%s367 + $0xc1] sm:$0xff] %v297
      %385 = vst [vmem:[%s367 + $0xc9] sm:$0xff] %v298
      %386 = vst [vmem:[%s367 + $0xd9] sm:$0xff] %v299
      %387 = vst [vmem:[%s367 + $0xe1] sm:$0xff] %v300
      %388 = vst [vmem:[%s367 + $0xf1] sm:$0xff] %v301
      %389 = vst [vmem:[%s367 + $0xf9] sm:$0xff] %v302
      %390 = vst [vmem:[%s367 + $0x109] sm:$0xff] %v303
      %391 = vst [vmem:[%s367 + $0x111] sm:$0xff] %v304
      %392 = vst [vmem:[%s367 + $0x121] sm:$0xff] %v305
      %393 = vst [vmem:[%s367 + $0x129] sm:$0xff] %v306
      %394 = vst [vmem:[%s367 + $0x139] sm:$0xff] %v307
      %395 = vst [vmem:[%s367 + $0x141] sm:$0xff] %v308
      %396 = vst [vmem:[%s367 + $0x151] sm:$0xff] %v309
      %397 = vst [vmem:[%s367 + $0x159] sm:$0xff] %v310
      %398 = vst [vmem:[%s367 + $0x169] sm:$0xff] %v311
      %399 = vst [vmem:[%s367 + $0x171] sm:$0xff] %v312
      %p400 = scmp.lt.s32.totalorder %s14, 1
      %s401 = scalar_select %p400, %s14, 1
      %s402 = smul.addr %s401, 54
      %s403 = smul.addr %s402, 8
      %s404 = scalar_lea.vmem %s3, %s403
      // Predicated region
      $region33: #{residual_block.5} parent=31 // pred_check
        %p405 = pneg %p100
      $region34: #{residual_block.5} parent=31 // pred_check_branch
        %407 = sbr.rel (%p405) target = $region36
      $region35: #{residual_block.5} parent=31 // pred_region
        _
      $region36: #{residual_block.5} parent=31 // pred_fallthru
        _
    $region32: #{residual_block.5} parent=5 // pred_fallthru
      _
    %p408 = scmp.le.s32.totalorder 2, %s9
    // Predicated region
    $region37: #{residual_block.5} parent=5 // pred_check
      %p409 = pneg %p408
    $region38: #{residual_block.5} parent=5 // pred_check_branch
      %411 = sbr.rel (%p409) target = $region40
    $region39: #{residual_block.5} parent=5 // pred_region
      %s412 = ssub.s32 %s9, 2
      // Predicated region
      $region41: #{residual_block.5} parent=39 // pred_check
        %p413 = pneg %p106
      $region42: #{residual_block.5} parent=39 // pred_check_branch
        %415 = sbr.rel (%p413) target = $region44
      $region43: #{residual_block.5} parent=39 // pred_region
        %p416 = scmp.lt.s32.totalorder %s15, 1
        %s417 = scalar_select %p416, %s15, 1
        %s418 = smul.addr %s417, 54
        %s419 = smul.addr %s418, 8
        %s420 = scalar_lea.vmem %s3, %s419
      $region44: #{residual_block.5} parent=39 // pred_fallthru
        _
    $region40: #{residual_block.5} parent=5 // pred_fallthru
      _
  $region6: #{residual_block.5} parent=0 // loop_footer
    %s13 = sadd.s32 1, %s9
  $region7: #{residual_block.5} parent=0 // loop_footer_branch
    %8 = sbr.rel target = $region3
  $region8: #{residual_block.5} parent=0 // loop_exit
    _

// kernel: residual_block.7
$region0: #{residual_block.7}
  #allocation0 [shape = 'u32[]', space=smem, size = 0x4, offset = 0x4, fixed_abs, tag = 'smem constant byte address 0x4 - core index']
  #allocation1 [shape = 'u32[144,128]{1,0:T(1,128)}', space=vmem, size = 0x12000, scoped, tag = 'internal scratch']
  %s0 = inlined_call_operand.vmem [shape: f32[2,256,128], index: 0, kind: input, shape index: {}]
  %s1 = inlined_call_operand.vmem [shape: f32[1,128], index: 1, kind: input, shape index: {}]
  %s2 = inlined_call_operand.vmem [shape: f32[1,128], index: 2, kind: input, shape index: {}]
  %s3 = inlined_call_operand.vmem [shape: f32[2,256,128], index: 3, kind: input, shape index: {}]
  %s4 = inlined_call_operand.vmem [shape: f32[2,256,128], index: 4, kind: output, shape index: {}]
  %s5 = sld [smem:[#allocation0]]
  $region49: #{residual_block.7} parent=0
    _
  %s7 = ssub.s32 1, %s5
  %s8 = scalar_select 0, %s7, %s5
  loop: start=0, step=1, limit=4
  $region2: #{residual_block.7} parent=0 // loop_pre_header
    _
  $region3: #{residual_block.7} parent=0 // loop_header
    %s10 = sphi 0, %s14
    %p11 = scmp.ge.s32.totalorder %s10, 4
    %s20 = sphi 0, %s22
    %s23 = sphi 0, %s20
    %s24 = sphi 0, %s23
    %s40 = sphi 0, %s24
    %s44 = sphi 0, %s44
    %s46 = sphi 0, %s44
    %s47 = sphi 0, %s46
    %s61 = sphi 0, %s47
    %s65 = sphi 0, %s65
    %s67 = sphi 0, %s65
    %s68 = sphi 0, %s67
    %s82 = sphi 0, %s68
    %s88 = sphi 0, %s90
    %s91 = sphi 0, %s88
    %s92 = sphi 0, %s91
    %s108 = sphi 0, %s92
    %s114 = sphi 0, %s116
    %s117 = sphi 0, %s114
    %s118 = sphi 0, %s117
    %s134 = sphi 0, %s118
  $region4: #{residual_block.7} parent=0 // loop_header_branch
    %13 = sbr.rel (%p11) target = $region8
  $region5: #{residual_block.7} parent=0 // loop_body
    %s15 = ssub.s32 %s10, 1
    %s16 = ssub.s32 %s10, 2
    %s17 = sadd.s32 %s10, 1
    %s18 = ssub.s32 %s10, %s17
    %p19 = scmp.eq.s32.totalorder %s18, 0
    %s21 = sadd.s32 %s20, 1
    %s22 = scalar_select %p19, %s20, %s21
    %p25 = pneg %p19
    %p26 = scmp.eq.s32.totalorder %s10, 1
    %p27 = por %p25, %p26
    %p28 = scmp.ne.s32.totalorder %s20, %s23
    %p29 = scmp.eq.s32.totalorder %s10, 0
    %p30 = por %p28, %p29
    %p31 = scmp.ne.s32.totalorder %s20, %s23
    %p32 = scmp.eq.s32.totalorder %s15, 1
    %p33 = por %p31, %p32
    %p34 = scmp.ne.s32.totalorder %s23, %s24
    %p35 = scmp.eq.s32.totalorder %s15, 0
    %p36 = por %p34, %p35
    %p37 = scmp.ne.s32.totalorder %s23, %s24
    %p38 = scmp.eq.s32.totalorder %s16, 1
    %p39 = por %p37, %p38
    %p41 = scmp.ne.s32.totalorder %s24, %s40
    %p42 = scmp.eq.s32.totalorder %s16, 0
    %p43 = por %p41, %p42
    %s45 = sadd.s32 %s44, 1
    %p48 = scmp.eq.s32.totalorder %s10, 1
    %p49 = scmp.ne.s32.totalorder %s44, %s46
    %p50 = scmp.eq.s32.totalorder %s10, 0
    %p51 = por %p49, %p50
    %p52 = scmp.ne.s32.totalorder %s44, %s46
    %p53 = scmp.eq.s32.totalorder %s15, 1
    %p54 = por %p52, %p53
    %p55 = scmp.ne.s32.totalorder %s46, %s47
    %p56 = scmp.eq.s32.totalorder %s15, 0
    %p57 = por %p55, %p56
    %p58 = scmp.ne.s32.totalorder %s46, %s47
    %p59 = scmp.eq.s32.totalorder %s16, 1
    %p60 = por %p58, %p59
    %p62 = scmp.ne.s32.totalorder %s47, %s61
    %p63 = scmp.eq.s32.totalorder %s16, 0
    %p64 = por %p62, %p63
    %s66 = sadd.s32 %s65, 1
    %p69 = scmp.eq.s32.totalorder %s10, 1
    %p70 = scmp.ne.s32.totalorder %s65, %s67
    %p71 = scmp.eq.s32.totalorder %s10, 0
    %p72 = por %p70, %p71
    %p73 = scmp.ne.s32.totalorder %s65, %s67
    %p74 = scmp.eq.s32.totalorder %s15, 1
    %p75 = por %p73, %p74
    %p76 = scmp.ne.s32.totalorder %s67, %s68
    %p77 = scmp.eq.s32.totalorder %s15, 0
    %p78 = por %p76, %p77
    %p79 = scmp.ne.s32.totalorder %s67, %s68
    %p80 = scmp.eq.s32.totalorder %s16, 1
    %p81 = por %p79, %p80
    %p83 = scmp.ne.s32.totalorder %s68, %s82
    %p84 = scmp.eq.s32.totalorder %s16, 0
    %p85 = por %p83, %p84
    %s86 = ssub.s32 %s10, %s17
    %p87 = scmp.eq.s32.totalorder %s86, 0
    %s89 = sadd.s32 %s88, 1
    %s90 = scalar_select %p87, %s88, %s89
    %p93 = pneg %p87
    %p94 = scmp.eq.s32.totalorder %s10, 1
    %p95 = por %p93, %p94
    %p96 = scmp.ne.s32.totalorder %s88, %s91
    %p97 = scmp.eq.s32.totalorder %s10, 0
    %p98 = por %p96, %p97
    %p99 = scmp.ne.s32.totalorder %s88, %s91
    %p100 = scmp.eq.s32.totalorder %s15, 1
    %p101 = por %p99, %p100
    %p102 = scmp.ne.s32.totalorder %s91, %s92
    %p103 = scmp.eq.s32.totalorder %s15, 0
    %p104 = por %p102, %p103
    %p105 = scmp.ne.s32.totalorder %s91, %s92
    %p106 = scmp.eq.s32.totalorder %s16, 1
    %p107 = por %p105, %p106
    %p109 = scmp.ne.s32.totalorder %s92, %s108
    %p110 = scmp.eq.s32.totalorder %s16, 0
    %p111 = por %p109, %p110
    %s112 = ssub.s32 %s10, %s17
    %p113 = scmp.eq.s32.totalorder %s112, 0
    %s115 = sadd.s32 %s114, 1
    %s116 = scalar_select %p113, %s114, %s115
    %p119 = pneg %p113
    %p120 = scmp.eq.s32.totalorder %s10, 1
    %p121 = por %p119, %p120
    %p122 = scmp.ne.s32.totalorder %s114, %s117
    %p123 = scmp.eq.s32.totalorder %s10, 0
    %p124 = por %p122, %p123
    %p125 = scmp.ne.s32.totalorder %s114, %s117
    %p126 = scmp.eq.s32.totalorder %s15, 1
    %p127 = por %p125, %p126
    %p128 = scmp.ne.s32.totalorder %s117, %s118
    %p129 = scmp.eq.s32.totalorder %s15, 0
    %p130 = por %p128, %p129
    %p131 = scmp.ne.s32.totalorder %s117, %s118
    %p132 = scmp.eq.s32.totalorder %s16, 1
    %p133 = por %p131, %p132
    %p135 = scmp.ne.s32.totalorder %s118, %s134
    %p136 = scmp.eq.s32.totalorder %s16, 0
    %p137 = por %p135, %p136
    %p138 = scmp.le.s32.totalorder 1, %s10
    %p139 = scmp.lt.s32.totalorder %s10, 3
    %p140 = pnand %p138, %p139
    %p141 = pneg %p140
    // Predicated region
    $region9: #{residual_block.7} parent=5 // pred_check
      _
    $region10: #{residual_block.7} parent=5 // pred_check_branch
      %143 = sbr.rel (%p140) target = $region12
    $region11: #{residual_block.7} parent=5 // pred_region
      %s144 = ssub.s32 %s10, 1
      // Predicated region
      $region13: #{residual_block.7} parent=11 // pred_check
        %p145 = pneg %p57
      $region14: #{residual_block.7} parent=11 // pred_check_branch
        %147 = sbr.rel (%p145) target = $region16
      $region15: #{residual_block.7} parent=11 // pred_region
        _
      $region16: #{residual_block.7} parent=11 // pred_fallthru
        _
      // Predicated region
      $region17: #{residual_block.7} parent=11 // pred_check
        %p148 = pneg %p78
      $region18: #{residual_block.7} parent=11 // pred_check_branch
        %150 = sbr.rel (%p148) target = $region20
      $region19: #{residual_block.7} parent=11 // pred_region
        _
      $region20: #{residual_block.7} parent=11 // pred_fallthru
        _
    $region12: #{residual_block.7} parent=5 // pred_fallthru
      _
    %p151 = scmp.lt.s32.totalorder %s10, 2
    // Predicated region
    $region21: #{residual_block.7} parent=5 // pred_check
      %p152 = pneg %p151
    $region22: #{residual_block.7} parent=5 // pred_check_branch
      %154 = sbr.rel (%p152) target = $region24
    $region23: #{residual_block.7} parent=5 // pred_region
      // Predicated region
      $region25: #{residual_block.7} parent=23 // pred_check
        %p155 = pneg %p30
      $region26: #{residual_block.7} parent=23 // pred_check_branch
        %157 = sbr.rel (%p155) target = $region28
      $region27: #{residual_block.7} parent=23 // pred_region
        %p158 = scmp.lt.s32.totalorder %s10, 1
        %s159 = scalar_select %p158, %s10, 1
        %s160 = smul.addr %s159, 32
        %s161 = smul.addr %s160, 8
        %s162 = scalar_lea.vmem %s0, %s161
      $region28: #{residual_block.7} parent=23 // pred_fallthru
        _
      // Predicated region
      $region29: #{residual_block.7} parent=23 // pred_check
        %p163 = pneg %p98
      $region30: #{residual_block.7} parent=23 // pred_check_branch
        %165 = sbr.rel (%p163) target = $region32
      $region31: #{residual_block.7} parent=23 // pred_region
        %p166 = scmp.lt.s32.totalorder %s10, 1
        %s167 = scalar_select %p166, %s10, 1
        %s168 = smul.addr %s167, 32
        %s169 = smul.addr %s168, 8
        %s170 = scalar_lea.vmem %s3, %s169
      $region32: #{residual_block.7} parent=23 // pred_fallthru
        _
    $region24: #{residual_block.7} parent=5 // pred_fallthru
      _
    %p171 = scmp.le.s32.totalorder 1, %s10
    %p172 = scmp.lt.s32.totalorder %s10, 3
    %p173 = pnand %p171, %p172
    %p174 = pneg %p173
    // Predicated region
    $region33: #{residual_block.7} parent=5 // pred_check
      _
    $region34: #{residual_block.7} parent=5 // pred_check_branch
      %176 = sbr.rel (%p173) target = $region36
    $region35: #{residual_block.7} parent=5 // pred_region
      %s177 = ssub.s32 %s10, 1
      %p178 = scmp.lt.s32.totalorder %s15, 1
      %s179 = scalar_select %p178, %s15, 1
      %s180 = smul.addr %s179, 32
      %s181 = smul.addr %s180, 8
      %s182 = scalar_lea.vmem %s0, %s181
      %p183 = pneg %p36
      %p184 = pneg %p33
      %p185 = pneg %p57
      %p186 = pneg %p54
      %p187 = pneg %p78
      %p188 = pneg %p75
      %p189 = scmp.lt.s32.totalorder %s15, 1
      %s190 = scalar_select %p189, %s15, 1
      %s191 = smul.addr %s190, 32
      %s192 = smul.addr %s191, 8
      %s193 = scalar_lea.vmem %s3, %s192
      %p194 = pneg %p104
      %p195 = pneg %p101
      %p196 = pneg %p130
      %p197 = pneg %p127
      %p198 = scmp.lt.s32.totalorder %s15, 1
      %s199 = scalar_select %p198, %s15, 1
      %s200 = smul.addr %s199, 32
      %s201 = smul.addr %s200, 8
      %s202 = scalar_lea.vmem %s4, %s201
      %p203 = scmp.lt.s32.totalorder %s15, 1
      %s204 = scalar_select %p203, %s15, 1
      %s205 = smul.addr %s204, 32
      %s206 = smul.addr %s205, 8
      %s207 = scalar_lea.vmem %s0, %s206
      %p208 = scmp.lt.s32.totalorder %s15, 1
      %s209 = scalar_select %p208, %s15, 1
      %s210 = smul.addr %s209, 32
      %s211 = smul.addr %s210, 8
      %s212 = scalar_lea.vmem %s3, %s211
      %p213 = scmp.lt.s32.totalorder %s15, 1
      %s214 = scalar_select %p213, %s15, 1
      %s215 = smul.addr %s214, 32
      %s216 = smul.addr %s215, 8
      %s217 = scalar_lea.vmem %s4, %s216
      %v218 = vld [vmem:[%s207] sm:$0xff]
      %v219 = vld [vmem:[%s207 + $0x8] sm:$0xff]
      %v220 = vld [vmem:[%s207 + $0x10] sm:$0xff]
      %v221 = vld [vmem:[%s207 + $0x18] sm:$0xff]
      %v222 = vld [vmem:[%s207 + $0x20] sm:$0xff]
      %v223 = vld [vmem:[%s207 + $0x28] sm:$0xff]
      %v224 = vld [vmem:[%s207 + $0x30] sm:$0xff]
      %v225 = vld [vmem:[%s207 + $0x38] sm:$0xff]
      %v226 = vld [vmem:[%s207 + $0x40] sm:$0xff]
      %v227 = vld [vmem:[%s207 + $0x48] sm:$0xff]
      %v228 = vld [vmem:[%s207 + $0x50] sm:$0xff]
      %v229 = vld [vmem:[%s207 + $0x58] sm:$0xff]
      %v230 = vld [vmem:[%s207 + $0x60] sm:$0xff]
      %v231 = vld [vmem:[%s207 + $0x68] sm:$0xff]
      %v232 = vld [vmem:[%s207 + $0x70] sm:$0xff]
      %v233 = vld [vmem:[%s207 + $0x78] sm:$0xff]
      %v234 = vld [vmem:[%s207 + $0x80] sm:$0xff]
      %v235 = vld [vmem:[%s207 + $0x88] sm:$0xff]
      %v236 = vld [vmem:[%s207 + $0x90] sm:$0xff]
      %v237 = vld [vmem:[%s207 + $0x98] sm:$0xff]
      %v238 = vld [vmem:[%s207 + $0xa0] sm:$0xff]
      %v239 = vld [vmem:[%s207 + $0xa8] sm:$0xff]
      %v240 = vld [vmem:[%s207 + $0xb0] sm:$0xff]
      %v241 = vld [vmem:[%s207 + $0xb8] sm:$0xff]
      %v242 = vld [vmem:[%s207 + $0xc0] sm:$0xff]
      %v243 = vld [vmem:[%s207 + $0xc8] sm:$0xff]
      %v244 = vld [vmem:[%s207 + $0xd0] sm:$0xff]
      %v245 = vld [vmem:[%s207 + $0xd8] sm:$0xff]
      %v246 = vld [vmem:[%s207 + $0xe0] sm:$0xff]
      %v247 = vld [vmem:[%s207 + $0xe8] sm:$0xff]
      %v248 = vld [vmem:[%s207 + $0xf0] sm:$0xff]
      %v249 = vld [vmem:[%s207 + $0xf8] sm:$0xff]
      %v250 = vld [vmem:[%s1] sm:$0x1]
      %v252 = vlaneseq
      %v253 = vshrl.u32 %v252, 7
      %v254 = vsub.s32 0, %v253
      %v255 = vrot.slane %v250, %v254
      %v257 = vmul.f32 %v218, %v255
      %v258 = vmul.f32 %v219, %v255
      %v259 = vmul.f32 %v220, %v255
      %v260 = vmul.f32 %v221, %v255
      %v261 = vmul.f32 %v222, %v255
      %v262 = vmul.f32 %v223, %v255
      %v263 = vmul.f32 %v224, %v255
      %v264 = vmul.f32 %v225, %v255
      %v265 = vmul.f32 %v226, %v255
      %v266 = vmul.f32 %v227, %v255
      %v267 = vmul.f32 %v228, %v255
      %v268 = vmul.f32 %v229, %v255
      %v269 = vmul.f32 %v230, %v255
      %v270 = vmul.f32 %v231, %v255
      %v271 = vmul.f32 %v232, %v255
      %v272 = vmul.f32 %v233, %v255
      %v273 = vmul.f32 %v234, %v255
      %v274 = vmul.f32 %v235, %v255
      %v275 = vmul.f32 %v236, %v255
      %v276 = vmul.f32 %v237, %v255
      %v277 = vmul.f32 %v238, %v255
      %v278 = vmul.f32 %v239, %v255
      %v279 = vmul.f32 %v240, %v255
      %v280 = vmul.f32 %v241, %v255
      %v281 = vmul.f32 %v242, %v255
      %v282 = vmul.f32 %v243, %v255
      %v283 = vmul.f32 %v244, %v255
      %v284 = vmul.f32 %v245, %v255
      %v285 = vmul.f32 %v246, %v255
      %v286 = vmul.f32 %v247, %v255
      %v287 = vmul.f32 %v248, %v255
      %v288 = vmul.f32 %v249, %v255
      %v289 = vld [vmem:[%s2] sm:$0x1]
      %v291 = vlaneseq
      %v292 = vshrl.u32 %v291, 7
      %v293 = vsub.s32 0, %v292
      %v294 = vrot.slane %v289, %v293
      %v296 = vadd.f32 %v257, %v294
      %v297 = vadd.f32 %v258, %v294
      %v298 = vadd.f32 %v259, %v294
      %v299 = vadd.f32 %v260, %v294
      %v300 = vadd.f32 %v261, %v294
      %v301 = vadd.f32 %v262, %v294
      %v302 = vadd.f32 %v263, %v294
      %v303 = vadd.f32 %v264, %v294
      %v304 = vadd.f32 %v265, %v294
      %v305 = vadd.f32 %v266, %v294
      %v306 = vadd.f32 %v267, %v294
      %v307 = vadd.f32 %v268, %v294
      %v308 = vadd.f32 %v269, %v294
      %v309 = vadd.f32 %v270, %v294
      %v310 = vadd.f32 %v271, %v294
      %v311 = vadd.f32 %v272, %v294
      %v312 = vadd.f32 %v273, %v294
      %v313 = vadd.f32 %v274, %v294
      %v314 = vadd.f32 %v275, %v294
      %v315 = vadd.f32 %v276, %v294
      %v316 = vadd.f32 %v277, %v294
      %v317 = vadd.f32 %v278, %v294
      %v318 = vadd.f32 %v279, %v294
      %v319 = vadd.f32 %v280, %v294
      %v320 = vadd.f32 %v281, %v294
      %v321 = vadd.f32 %v282, %v294
      %v322 = vadd.f32 %v283, %v294
      %v323 = vadd.f32 %v284, %v294
      %v324 = vadd.f32 %v285, %v294
      %v325 = vadd.f32 %v286, %v294
      %v326 = vadd.f32 %v287, %v294
      %v327 = vadd.f32 %v288, %v294
      %v328 = vld [vmem:[%s212] sm:$0xff]
      %v329 = vld [vmem:[%s212 + $0x8] sm:$0xff]
      %v330 = vld [vmem:[%s212 + $0x10] sm:$0xff]
      %v331 = vld [vmem:[%s212 + $0x18] sm:$0xff]
      %v332 = vld [vmem:[%s212 + $0x20] sm:$0xff]
      %v333 = vld [vmem:[%s212 + $0x28] sm:$0xff]
      %v334 = vld [vmem:[%s212 + $0x30] sm:$0xff]
      %v335 = vld [vmem:[%s212 + $0x38] sm:$0xff]
      %v336 = vld [vmem:[%s212 + $0x40] sm:$0xff]
      %v337 = vld [vmem:[%s212 + $0x48] sm:$0xff]
      %v338 = vld [vmem:[%s212 + $0x50] sm:$0xff]
      %v339 = vld [vmem:[%s212 + $0x58] sm:$0xff]
      %v340 = vld [vmem:[%s212 + $0x60] sm:$0xff]
      %v341 = vld [vmem:[%s212 + $0x68] sm:$0xff]
      %v342 = vld [vmem:[%s212 + $0x70] sm:$0xff]
      %v343 = vld [vmem:[%s212 + $0x78] sm:$0xff]
      %v344 = vld [vmem:[%s212 + $0x80] sm:$0xff]
      %v345 = vld [vmem:[%s212 + $0x88] sm:$0xff]
      %v346 = vld [vmem:[%s212 + $0x90] sm:$0xff]
      %v347 = vld [vmem:[%s212 + $0x98] sm:$0xff]
      %v348 = vld [vmem:[%s212 + $0xa0] sm:$0xff]
      %v349 = vld [vmem:[%s212 + $0xa8] sm:$0xff]
      %v350 = vld [vmem:[%s212 + $0xb0] sm:$0xff]
      %v351 = vld [vmem:[%s212 + $0xb8] sm:$0xff]
      %v352 = vld [vmem:[%s212 + $0xc0] sm:$0xff]
      %v353 = vld [vmem:[%s212 + $0xc8] sm:$0xff]
      %v354 = vld [vmem:[%s212 + $0xd0] sm:$0xff]
      %v355 = vld [vmem:[%s212 + $0xd8] sm:$0xff]
      %v356 = vld [vmem:[%s212 + $0xe0] sm:$0xff]
      %v357 = vld [vmem:[%s212 + $0xe8] sm:$0xff]
      %v358 = vld [vmem:[%s212 + $0xf0] sm:$0xff]
      %v359 = vld [vmem:[%s212 + $0xf8] sm:$0xff]
      %v360 = vadd.f32 %v296, %v328
      %v361 = vadd.f32 %v297, %v329
      %v362 = vadd.f32 %v298, %v330
      %v363 = vadd.f32 %v299, %v331
      %v364 = vadd.f32 %v300, %v332
      %v365 = vadd.f32 %v301, %v333
      %v366 = vadd.f32 %v302, %v334
      %v367 = vadd.f32 %v303, %v335
      %v368 = vadd.f32 %v304, %v336
      %v369 = vadd.f32 %v305, %v337
      %v370 = vadd.f32 %v306, %v338
      %v371 = vadd.f32 %v307, %v339
      %v372 = vadd.f32 %v308, %v340
      %v373 = vadd.f32 %v309, %v341
      %v374 = vadd.f32 %v310, %v342
      %v375 = vadd.f32 %v311, %v343
      %v376 = vadd.f32 %v312, %v344
      %v377 = vadd.f32 %v313, %v345
      %v378 = vadd.f32 %v314, %v346
      %v379 = vadd.f32 %v315, %v347
      %v380 = vadd.f32 %v316, %v348
      %v381 = vadd.f32 %v317, %v349
      %v382 = vadd.f32 %v318, %v350
      %v383 = vadd.f32 %v319, %v351
      %v384 = vadd.f32 %v320, %v352
      %v385 = vadd.f32 %v321, %v353
      %v386 = vadd.f32 %v322, %v354
      %v387 = vadd.f32 %v323, %v355
      %v388 = vadd.f32 %v324, %v356
      %v389 = vadd.f32 %v325, %v357
      %v390 = vadd.f32 %v326, %v358
      %v391 = vadd.f32 %v327, %v359
      %v392 = vmax.f32 %v360, 0.0
      %v393 = vmax.f32 %v361, 0.0
      %v394 = vmax.f32 %v362, 0.0
      %v395 = vmax.f32 %v363, 0.0
      %v396 = vmax.f32 %v364, 0.0
      %v397 = vmax.f32 %v365, 0.0
      %v398 = vmax.f32 %v366, 0.0
      %v399 = vmax.f32 %v367, 0.0
      %v400 = vmax.f32 %v368, 0.0
      %v401 = vmax.f32 %v369, 0.0
      %v402 = vmax.f32 %v370, 0.0
      %v403 = vmax.f32 %v371, 0.0
      %v404 = vmax.f32 %v372, 0.0
      %v405 = vmax.f32 %v373, 0.0
      %v406 = vmax.f32 %v374, 0.0
      %v407 = vmax.f32 %v375, 0.0
      %v408 = vmax.f32 %v376, 0.0
      %v409 = vmax.f32 %v377, 0.0
      %v410 = vmax.f32 %v378, 0.0
      %v411 = vmax.f32 %v379, 0.0
      %v412 = vmax.f32 %v380, 0.0
      %v413 = vmax.f32 %v381, 0.0
      %v414 = vmax.f32 %v382, 0.0
      %v415 = vmax.f32 %v383, 0.0
      %v416 = vmax.f32 %v384, 0.0
      %v417 = vmax.f32 %v385, 0.0
      %v418 = vmax.f32 %v386, 0.0
      %v419 = vmax.f32 %v387, 0.0
      %v420 = vmax.f32 %v388, 0.0
      %v421 = vmax.f32 %v389, 0.0
      %v422 = vmax.f32 %v390, 0.0
      %v423 = vmax.f32 %v391, 0.0
      %424 = vst [vmem:[%s217] sm:$0xff] %v392
      %425 = vst [vmem:[%s217 + $0x8] sm:$0xff] %v393
      %426 = vst [vmem:[%s217 + $0x10] sm:$0xff] %v394
      %427 = vst [vmem:[%s217 + $0x18] sm:$0xff] %v395
      %428 = vst [vmem:[%s217 + $0x20] sm:$0xff] %v396
      %429 = vst [vmem:[%s217 + $0x28] sm:$0xff] %v397
      %430 = vst [vmem:[%s217 + $0x30] sm:$0xff] %v398
      %431 = vst [vmem:[%s217 + $0x38] sm:$0xff] %v399
      %432 = vst [vmem:[%s217 + $0x40] sm:$0xff] %v400
      %433 = vst [vmem:[%s217 + $0x48] sm:$0xff] %v401
      %434 = vst [vmem:[%s217 + $0x50] sm:$0xff] %v402
      %435 = vst [vmem:[%s217 + $0x58] sm:$0xff] %v403
      %436 = vst [vmem:[%s217 + $0x60] sm:$0xff] %v404
      %437 = vst [vmem:[%s217 + $0x68] sm:$0xff] %v405
      %438 = vst [vmem:[%s217 + $0x70] sm:$0xff] %v406
      %439 = vst [vmem:[%s217 + $0x78] sm:$0xff] %v407
      %440 = vst [vmem:[%s217 + $0x80] sm:$0xff] %v408
      %441 = vst [vmem:[%s217 + $0x88] sm:$0xff] %v409
      %442 = vst [vmem:[%s217 + $0x90] sm:$0xff] %v410
      %443 = vst [vmem:[%s217 + $0x98] sm:$0xff] %v411
      %444 = vst [vmem:[%s217 + $0xa0] sm:$0xff] %v412
      %445 = vst [vmem:[%s217 + $0xa8] sm:$0xff] %v413
      %446 = vst [vmem:[%s217 + $0xb0] sm:$0xff] %v414
      %447 = vst [vmem:[%s217 + $0xb8] sm:$0xff] %v415
      %448 = vst [vmem:[%s217 + $0xc0] sm:$0xff] %v416
      %449 = vst [vmem:[%s217 + $0xc8] sm:$0xff] %v417
      %450 = vst [vmem:[%s217 + $0xd0] sm:$0xff] %v418
      %451 = vst [vmem:[%s217 + $0xd8] sm:$0xff] %v419
      %452 = vst [vmem:[%s217 + $0xe0] sm:$0xff] %v420
      %453 = vst [vmem:[%s217 + $0xe8] sm:$0xff] %v421
      %454 = vst [vmem:[%s217 + $0xf0] sm:$0xff] %v422
      %455 = vst [vmem:[%s217 + $0xf8] sm:$0xff] %v423
      %p456 = scmp.lt.s32.totalorder %s15, 1
      %s457 = scalar_select %p456, %s15, 1
      %s458 = smul.addr %s457, 32
      %s459 = smul.addr %s458, 8
      %s460 = scalar_lea.vmem %s4, %s459
      // Predicated region
      $region37: #{residual_block.7} parent=35 // pred_check
        %p461 = pneg %p127
      $region38: #{residual_block.7} parent=35 // pred_check_branch
        %463 = sbr.rel (%p461) target = $region40
      $region39: #{residual_block.7} parent=35 // pred_region
        _
      $region40: #{residual_block.7} parent=35 // pred_fallthru
        _
    $region36: #{residual_block.7} parent=5 // pred_fallthru
      _
    %p464 = scmp.le.s32.totalorder 2, %s10
    // Predicated region
    $region41: #{residual_block.7} parent=5 // pred_check
      %p465 = pneg %p464
    $region42: #{residual_block.7} parent=5 // pred_check_branch
      %467 = sbr.rel (%p465) target = $region44
    $region43: #{residual_block.7} parent=5 // pred_region
      %s468 = ssub.s32 %s10, 2
      // Predicated region
      $region45: #{residual_block.7} parent=43 // pred_check
        %p469 = pneg %p133
      $region46: #{residual_block.7} parent=43 // pred_check_branch
        %471 = sbr.rel (%p469) target = $region48
      $region47: #{residual_block.7} parent=43 // pred_region
        %p472 = scmp.lt.s32.totalorder %s16, 1
        %s473 = scalar_select %p472, %s16, 1
        %s474 = smul.addr %s473, 32
        %s475 = smul.addr %s474, 8
        %s476 = scalar_lea.vmem %s4, %s475
      $region48: #{residual_block.7} parent=43 // pred_fallthru
        _
    $region44: #{residual_block.7} parent=5 // pred_fallthru
      _
  $region6: #{residual_block.7} parent=0 // loop_footer
    %s14 = sadd.s32 1, %s10
  $region7: #{residual_block.7} parent=0 // loop_footer_branch
    %9 = sbr.rel target = $region3
  $region8: #{residual_block.7} parent=0 // loop_exit
    _

// kernel: residual_block.4
$region0: #{residual_block.4}
  #allocation0 [shape = 'u32[]', space=smem, size = 0x4, offset = 0x4, fixed_abs, tag = 'smem constant byte address 0x4 - core index']
  #allocation1 [shape = 'u32[144,128]{1,0:T(1,128)}', space=vmem, size = 0x12000, scoped, tag = 'internal scratch']
  %s0 = inlined_call_operand.vmem [shape: f32[2,18,18,128], index: 0, kind: input, shape index: {}]
  %s1 = inlined_call_operand.vmem [shape: f32[9,128,128], index: 1, kind: input, shape index: {}]
  %s2 = inlined_call_operand.vmem [shape: f32[2,256,128], index: 2, kind: output, shape index: {0}]
  %s3 = inlined_call_operand.vmem [shape: f32[2,8,128], index: 3, kind: output, shape index: {1}]
  %s4 = inlined_call_operand.vmem [shape: f32[2,8,128], index: 4, kind: output, shape index: {2}]
  %5 = xla_tuple %s2, %s3, %s4
  %s6 = sld [smem:[#allocation0]]
  $region57: #{residual_block.4} parent=0
    _
  %s8 = ssub.s32 1, %s6
  %s9 = scalar_select 0, %s8, %s6
  loop: start=0, step=1, limit=4
  $region2: #{residual_block.4} parent=0 // loop_pre_header
    _
  $region3: #{residual_block.4} parent=0 // loop_header
    %s11 = sphi 0, %s15
    %p12 = scmp.ge.s32.totalorder %s11, 4
    %s21 = sphi 0, %s23
    %s24 = sphi 0, %s21
    %s25 = sphi 0, %s24
    %s41 = sphi 0, %s25
    %s45 = sphi 0, %s45
    %s47 = sphi 0, %s45
    %s48 = sphi 0, %s47
    %s62 = sphi 0, %s48
    %s68 = sphi 0, %s70
    %s71 = sphi 0, %s68
    %s72 = sphi 0, %s71
    %s88 = sphi 0, %s72
    %s94 = sphi 0, %s96
    %s97 = sphi 0, %s94
    %s98 = sphi 0, %s97
    %s114 = sphi 0, %s98
    %s120 = sphi 0, %s122
    %s123 = sphi 0, %s120
    %s124 = sphi 0, %s123
    %s140 = sphi 0, %s124
  $region4: #{residual_block.4} parent=0 // loop_header_branch
    %14 = sbr.rel (%p12) target = $region8
  $region5: #{residual_block.4} parent=0 // loop_body
    %s16 = ssub.s32 %s11, 1
    %s17 = ssub.s32 %s11, 2
    %s18 = sadd.s32 %s11, 1
    %s19 = ssub.s32 %s11, %s18
    %p20 = scmp.eq.s32.totalorder %s19, 0
    %s22 = sadd.s32 %s21, 1
    %s23 = scalar_select %p20, %s21, %s22
    %p26 = pneg %p20
    %p27 = scmp.eq.s32.totalorder %s11, 1
    %p28 = por %p26, %p27
    %p29 = scmp.ne.s32.totalorder %s21, %s24
    %p30 = scmp.eq.s32.totalorder %s11, 0
    %p31 = por %p29, %p30
    %p32 = scmp.ne.s32.totalorder %s21, %s24
    %p33 = scmp.eq.s32.totalorder %s16, 1
    %p34 = por %p32, %p33
    %p35 = scmp.ne.s32.totalorder %s24, %s25
    %p36 = scmp.eq.s32.totalorder %s16, 0
    %p37 = por %p35, %p36
    %p38 = scmp.ne.s32.totalorder %s24, %s25
    %p39 = scmp.eq.s32.totalorder %s17, 1
    %p40 = por %p38, %p39
    %p42 = scmp.ne.s32.totalorder %s25, %s41
    %p43 = scmp.eq.s32.totalorder %s17, 0
    %p44 = por %p42, %p43
    %s46 = sadd.s32 %s45, 1
    %p49 = scmp.eq.s32.totalorder %s11, 1
    %p50 = scmp.ne.s32.totalorder %s45, %s47
    %p51 = scmp.eq.s32.totalorder %s11, 0
    %p52 = por %p50, %p51
    %p53 = scmp.ne.s32.totalorder %s45, %s47
    %p54 = scmp.eq.s32.totalorder %s16, 1
    %p55 = por %p53, %p54
    %p56 = scmp.ne.s32.totalorder %s47, %s48
    %p57 = scmp.eq.s32.totalorder %s16, 0
    %p58 = por %p56, %p57
    %p59 = scmp.ne.s32.totalorder %s47, %s48
    %p60 = scmp.eq.s32.totalorder %s17, 1
    %p61 = por %p59, %p60
    %p63 = scmp.ne.s32.totalorder %s48, %s62
    %p64 = scmp.eq.s32.totalorder %s17, 0
    %p65 = por %p63, %p64
    %s66 = ssub.s32 %s11, %s18
    %p67 = scmp.eq.s32.totalorder %s66, 0
    %s69 = sadd.s32 %s68, 1
    %s70 = scalar_select %p67, %s68, %s69
    %p73 = pneg %p67
    %p74 = scmp.eq.s32.totalorder %s11, 1
    %p75 = por %p73, %p74
    %p76 = scmp.ne.s32.totalorder %s68, %s71
    %p77 = scmp.eq.s32.totalorder %s11, 0
    %p78 = por %p76, %p77
    %p79 = scmp.ne.s32.totalorder %s68, %s71
    %p80 = scmp.eq.s32.totalorder %s16, 1
    %p81 = por %p79, %p80
    %p82 = scmp.ne.s32.totalorder %s71, %s72
    %p83 = scmp.eq.s32.totalorder %s16, 0
    %p84 = por %p82, %p83
    %p85 = scmp.ne.s32.totalorder %s71, %s72
    %p86 = scmp.eq.s32.totalorder %s17, 1
    %p87 = por %p85, %p86
    %p89 = scmp.ne.s32.totalorder %s72, %s88
    %p90 = scmp.eq.s32.totalorder %s17, 0
    %p91 = por %p89, %p90
    %s92 = ssub.s32 %s11, %s18
    %p93 = scmp.eq.s32.totalorder %s92, 0
    %s95 = sadd.s32 %s94, 1
    %s96 = scalar_select %p93, %s94, %s95
    %p99 = pneg %p93
    %p100 = scmp.eq.s32.totalorder %s11, 1
    %p101 = por %p99, %p100
    %p102 = scmp.ne.s32.totalorder %s94, %s97
    %p103 = scmp.eq.s32.totalorder %s11, 0
    %p104 = por %p102, %p103
    %p105 = scmp.ne.s32.totalorder %s94, %s97
    %p106 = scmp.eq.s32.totalorder %s16, 1
    %p107 = por %p105, %p106
    %p108 = scmp.ne.s32.totalorder %s97, %s98
    %p109 = scmp.eq.s32.totalorder %s16, 0
    %p110 = por %p108, %p109
    %p111 = scmp.ne.s32.totalorder %s97, %s98
    %p112 = scmp.eq.s32.totalorder %s17, 1
    %p113 = por %p111, %p112
    %p115 = scmp.ne.s32.totalorder %s98, %s114
    %p116 = scmp.eq.s32.totalorder %s17, 0
    %p117 = por %p115, %p116
    %s118 = ssub.s32 %s11, %s18
    %p119 = scmp.eq.s32.totalorder %s118, 0
    %s121 = sadd.s32 %s120, 1
    %s122 = scalar_select %p119, %s120, %s121
    %p125 = pneg %p119
    %p126 = scmp.eq.s32.totalorder %s11, 1
    %p127 = por %p125, %p126
    %p128 = scmp.ne.s32.totalorder %s120, %s123
    %p129 = scmp.eq.s32.totalorder %s11, 0
    %p130 = por %p128, %p129
    %p131 = scmp.ne.s32.totalorder %s120, %s123
    %p132 = scmp.eq.s32.totalorder %s16, 1
    %p133 = por %p131, %p132
    %p134 = scmp.ne.s32.totalorder %s123, %s124
    %p135 = scmp.eq.s32.totalorder %s16, 0
    %p136 = por %p134, %p135
    %p137 = scmp.ne.s32.totalorder %s123, %s124
    %p138 = scmp.eq.s32.totalorder %s17, 1
    %p139 = por %p137, %p138
    %p141 = scmp.ne.s32.totalorder %s124, %s140
    %p142 = scmp.eq.s32.totalorder %s17, 0
    %p143 = por %p141, %p142
    %p144 = scmp.le.s32.totalorder 1, %s11
    %p145 = scmp.lt.s32.totalorder %s11, 3
    %p146 = pnand %p144, %p145
    %p147 = pneg %p146
    // Predicated region
    $region9: #{residual_block.4} parent=5 // pred_check
      _
    $region10: #{residual_block.4} parent=5 // pred_check_branch
      %149 = sbr.rel (%p146) target = $region12
    $region11: #{residual_block.4} parent=5 // pred_region
      %s150 = ssub.s32 %s11, 1
      // Predicated region
      $region13: #{residual_block.4} parent=11 // pred_check
        %p151 = pneg %p58
      $region14: #{residual_block.4} parent=11 // pred_check_branch
        %153 = sbr.rel (%p151) target = $region16
      $region15: #{residual_block.4} parent=11 // pred_region
        _
      $region16: #{residual_block.4} parent=11 // pred_fallthru
        _
    $region12: #{residual_block.4} parent=5 // pred_fallthru
      _
    %p154 = scmp.lt.s32.totalorder %s11, 2
    // Predicated region
    $region17: #{residual_block.4} parent=5 // pred_check
      %p155 = pneg %p154
    $region18: #{residual_block.4} parent=5 // pred_check_branch
      %157 = sbr.rel (%p155) target = $region20
    $region19: #{residual_block.4} parent=5 // pred_region
      // Predicated region
      $region21: #{residual_block.4} parent=19 // pred_check
        %p158 = pneg %p31
      $region22: #{residual_block.4} parent=19 // pred_check_branch
        %160 = sbr.rel (%p158) target = $region24
      $region23: #{residual_block.4} parent=19 // pred_region
        %p161 = scmp.lt.s32.totalorder %s11, 1
        %s162 = scalar_select %p161, %s11, 1
        %s163 = smul.addr %s162, 54
        %s164 = smul.addr %s163, 8
        %s165 = scalar_lea.vmem %s0, %s164
      $region24: #{residual_block.4} parent=19 // pred_fallthru
        _
    $region20: #{residual_block.4} parent=5 // pred_fallthru
      _
    %p166 = scmp.le.s32.totalorder 1, %s11
    %p167 = scmp.lt.s32.totalorder %s11, 3
    %p168 = pnand %p166, %p167
    %p169 = pneg %p168
    // Predicated region
    $region25: #{residual_block.4} parent=5 // pred_check
      _
    $region26: #{residual_block.4} parent=5 // pred_check_branch
      %171 = sbr.rel (%p168) target = $region28
    $region27: #{residual_block.4} parent=5 // pred_region
      %s172 = ssub.s32 %s11, 1
      %p173 = scmp.lt.s32.totalorder %s16, 1
      %s174 = scalar_select %p173, %s16, 1
      %s175 = smul.addr %s174, 54
      %s176 = smul.addr %s175, 8
      %s177 = scalar_lea.vmem %s0, %s176
      %p178 = pneg %p37
      %p179 = pneg %p34
      %p180 = pneg %p58
      %p181 = pneg %p55
      %p182 = pneg %p84
      %p183 = pneg %p81
      %p184 = scmp.lt.s32.totalorder %s16, 1
      %s185 = scalar_select %p184, %s16, 1
      %s186 = smul.addr %s185, 32
      %s187 = smul.addr %s186, 8
      %s188 = scalar_lea.vmem %s2, %s187
      %p189 = pneg %p110
      %p190 = pneg %p107
      %p191 = scmp.lt.s32.totalorder %s16, 1
      %s192 = scalar_select %p191, %s16, 1
      %s193 = smul.addr %s192, 8
      %s194 = scalar_lea.vmem %s3, %s193
      %p195 = pneg %p136
      %p196 = pneg %p133
      %p197 = scmp.lt.s32.totalorder %s16, 1
      %s198 = scalar_select %p197, %s16, 1
      %s199 = smul.addr %s198, 8
      %s200 = scalar_lea.vmem %s4, %s199
      %p201 = scmp.lt.s32.totalorder %s16, 1
      %s202 = scalar_select %p201, %s16, 1
      %s203 = smul.addr %s202, 54
      %s204 = smul.addr %s203, 8
      %s205 = scalar_lea.vmem %s0, %s204
      %p206 = scmp.lt.s32.totalorder %s16, 1
      %s207 = scalar_select %p206, %s16, 1
      %s208 = smul.addr %s207, 32
      %s209 = smul.addr %s208, 8
      %s210 = scalar_lea.vmem %s2, %s209
      %p211 = scmp.lt.s32.totalorder %s16, 1
      %s212 = scalar_select %p211, %s16, 1
      %s213 = smul.addr %s212, 8
      %s214 = scalar_lea.vmem %s3, %s213
      %p215 = scmp.lt.s32.totalorder %s16, 1
      %s216 = scalar_select %p215, %s16, 1
      %s217 = smul.addr %s216, 8
      %s218 = scalar_lea.vmem %s4, %s217
      %v219 = vld [vmem:[%s205] sm:$0xff]
      %v220 = vld [vmem:[%s205 + $0x8] sm:$0xff]
      %v221 = vld [vmem:[%s205 + $0x18] sm:$0xff]
      %v222 = vld [vmem:[%s205 + $0x20] sm:$0xff]
      %v223 = vld [vmem:[%s205 + $0x30] sm:$0xff]
      %v224 = vld [vmem:[%s205 + $0x38] sm:$0xff]
      %v225 = vld [vmem:[%s205 + $0x48] sm:$0xff]
      %v226 = vld [vmem:[%s205 + $0x50] sm:$0xff]
      %v227 = vld [vmem:[%s205 + $0x60] sm:$0xff]
      %v228 = vld [vmem:[%s205 + $0x68] sm:$0xff]
      %v229 = vld [vmem:[%s205 + $0x78] sm:$0xff]
      %v230 = vld [vmem:[%s205 + $0x80] sm:$0xff]
      %v231 = vld [vmem:[%s205 + $0x90] sm:$0xff]
      %v232 = vld [vmem:[%s205 + $0x98] sm:$0xff]
      %v233 = vld [vmem:[%s205 + $0xa8] sm:$0xff]
      %v234 = vld [vmem:[%s205 + $0xb0] sm:$0xff]
      %v235 = vld [vmem:[%s205 + $0xc0] sm:$0xff]
      %v236 = vld [vmem:[%s205 + $0xc8] sm:$0xff]
      %v237 = vld [vmem:[%s205 + $0xd8] sm:$0xff]
      %v238 = vld [vmem:[%s205 + $0xe0] sm:$0xff]
      %v239 = vld [vmem:[%s205 + $0xf0] sm:$0xff]
      %v240 = vld [vmem:[%s205 + $0xf8] sm:$0xff]
      %v241 = vld [vmem:[%s205 + $0x108] sm:$0xff]
      %v242 = vld [vmem:[%s205 + $0x110] sm:$0xff]
      %v243 = vld [vmem:[%s205 + $0x120] sm:$0xff]
      %v244 = vld [vmem:[%s205 + $0x128] sm:$0xff]
      %v245 = vld [vmem:[%s205 + $0x138] sm:$0xff]
      %v246 = vld [vmem:[%s205 + $0x140] sm:$0xff]
      %v247 = vld [vmem:[%s205 + $0x150] sm:$0xff]
      %v248 = vld [vmem:[%s205 + $0x158] sm:$0xff]
      %v249 = vld [vmem:[%s205 + $0x168] sm:$0xff]
      %v250 = vld [vmem:[%s205 + $0x170] sm:$0xff]
      %v251 = vld [vmem:[%s1] sm:$0xff]
      %v252 = vld [vmem:[%s1 + $0x8] sm:$0xff]
      %v253 = vld [vmem:[%s1 + $0x10] sm:$0xff]
      %v254 = vld [vmem:[%s1 + $0x18] sm:$0xff]
      %v255 = vld [vmem:[%s1 + $0x20] sm:$0xff]
      %v256 = vld [vmem:[%s1 + $0x28] sm:$0xff]
      %v257 = vld [vmem:[%s1 + $0x30] sm:$0xff]
      %v258 = vld [vmem:[%s1 + $0x38] sm:$0xff]
      %v259 = vld [vmem:[%s1 + $0x40] sm:$0xff]
      %v260 = vld [vmem:[%s1 + $0x48] sm:$0xff]
      %v261 = vld [vmem:[%s1 + $0x50] sm:$0xff]
      %v262 = vld [vmem:[%s1 + $0x58] sm:$0xff]
      %v263 = vld [vmem:[%s1 + $0x60] sm:$0xff]
      %v264 = vld [vmem:[%s1 + $0x68] sm:$0xff]
      %v265 = vld [vmem:[%s1 + $0x70] sm:$0xff]
      %v266 = vld [vmem:[%s1 + $0x78] sm:$0xff]
      %v267 = vld [vmem:[%s205 + $0x1] sm:$0xff]
      %v268 = vld [vmem:[%s205 + $0x9] sm:$0xff]
      %v269 = vld [vmem:[%s205 + $0x19] sm:$0xff]
      %v270 = vld [vmem:[%s205 + $0x21] sm:$0xff]
      %v271 = vld [vmem:[%s205 + $0x31] sm:$0xff]
      %v272 = vld [vmem:[%s205 + $0x39] sm:$0xff]
      %v273 = vld [vmem:[%s205 + $0x49] sm:$0xff]
      %v274 = vld [vmem:[%s205 + $0x51] sm:$0xff]
      %v275 = vld [vmem:[%s205 + $0x61] sm:$0xff]
      %v276 = vld [vmem:[%s205 + $0x69] sm:$0xff]
      %v277 = vld [vmem:[%s205 + $0x79] sm:$0xff]
      %v278 = vld [vmem:[%s205 + $0x81] sm:$0xff]
      %v279 = vld [vmem:[%s205 + $0x91] sm:$0xff]
      %v280 = vld [vmem:[%s205 + $0x99] sm:$0xff]
      %v281 = vld [vmem:[%s205 + $0xa9] sm:$0xff]
      %v282 = vld [vmem:[%s205 + $0xb1] sm:$0xff]
      %v283 = vld [vmem:[%s205 + $0xc1] sm:$0xff]
      %v284 = vld [vmem:[%s205 + $0xc9] sm:$0xff]
      %v285 = vld [vmem:[%s205 + $0xd9] sm:$0xff]
      %v286 = vld [vmem:[%s205 + $0xe1] sm:$0xff]
      %v287 = vld [vmem:[%s205 + $0xf1] sm:$0xff]
      %v288 = vld [vmem:[%s205 + $0xf9] sm:$0xff]
      %v289 = vld [vmem:[%s205 + $0x109] sm:$0xff]
      %v290 = vld [vmem:[%s205 + $0x111] sm:$0xff]
      %v291 = vld [vmem:[%s205 + $0x121] sm:$0xff]
      %v292 = vld [vmem:[%s205 + $0x129] sm:$0xff]
      %v293 = vld [vmem:[%s205 + $0x139] sm:$0xff]
      %v294 = vld [vmem:[%s205 + $0x141] sm:$0xff]
      %v295 = vld [vmem:[%s205 + $0x151] sm:$0xff]
      %v296 = vld [vmem:[%s205 + $0x159] sm:$0xff]
      %v297 = vld [vmem:[%s205 + $0x169] sm:$0xff]
      %v298 = vld [vmem:[%s205 + $0x171] sm:$0xff]
      %s299 = scalar_lea.vmem %s1, 128
      %v300 = vld [vmem:[%s299] sm:$0xff]
      %v301 = vld [vmem:[%s299 + $0x8] sm:$0xff]
      %v302 = vld [vmem:[%s299 + $0x10] sm:$0xff]
      %v303 = vld [vmem:[%s299 + $0x18] sm:$0xff]
      %v304 = vld [vmem:[%s299 + $0x20] sm:$0xff]
      %v305 = vld [vmem:[%s299 + $0x28] sm:$0xff]
      %v306 = vld [vmem:[%s299 + $0x30] sm:$0xff]
      %v307 = vld [vmem:[%s299 + $0x38] sm:$0xff]
      %v308 = vld [vmem:[%s299 + $0x40] sm:$0xff]
      %v309 = vld [vmem:[%s299 + $0x48] sm:$0xff]
      %v310 = vld [vmem:[%s299 + $0x50] sm:$0xff]
      %v311 = vld [vmem:[%s299 + $0x58] sm:$0xff]
      %v312 = vld [vmem:[%s299 + $0x60] sm:$0xff]
      %v313 = vld [vmem:[%s299 + $0x68] sm:$0xff]
      %v314 = vld [vmem:[%s299 + $0x70] sm:$0xff]
      %v315 = vld [vmem:[%s299 + $0x78] sm:$0xff]
      %316 = vmatprep.subr.mxu0 0.0
      %317 = vmatpush1.msra.mxu0 %v300
      %318 = vmatprep.subr.mxu0 0.0
      %319 = vmatpush1.msra.mxu0 %v301
      %320 = vmatprep.subr.mxu0 0.0
      %321 = vmatpush1.msra.mxu0 %v302
      %322 = vmatprep.subr.mxu0 0.0
      %323 = vmatpush1.msra.mxu0 %v303
      %324 = vmatprep.subr.mxu0 0.0
      %325 = vmatpush1.msra.mxu0 %v304
      %326 = vmatprep.subr.mxu0 0.0
      %327 = vmatpush1.msra.mxu0 %v305
      %328 = vmatprep.subr.mxu0 0.0
      %329 = vmatpush1.msra.mxu0 %v306
      %330 = vmatprep.subr.mxu0 0.0
      %331 = vmatpush1.msra.mxu0 %v307
      %332 = vmatprep.subr.mxu0 0.0
      %333 = vmatpush1.msra.mxu0 %v308
      %334 = vmatprep.subr.mxu0 0.0
      %335 = vmatpush1.msra.mxu0 %v309
      %336 = vmatprep.subr.mxu0 0.0
      %337 = vmatpush1.msra.mxu0 %v310
      %338 = vmatprep.subr.mxu0 0.0
      %339 = vmatpush1.msra.mxu0 %v311
      %340 = vmatprep.subr.mxu0 0.0
      %341 = vmatpush1.msra.mxu0 %v312
      %342 = vmatprep.subr.mxu0 0.0
      %343 = vmatpush1.msra.mxu0 %v313
      %344 = vmatprep.subr.mxu0 0.0
      %345 = vmatpush1.msra.mxu0 %v314
      %346 = vmatprep.subr.mxu0 0.0
      %347 = vmatpush1.msra.mxu0 %v315
      %348 = vmatprep.subr.mxu0 0.0
      %349 = vmatpush1.msra.mxu0 0.0
      %350 = vmatprep.subr.mxu0 0.0
      %351 = vmatpush1.msra.mxu0 0.0
      %352 = vmatprep.subr.mxu0 0.0
      %353 = vmatpush1.msra.mxu0 0.0
      %354 = vmatprep.subr.mxu0 0.0
      %355 = vmatpush1.msra.mxu0 0.0
      %356 = vmatprep.subr.mxu0 0.0
      %357 = vmatpush1.msra.mxu0 0.0
      %358 = vmatprep.subr.mxu0 0.0
      %359 = vmatpush1.msra.mxu0 0.0
      %360 = vmatprep.subr.mxu0 0.0
      %361 = vmatpush1.msra.mxu0 0.0
      %362 = vmatprep.subr.mxu0 0.0
      %363 = vmatpush1.msra.mxu0 0.0
      %364 = vmatprep.subr.mxu0 0.0
      %365 = vmatpush1.msra.mxu0 0.0
      %366 = vmatprep.subr.mxu0 0.0
      %367 = vmatpush1.msra.mxu0 0.0
      %368 = vmatprep.subr.mxu0 0.0
      %369 = vmatpush1.msra.mxu0 0.0
      %370 = vmatprep.subr.mxu0 0.0
      %371 = vmatpush1.msra.mxu0 0.0
      %372 = vmatprep.subr.mxu0 0.0
      %373 = vmatpush1.msra.mxu0 0.0
      %374 = vmatprep.subr.mxu0 0.0
      %375 = vmatpush1.msra.mxu0 0.0
      %376 = vmatprep.subr.mxu0 0.0
      %377 = vmatpush1.msra.mxu0 0.0
      %378 = vmatprep.subr.mxu0 0.0
      %379 = vmatpush1.msra.mxu0 0.0
      %380 = vmatprep.mubr.f32.mxu0 0.0
      %381 = vmatmul.mubr.f32.gmra.mrb[0].mxu0 %v267
      %v382 = vpop.f32.mrb[0].mxu0
      %v383 = vadd.f32 0.0, %v382
      %v384 = vpop.f32.mrb[0].mxu0
      %385 = vmatprep.mubr.f32.mxu0 0.0
      %386 = vmatmul.mubr.f32.gmra.mrb[0].mxu0 %v268
      %v387 = vpop.f32.mrb[0].mxu0
      %v388 = vadd.f32 0.0, %v387
      %v389 = vpop.f32.mrb[0].mxu0
      %390 = vmatprep.mubr.f32.mxu0 0.0
      %391 = vmatmul.mubr.f32.gmra.mrb[0].mxu0 %v269
      %v392 = vpop.f32.mrb[0].mxu0
      %v393 = vadd.f32 0.0, %v392
      %v394 = vpop.f32.mrb[0].mxu0
      %395 = vmatprep.mubr.f32.mxu0 0.0
      %396 = vmatmul.mubr.f32.gmra.mrb[0].mxu0 %v270
      %v397 = vpop.f32.mrb[0].mxu0
      %v398 = vadd.f32 0.0, %v397
      %v399 = vpop.f32.mrb[0].mxu0
      %400 = vmatprep.mubr.f32.mxu0 0.0
      %401 = vmatmul.mubr.f32.gmra.mrb[0].mxu0 %v271
      %v402 = vpop.f32.mrb[0].mxu0
      %v403 = vadd.f32 0.0, %v402
      %v404 = vpop.f32.mrb[0].mxu0
      %405 = vmatprep.mubr.f32.mxu0 0.0
      %406 = vmatmul.mubr.f32.gmra.mrb[0].mxu0 %v272
      %v407 = vpop.f32.mrb[0].mxu0
      %v408 = vadd.f32 0.0, %v407
      %v409 = vpop.f32.mrb[0].mxu0
      %410 = vmatprep.mubr.f32.mxu0 0.0
      %411 = vmatmul.mubr.f32.gmra.mrb[0].mxu0 %v273
      %v412 = vpop.f32.mrb[0].mxu0
      %v413 = vadd.f32 0.0, %v412
      %v414 = vpop.f32.mrb[0].mxu0
      %415 = vmatprep.mubr.f32.mxu0 0.0
      %416 = vmatmul.mubr.f32.gmra.mrb[0].mxu0 %v274
      %v417 = vpop.f32.mrb[0].mxu0
      %v418 = vadd.f32 0.0, %v417
      %v419 = vpop.f32.mrb[0].mxu0
      %420 = vmatprep.mubr.f32.mxu0 0.0
      %421 = vmatmul.mubr.f32.gmra.mrb[0].mxu0 %v275
      %v422 = vpop.f32.mrb[0].mxu0
      %v423 = vadd.f32 0.0, %v422
      %v424 = vpop.f32.mrb[0].mxu0
      %425 = vmatprep.mubr.f32.mxu0 0.0
      %426 = vmatmul.mubr.f32.gmra.mrb[0].mxu0 %v276
      %v427 = vpop.f32.mrb[0].mxu0
      %v428 = vadd.f32 0.0, %v427
      %v429 = vpop.f32.mrb[0].mxu0
      %430 = vmatprep.mubr.f32.mxu0 0.0
      %431 = vmatmul.mubr.f32.gmra.mrb[0].mxu0 %v277
      %v432 = vpop.f32.mrb[0].mxu0
      %v433 = vadd.f32 0.0, %v432
      %v434 = vpop.f32.mrb[0].mxu0
      %435 = vmatprep.mubr.f32.mxu0 0.0
      %436 = vmatmul.mubr.f32.gmra.mrb[0].mxu0 %v278
      %v437 = vpop.f32.mrb[0].mxu0
      %v438 = vadd.f32 0.0, %v437
      %v439 = vpop.f32.mrb[0].mxu0
      %440 = vmatprep.mubr.f32.mxu0 0.0
      %441 = vmatmul.mubr.f32.gmra.mrb[0].mxu0 %v279
      %v442 = vpop.f32.mrb[0].mxu0
      %v443 = vadd.f32 0.0, %v442
      %v444 = vpop.f32.mrb[0].mxu0
      %445 = vmatprep.mubr.f32.mxu0 0.0
      %446 = vmatmul.mubr.f32.gmra.mrb[0].mxu0 %v280
      %v447 = vpop.f32.mrb[0].mxu0
      %v448 = vadd.f32 0.0, %v447
      %v449 = vpop.f32.mrb[0].mxu0
      %450 = vmatprep.mubr.f32.mxu0 0.0
      %451 = vmatmul.mubr.f32.gmra.mrb[0].mxu0 %v281
      %v452 = vpop.f32.mrb[0].mxu0
      %v453 = vadd.f32 0.0, %v452
      %v454 = vpop.f32.mrb[0].mxu0
      %455 = vmatprep.mubr.f32.mxu0 0.0
      %456 = vmatmul.mubr.f32.gmra.mrb[0].mxu0 %v282
      %v457 = vpop.f32.mrb[0].mxu0
      %v458 = vadd.f32 0.0, %v457
      %v459 = vpop.f32.mrb[0].mxu0
      %460 = vmatprep.mubr.f32.mxu0 0.0
      %461 = vmatmul.mubr.f32.gmra.mrb[0].mxu0 %v283
      %v462 = vpop.f32.mrb[0].mxu0
      %v463 = vadd.f32 0.0, %v462
      %v464 = vpop.f32.mrb[0].mxu0
      %465 = vmatprep.mubr.f32.mxu0 0.0
      %466 = vmatmul.mubr.f32.gmra.mrb[0].mxu0 %v284
      %v467 = vpop.f32.mrb[0].mxu0
      %v468 = vadd.f32 0.0, %v467
      %v469 = vpop.f32.mrb[0].mxu0
      %470 = vmatprep.mubr.f32.mxu0 0.0
      %471 = vmatmul.mubr.f32.gmra.mrb[0].mxu0 %v285
      %v472 = vpop.f32.mrb[0].mxu0
      %v473 = vadd.f32 0.0, %v472
      %v474 = vpop.f32.mrb[0].mxu0
      %475 = vmatprep.mubr.f32.mxu0 0.0
      %476 = vmatmul.mubr.f32.gmra.mrb[0].mxu0 %v286
      %v477 = vpop.f32.mrb[0].mxu0
      %v478 = vadd.f32 0.0, %v477
      %v479 = vpop.f32.mrb[0].mxu0
      %480 = vmatprep.mubr.f32.mxu0 0.0
      %481 = vmatmul.mubr.f32.gmra.mrb[0].mxu0 %v287
      %v482 = vpop.f32.mrb[0].mxu0
      %v483 = vadd.f32 0.0, %v482
      %v484 = vpop.f32.mrb[0].mxu0
      %485 = vmatprep.mubr.f32.mxu0 0.0
      %486 = vmatmul.mubr.f32.gmra.mrb[0].mxu0 %v288
      %v487 = vpop.f32.mrb[0].mxu0
      %v488 = vadd.f32 0.0, %v487
      %v489 = vpop.f32.mrb[0].mxu0
      %490 = vmatprep.mubr.f32.mxu0 0.0
      %491 = vmatmul.mubr.f32.gmra.mrb[0].mxu0 %v289
      %v492 = vpop.f32.mrb[0].mxu0
      %v493 = vadd.f32 0.0, %v492
      %v494 = vpop.f32.mrb[0].mxu0
      %495 = vmatprep.mubr.f32.mxu0 0.0
      %496 = vmatmul.mubr.f32.gmra.mrb[0].mxu0 %v290
      %v497 = vpop.f32.mrb[0].mxu0
      %v498 = vadd.f32 0.0, %v497
      %v499 = vpop.f32.mrb[0].mxu0
      %500 = vmatprep.mubr.f32.mxu0 0.0
      %501 = vmatmul.mubr.f32.gmra.mrb[0].mxu0 %v291
      %v502 = vpop.f32.mrb[0].mxu0
      %v503 = vadd.f32 0.0, %v502
      %v504 = vpop.f32.mrb[0].mxu0
      %505 = vmatprep.mubr.f32.mxu0 0.0
      %506 = vmatmul.mubr.f32.gmra.mrb[0].mxu0 %v292
      %v507 = vpop.f32.mrb[0].mxu0
      %v508 = vadd.f32 0.0, %v507
      %v509 = vpop.f32.mrb[0].mxu0
      %510 = vmatprep.mubr.f32.mxu0 0.0
      %511 = vmatmul.mubr.f32.gmra.mrb[0].mxu0 %v293
      %v512 = vpop.f32.mrb[0].mxu0
      %v513 = vadd.f32 0.0, %v512
      %v514 = vpop.f32.mrb[0].mxu0
      %515 = vmatprep.mubr.f32.mxu0 0.0
      %516 = vmatmul.mubr.f32.gmra.mrb[0].mxu0 %v294
      %v517 = vpop.f32.mrb[0].mxu0
      %v518 = vadd.f32 0.0, %v517
      %v519 = vpop.f32.mrb[0].mxu0
      %520 = vmatprep.mubr.f32.mxu0 0.0
      %521 = vmatmul.mubr.f32.gmra.mrb[0].mxu0 %v295
      %v522 = vpop.f32.mrb[0].mxu0
      %v523 = vadd.f32 0.0, %v522
      %v524 = vpop.f32.mrb[0].mxu0
      %525 = vmatprep.mubr.f32.mxu0 0.0
      %526 = vmatmul.mubr.f32.gmra.mrb[0].mxu0 %v296
      %v527 = vpop.f32.mrb[0].mxu0
      %v528 = vadd.f32 0.0, %v527
      %v529 = vpop.f32.mrb[0].mxu0
      %530 = vmatprep.mubr.f32.mxu0 0.0
      %531 = vmatmul.mubr.f32.gmra.mrb[0].mxu0 %v297
      %v532 = vpop.f32.mrb[0].mxu0
      %v533 = vadd.f32 0.0, %v532
      %v534 = vpop.f32.mrb[0].mxu0
      %535 = vmatprep.mubr.f32.mxu0 0.0
      %536 = vmatmul.mubr.f32.gmra.mrb[0].mxu0 %v298
      %v537 = vpop.f32.mrb[0].mxu0
      %v538 = vadd.f32 0.0, %v537
      %v539 = vpop.f32.mrb[0].mxu0
      %540 = vdwg.mxu0
      %541 = vmatprep.subr.mxu0 0.0
      %542 = vmatpush1.msra.mxu0 %v251
      %543 = vmatprep.subr.mxu0 0.0
      %544 = vmatpush1.msra.mxu0 %v252
      %545 = vmatprep.subr.mxu0 0.0
      %546 = vmatpush1.msra.mxu0 %v253
      %547 = vmatprep.subr.mxu0 0.0
      %548 = vmatpush1.msra.mxu0 %v254
      %549 = vmatprep.subr.mxu0 0.0
      %550 = vmatpush1.msra.mxu0 %v255
      %551 = vmatprep.subr.mxu0 0.0
      %552 = vmatpush1.msra.mxu0 %v256
      %553 = vmatprep.subr.mxu0 0.0
      %554 = vmatpush1.msra.mxu0 %v257
      %555 = vmatprep.subr.mxu0 0.0
      %556 = vmatpush1.msra.mxu0 %v258
      %557 = vmatprep.subr.mxu0 0.0
      %558 = vmatpush1.msra.mxu0 %v259
      %559 = vmatprep.subr.mxu0 0.0
      %560 = vmatpush1.msra.mxu0 %v260
      %561 = vmatprep.subr.mxu0 0.0
      %562 = vmatpush1.msra.mxu0 %v261
      %563 = vmatprep.subr.mxu0 0.0
      %564 = vmatpush1.msra.mxu0 %v262
      %565 = vmatprep.subr.mxu0 0.0
      %566 = vmatpush1.msra.mxu0 %v263
      %567 = vmatprep.subr.mxu0 0.0
      %568 = vmatpush1.msra.mxu0 %v264
      %569 = vmatprep.subr.mxu0 0.0
      %570 = vmatpush1.msra.mxu0 %v265
      %571 = vmatprep.subr.mxu0 0.0
      %572 = vmatpush1.msra.mxu0 %v266
      %573 = vmatprep.subr.mxu0 0.0
      %574 = vmatpush1.msra.mxu0 0.0
      %575 = vmatprep.subr.mxu0 0.0
      %576 = vmatpush1.msra.mxu0 0.0
      %577 = vmatprep.subr.mxu0 0.0
      %578 = vmatpush1.msra.mxu0 0.0
      %579 = vmatprep.subr.mxu0 0.0
      %580 = vmatpush1.msra.mxu0 0.0
      %581 = vmatprep.subr.mxu0 0.0
      %582 = vmatpush1.msra.mxu0 0.0
      %583 = vmatprep.subr.mxu0 0.0
      %584 = vmatpush1.msra.mxu0 0.0
      %585 = vmatprep.subr.mxu0 0.0
      %586 = vmatpush1.msra.mxu0 0.0
      %587 = vmatprep.subr.mxu0 0.0
      %588 = vmatpush1.msra.mxu0 0.0
      %589 = vmatprep.subr.mxu0 0.0
      %590 = vmatpush1.msra.mxu0 0.0
      %591 = vmatprep.subr.mxu0 0.0
      %592 = vmatpush1.msra.mxu0 0.0
      %593 = vmatprep.subr.mxu0 0.0
      %594 = vmatpush1.msra.mxu0 0.0
      %595 = vmatprep.subr.mxu0 0.0
      %596 = vmatpush1.msra.mxu0 0.0
      %597 = vmatprep.subr.mxu0 0.0
      %598 = vmatpush1.msra.mxu0 0.0
      %599 = vmatprep.subr.mxu0 0.0
      %600 = vmatpush1.msra.mxu0 0.0
      %601 = vmatprep.subr.mxu0 0.0
      %602 = vmatpush1.msra.mxu0 0.0
      %603 = vmatprep.subr.mxu0 0.0
      %604 = vmatpush1.msra.mxu0 0.0
      %605 = vmatprep.mubr.f32.mxu0 0.0
      %606 = vmatmul.mubr.f32.gmra.mrb[0].mxu0 %v219
      %v607 = vpop.f32.mrb[0].mxu0
      %v608 = vadd.f32 %v383, %v607
      %v609 = vpop.f32.mrb[0].mxu0
      %610 = vmatprep.mubr.f32.mxu0 0.0
      %611 = vmatmul.mubr.f32.gmra.mrb[0].mxu0 %v220
      %v612 = vpop.f32.mrb[0].mxu0
      %v613 = vadd.f32 %v388, %v612
      %v614 = vpop.f32.mrb[0].mxu0
      %615 = vmatprep.mubr.f32.mxu0 0.0
      %616 = vmatmul.mubr.f32.gmra.mrb[0].mxu0 %v221
      %v617 = vpop.f32.mrb[0].mxu0
      %v618 = vadd.f32 %v393, %v617
      %v619 = vpop.f32.mrb[0].mxu0
      %620 = vmatprep.mubr.f32.mxu0 0.0
      %621 = vmatmul.mubr.f32.gmra.mrb[0].mxu0 %v222
      %v622 = vpop.f32.mrb[0].mxu0
      %v623 = vadd.f32 %v398, %v622
      %v624 = vpop.f32.mrb[0].mxu0
      %625 = vmatprep.mubr.f32.mxu0 0.0
      %626 = vmatmul.mubr.f32.gmra.mrb[0].mxu0 %v223
      %v627 = vpop.f32.mrb[0].mxu0
      %v628 = vadd.f32 %v403, %v627
      %v629 = vpop.f32.mrb[0].mxu0
      %630 = vmatprep.mubr.f32.mxu0 0.0
      %631 = vmatmul.mubr.f32.gmra.mrb[0].mxu0 %v224
      %v632 = vpop.f32.mrb[0].mxu0
      %v633 = vadd.f32 %v408, %v632
      %v634 = vpop.f32.mrb[0].mxu0
      %635 = vmatprep.mubr.f32.mxu0 0.0
      %636 = vmatmul.mubr.f32.gmra.mrb[0].mxu0 %v225
      %v637 = vpop.f32.mrb[0].mxu0
      %v638 = vadd.f32 %v413, %v637
      %v639 = vpop.f32.mrb[0].mxu0
      %640 = vmatprep.mubr.f32.mxu0 0.0
      %641 = vmatmul.mubr.f32.gmra.mrb[0].mxu0 %v226
      %v642 = vpop.f32.mrb[0].mxu0
      %v643 = vadd.f32 %v418, %v642
      %v644 = vpop.f32.mrb[0].mxu0
      %645 = vmatprep.mubr.f32.mxu0 0.0
      %646 = vmatmul.mubr.f32.gmra.mrb[0].mxu0 %v227
      %v647 = vpop.f32.mrb[0].mxu0
      %v648 = vadd.f32 %v423, %v647
      %v649 = vpop.f32.mrb[0].mxu0
      %650 = vmatprep.mubr.f32.mxu0 0.0
      %651 = vmatmul.mubr.f32.gmra.mrb[0].mxu0 %v228
      %v652 = vpop.f32.mrb[0].mxu0
      %v653 = vadd.f32 %v428, %v652
      %v654 = vpop.f32.mrb[0].mxu0
      %655 = vmatprep.mubr.f32.mxu0 0.0
      %656 = vmatmul.mubr.f32.gmra.mrb[0].mxu0 %v229
      %v657 = vpop.f32.mrb[0].mxu0
      %v658 = vadd.f32 %v433, %v657
      %v659 = vpop.f32.mrb[0].mxu0
      %660 = vmatprep.mubr.f32.mxu0 0.0
      %661 = vmatmul.mubr.f32.gmra.mrb[0].mxu0 %v230
      %v662 = vpop.f32.mrb[0].mxu0
      %v663 = vadd.f32 %v438, %v662
      %v664 = vpop.f32.mrb[0].mxu0
      %665 = vmatprep.mubr.f32.mxu0 0.0
      %666 = vmatmul.mubr.f32.gmra.mrb[0].mxu0 %v231
      %v667 = vpop.f32.mrb[0].mxu0
      %v668 = vadd.f32 %v443, %v667
      %v669 = vpop.f32.mrb[0].mxu0
      %670 = vmatprep.mubr.f32.mxu0 0.0
      %671 = vmatmul.mubr.f32.gmra.mrb[0].mxu0 %v232
      %v672 = vpop.f32.mrb[0].mxu0
      %v673 = vadd.f32 %v448, %v672
      %v674 = vpop.f32.mrb[0].mxu0
      %675 = vmatprep.mubr.f32.mxu0 0.0
      %676 = vmatmul.mubr.f32.gmra.mrb[0].mxu0 %v233
      %v677 = vpop.f32.mrb[0].mxu0
      %v678 = vadd.f32 %v453, %v677
      %v679 = vpop.f32.mrb[0].mxu0
      %680 = vmatprep.mubr.f32.mxu0 0.0
      %681 = vmatmul.mubr.f32.gmra.mrb[0].mxu0 %v234
      %v682 = vpop.f32.mrb[0].mxu0
      %v683 = vadd.f32 %v458, %v682
      %v684 = vpop.f32.mrb[0].mxu0
      %685 = vmatprep.mubr.f32.mxu0 0.0
      %686 = vmatmul.mubr.f32.gmra.mrb[0].mxu0 %v235
      %v687 = vpop.f32.mrb[0].mxu0
      %v688 = vadd.f32 %v463, %v687
      %v689 = vpop.f32.mrb[0].mxu0
      %690 = vmatprep.mubr.f32.mxu0 0.0
      %691 = vmatmul.mubr.f32.gmra.mrb[0].mxu0 %v236
      %v692 = vpop.f32.mrb[0].mxu0
      %v693 = vadd.f32 %v468, %v692
      %v694 = vpop.f32.mrb[0].mxu0
      %695 = vmatprep.mubr.f32.mxu0 0.0
      %696 = vmatmul.mubr.f32.gmra.mrb[0].mxu0 %v237
      %v697 = vpop.f32.mrb[0].mxu0
      %v698 = vadd.f32 %v473, %v697
      %v699 = vpop.f32.mrb[0].mxu0
      %700 = vmatprep.mubr.f32.mxu0 0.0
      %701 = vmatmul.mubr.f32.gmra.mrb[0].mxu0 %v238
      %v702 = vpop.f32.mrb[0].mxu0
      %v703 = vadd.f32 %v478, %v702
      %v704 = vpop.f32.mrb[0].mxu0
      %705 = vmatprep.mubr.f32.mxu0 0.0
      %706 = vmatmul.mubr.f32.gmra.mrb[0].mxu0 %v239
      %v707 = vpop.f32.mrb[0].mxu0
      %v708 = vadd.f32 %v483, %v707
      %v709 = vpop.f32.mrb[0].mxu0
      %710 = vmatprep.mubr.f32.mxu0 0.0
      %711 = vmatmul.mubr.f32.gmra.mrb[0].mxu0 %v240
      %v712 = vpop.f32.mrb[0].mxu0
      %v713 = vadd.f32 %v488, %v712
      %v714 = vpop.f32.mrb[0].mxu0
      %715 = vmatprep.mubr.f32.mxu0 0.0
      %716 = vmatmul.mubr.f32.gmra.mrb[0].mxu0 %v241
      %v717 = vpop.f32.mrb[0].mxu0
      %v718 = vadd.f32 %v493, %v717
      %v719 = vpop.f32.mrb[0].mxu0
      %720 = vmatprep.mubr.f32.mxu0 0.0
      %721 = vmatmul.mubr.f32.gmra.mrb[0].mxu0 %v242
      %v722 = vpop.f32.mrb[0].mxu0
      %v723 = vadd.f32 %v498, %v722
      %v724 = vpop.f32.mrb[0].mxu0
      %725 = vmatprep.mubr.f32.mxu0 0.0
      %726 = vmatmul.mubr.f32.gmra.mrb[0].mxu0 %v243
      %v727 = vpop.f32.mrb[0].mxu0
      %v728 = vadd.f32 %v503, %v727
      %v729 = vpop.f32.mrb[0].mxu0
      %730 = vmatprep.mubr.f32.mxu0 0.0
      %731 = vmatmul.mubr.f32.gmra.mrb[0].mxu0 %v244
      %v732 = vpop.f32.mrb[0].mxu0
      %v733 = vadd.f32 %v508, %v732
      %v734 = vpop.f32.mrb[0].mxu0
      %735 = vmatprep.mubr.f32.mxu0 0.0
      %736 = vmatmul.mubr.f32.gmra.mrb[0].mxu0 %v245
      %v737 = vpop.f32.mrb[0].mxu0
      %v738 = vadd.f32 %v513, %v737
      %v739 = vpop.f32.mrb[0].mxu0
      %740 = vmatprep.mubr.f32.mxu0 0.0
      %741 = vmatmul.mubr.f32.gmra.mrb[0].mxu0 %v246
      %v742 = vpop.f32.mrb[0].mxu0
      %v743 = vadd.f32 %v518, %v742
      %v744 = vpop.f32.mrb[0].mxu0
      %745 = vmatprep.mubr.f32.mxu0 0.0
      %746 = vmatmul.mubr.f32.gmra.mrb[0].mxu0 %v247
      %v747 = vpop.f32.mrb[0].mxu0
      %v748 = vadd.f32 %v523, %v747
      %v749 = vpop.f32.mrb[0].mxu0
      %750 = vmatprep.mubr.f32.mxu0 0.0
      %751 = vmatmul.mubr.f32.gmra.mrb[0].mxu0 %v248
      %v752 = vpop.f32.mrb[0].mxu0
      %v753 = vadd.f32 %v528, %v752
      %v754 = vpop.f32.mrb[0].mxu0
      %755 = vmatprep.mubr.f32.mxu0 0.0
      %756 = vmatmul.mubr.f32.gmra.mrb[0].mxu0 %v249
      %v757 = vpop.f32.mrb[0].mxu0
      %v758 = vadd.f32 %v533, %v757
      %v759 = vpop.f32.mrb[0].mxu0
      %760 = vmatprep.mubr.f32.mxu0 0.0
      %761 = vmatmul.mubr.f32.gmra.mrb[0].mxu0 %v250
      %v762 = vpop.f32.mrb[0].mxu0
      %v763 = vadd.f32 %v538, %v762
      %v764 = vpop.f32.mrb[0].mxu0
      %765 = vdwg.mxu0
      %v766 = vld [vmem:[%s205 + $0x2] sm:$0xff]
      %v767 = vld [vmem:[%s205 + $0xa] sm:$0xff]
      %v768 = vld [vmem:[%s205 + $0x1a] sm:$0xff]
      %v769 = vld [vmem:[%s205 + $0x22] sm:$0xff]
      %v770 = vld [vmem:[%s205 + $0x32] sm:$0xff]
      %v771 = vld [vmem:[%s205 + $0x3a] sm:$0xff]
      %v772 = vld [vmem:[%s205 + $0x4a] sm:$0xff]
      %v773 = vld [vmem:[%s205 + $0x52] sm:$0xff]
      %v774 = vld [vmem:[%s205 + $0x62] sm:$0xff]
      %v775 = vld [vmem:[%s205 + $0x6a] sm:$0xff]
      %v776 = vld [vmem:[%s205 + $0x7a] sm:$0xff]
      %v777 = vld [vmem:[%s205 + $0x82] sm:$0xff]
      %v778 = vld [vmem:[%s205 + $0x92] sm:$0xff]
      %v779 = vld [vmem:[%s205 + $0x9a] sm:$0xff]
      %v780 = vld [vmem:[%s205 + $0xaa] sm:$0xff]
      %v781 = vld [vmem:[%s205 + $0xb2] sm:$0xff]
      %v782 = vld [vmem:[%s205 + $0xc2] sm:$0xff]
      %v783 = vld [vmem:[%s205 + $0xca] sm:$0xff]
      %v784 = vld [vmem:[%s205 + $0xda] sm:$0xff]
      %v785 = vld [vmem:[%s205 + $0xe2] sm:$0xff]
      %v786 = vld [vmem:[%s205 + $0xf2] sm:$0xff]
      %v787 = vld [vmem:[%s205 + $0xfa] sm:$0xff]
      %v788 = vld [vmem:[%s205 + $0x10a] sm:$0xff]
      %v789 = vld [vmem:[%s205 + $0x112] sm:$0xff]
      %v790 = vld [vmem:[%s205 + $0x122] sm:$0xff]
      %v791 = vld [vmem:[%s205 + $0x12a] sm:$0xff]
      %v792 = vld [vmem:[%s205 + $0x13a] sm:$0xff]
      %v793 = vld [vmem:[%s205 + $0x142] sm:$0xff]
      %v794 = vld [vmem:[%s205 + $0x152] sm:$0xff]
      %v795 = vld [vmem:[%s205 + $0x15a] sm:$0xff]
      %v796 = vld [vmem:[%s205 + $0x16a] sm:$0xff]
      %v797 = vld [vmem:[%s205 + $0x172] sm:$0xff]
      %s798 = scalar_lea.vmem %s1, 256
      %v799 = vld [vmem:[%s798] sm:$0xff]
      %v800 = vld [vmem:[%s798 + $0x8] sm:$0xff]
      %v801 = vld [vmem:[%s798 + $0x10] sm:$0xff]
      %v802 = vld [vmem:[%s798 + $0x18] sm:$0xff]
      %v803 = vld [vmem:[%s798 + $0x20] sm:$0xff]
      %v804 = vld [vmem:[%s798 + $0x28] sm:$0xff]
      %v805 = vld [vmem:[%s798 + $0x30] sm:$0xff]
      %v806 = vld [vmem:[%s798 + $0x38] sm:$0xff]
      %v807 = vld [vmem:[%s798 + $0x40] sm:$0xff]
      %v808 = vld [vmem:[%s798 + $0x48] sm:$0xff]
      %v809 = vld [vmem:[%s798 + $0x50] sm:$0xff]
      %v810 = vld [vmem:[%s798 + $0x58] sm:$0xff]
      %v811 = vld [vmem:[%s798 + $0x60] sm:$0xff]
      %v812 = vld [vmem:[%s798 + $0x68] sm:$0xff]
      %v813 = vld [vmem:[%s798 + $0x70] sm:$0xff]
      %v814 = vld [vmem:[%s798 + $0x78] sm:$0xff]
      %815 = vmatprep.subr.mxu0 0.0
      %816 = vmatpush1.msra.mxu0 %v799
      %817 = vmatprep.subr.mxu0 0.0
      %818 = vmatpush1.msra.mxu0 %v800
      %819 = vmatprep.subr.mxu0 0.0
      %820 = vmatpush1.msra.mxu0 %v801
      %821 = vmatprep.subr.mxu0 0.0
      %822 = vmatpush1.msra.mxu0 %v802
      %823 = vmatprep.subr.mxu0 0.0
      %824 = vmatpush1.msra.mxu0 %v803
      %825 = vmatprep.subr.mxu0 0.0
      %826 = vmatpush1.msra.mxu0 %v804
      %827 = vmatprep.subr.mxu0 0.0
      %828 = vmatpush1.msra.mxu0 %v805
      %829 = vmatprep.subr.mxu0 0.0
      %830 = vmatpush1.msra.mxu0 %v806
      %831 = vmatprep.subr.mxu0 0.0
      %832 = vmatpush1.msra.mxu0 %v807
      %833 = vmatprep.subr.mxu0 0.0
      %834 = vmatpush1.msra.mxu0 %v808
      %835 = vmatprep.subr.mxu0 0.0
      %836 = vmatpush1.msra.mxu0 %v809
      %837 = vmatprep.subr.mxu0 0.0
      %838 = vmatpush1.msra.mxu0 %v810
      %839 = vmatprep.subr.mxu0 0.0
      %840 = vmatpush1.msra.mxu0 %v811
      %841 = vmatprep.subr.mxu0 0.0
      %842 = vmatpush1.msra.mxu0 %v812
      %843 = vmatprep.subr.mxu0 0.0
      %844 = vmatpush1.msra.mxu0 %v813
      %845 = vmatprep.subr.mxu0 0.0
      %846 = vmatpush1.msra.mxu0 %v814
      %847 = vmatprep.subr.mxu0 0.0
      %848 = vmatpush1.msra.mxu0 0.0
      %849 = vmatprep.subr.mxu0 0.0
      %850 = vmatpush1.msra.mxu0 0.0
      %851 = vmatprep.subr.mxu0 0.0
      %852 = vmatpush1.msra.mxu0 0.0
      %853 = vmatprep.subr.mxu0 0.0
      %854 = vmatpush1.msra.mxu0 0.0
      %855 = vmatprep.subr.mxu0 0.0
      %856 = vmatpush1.msra.mxu0 0.0
      %857 = vmatprep.subr.mxu0 0.0
      %858 = vmatpush1.msra.mxu0 0.0
      %859 = vmatprep.subr.mxu0 0.0
      %860 = vmatpush1.msra.mxu0 0.0
      %861 = vmatprep.subr.mxu0 0.0
      %862 = vmatpush1.msra.mxu0 0.0
      %863 = vmatprep.subr.mxu0 0.0
      %864 = vmatpush1.msra.mxu0 0.0
      %865 = vmatprep.subr.mxu0 0.0
      %866 = vmatpush1.msra.mxu0 0.0
      %867 = vmatprep.subr.mxu0 0.0
      %868 = vmatpush1.msra.mxu0 0.0
      %869 = vmatprep.subr.mxu0 0.0
      %870 = vmatpush1.msra.mxu0 0.0
      %871 = vmatprep.subr.mxu0 0.0
      %872 = vmatpush1.msra.mxu0 0.0
      %873 = vmatprep.subr.mxu0 0.0
      %874 = vmatpush1.msra.mxu0 0.0
      %875 = vmatprep.subr.mxu0 0.0
      %876 = vmatpush1.msra.mxu0 0.0
      %877 = vmatprep.subr.mxu0 0.0
      %878 = vmatpush1.msra.mxu0 0.0
      %879 = vmatprep.mubr.f32.mxu0 0.0
      %880 = vmatmul.mubr.f32.gmra.mrb[0].mxu0 %v766
      %v881 = vpop.f32.mrb[0].mxu0
      %v882 = vadd.f32 0.0, %v881
      %v883 = vpop.f32.mrb[0].mxu0
      %884 = vmatprep.mubr.f32.mxu0 0.0
      %885 = vmatmul.mubr.f32.gmra.mrb[0].mxu0 %v767
      %v886 = vpop.f32.mrb[0].mxu0
      %v887 = vadd.f32 0.0, %v886
      %v888 = vpop.f32.mrb[0].mxu0
      %889 = vmatprep.mubr.f32.mxu0 0.0
      %890 = vmatmul.mubr.f32.gmra.mrb[0].mxu0 %v768
      %v891 = vpop.f32.mrb[0].mxu0
      %v892 = vadd.f32 0.0, %v891
      %v893 = vpop.f32.mrb[0].mxu0
      %894 = vmatprep.mubr.f32.mxu0 0.0
      %895 = vmatmul.mubr.f32.gmra.mrb[0].mxu0 %v769
      %v896 = vpop.f32.mrb[0].mxu0
      %v897 = vadd.f32 0.0, %v896
      %v898 = vpop.f32.mrb[0].mxu0
      %899 = vmatprep.mubr.f32.mxu0 0.0
      %900 = vmatmul.mubr.f32.gmra.mrb[0].mxu0 %v770
      %v901 = vpop.f32.mrb[0].mxu0
      %v902 = vadd.f32 0.0, %v901
      %v903 = vpop.f32.mrb[0].mxu0
      %904 = vmatprep.mubr.f32.mxu0 0.0
      %905 = vmatmul.mubr.f32.gmra.mrb[0].mxu0 %v771
      %v906 = vpop.f32.mrb[0].mxu0
      %v907 = vadd.f32 0.0, %v906
      %v908 = vpop.f32.mrb[0].mxu0
      %909 = vmatprep.mubr.f32.mxu0 0.0
      %910 = vmatmul.mubr.f32.gmra.mrb[0].mxu0 %v772
      %v911 = vpop.f32.mrb[0].mxu0
      %v912 = vadd.f32 0.0, %v911
      %v913 = vpop.f32.mrb[0].mxu0
      %914 = vmatprep.mubr.f32.mxu0 0.0
      %915 = vmatmul.mubr.f32.gmra.mrb[0].mxu0 %v773
      %v916 = vpop.f32.mrb[0].mxu0
      %v917 = vadd.f32 0.0, %v916
      %v918 = vpop.f32.mrb[0].mxu0
      %919 = vmatprep.mubr.f32.mxu0 0.0
      %920 = vmatmul.mubr.f32.gmra.mrb[0].mxu0 %v774
      %v921 = vpop.f32.mrb[0].mxu0
      %v922 = vadd.f32 0.0, %v921
      %v923 = vpop.f32.mrb[0].mxu0
      %924 = vmatprep.mubr.f32.mxu0 0.0
      %925 = vmatmul.mubr.f32.gmra.mrb[0].mxu0 %v775
      %v926 = vpop.f32.mrb[0].mxu0
      %v927 = vadd.f32 0.0, %v926
      %v928 = vpop.f32.mrb[0].mxu0
      %929 = vmatprep.mubr.f32.mxu0 0.0
      %930 = vmatmul.mubr.f32.gmra.mrb[0].mxu0 %v776
      %v931 = vpop.f32.mrb[0].mxu0
      %v932 = vadd.f32 0.0, %v931
      %v933 = vpop.f32.mrb[0].mxu0
      %934 = vmatprep.mubr.f32.mxu0 0.0
      %935 = vmatmul.mubr.f32.gmra.mrb[0].mxu0 %v777
      %v936 = vpop.f32.mrb[0].mxu0
      %v937 = vadd.f32 0.0, %v936
      %v938 = vpop.f32.mrb[0].mxu0
      %939 = vmatprep.mubr.f32.mxu0 0.0
      %940 = vmatmul.mubr.f32.gmra.mrb[0].mxu0 %v778
      %v941 = vpop.f32.mrb[0].mxu0
      %v942 = vadd.f32 0.0, %v941
      %v943 = vpop.f32.mrb[0].mxu0
      %944 = vmatprep.mubr.f32.mxu0 0.0
      %945 = vmatmul.mubr.f32.gmra.mrb[0].mxu0 %v779
      %v946 = vpop.f32.mrb[0].mxu0
      %v947 = vadd.f32 0.0, %v946
      %v948 = vpop.f32.mrb[0].mxu0
      %949 = vmatprep.mubr.f32.mxu0 0.0
      %950 = vmatmul.mubr.f32.gmra.mrb[0].mxu0 %v780
      %v951 = vpop.f32.mrb[0].mxu0
      %v952 = vadd.f32 0.0, %v951
      %v953 = vpop.f32.mrb[0].mxu0
      %954 = vmatprep.mubr.f32.mxu0 0.0
      %955 = vmatmul.mubr.f32.gmra.mrb[0].mxu0 %v781
      %v956 = vpop.f32.mrb[0].mxu0
      %v957 = vadd.f32 0.0, %v956
      %v958 = vpop.f32.mrb[0].mxu0
      %959 = vmatprep.mubr.f32.mxu0 0.0
      %960 = vmatmul.mubr.f32.gmra.mrb[0].mxu0 %v782
      %v961 = vpop.f32.mrb[0].mxu0
      %v962 = vadd.f32 0.0, %v961
      %v963 = vpop.f32.mrb[0].mxu0
      %964 = vmatprep.mubr.f32.mxu0 0.0
      %965 = vmatmul.mubr.f32.gmra.mrb[0].mxu0 %v783
      %v966 = vpop.f32.mrb[0].mxu0
      %v967 = vadd.f32 0.0, %v966
      %v968 = vpop.f32.mrb[0].mxu0
      %969 = vmatprep.mubr.f32.mxu0 0.0
      %970 = vmatmul.mubr.f32.gmra.mrb[0].mxu0 %v784
      %v971 = vpop.f32.mrb[0].mxu0
      %v972 = vadd.f32 0.0, %v971
      %v973 = vpop.f32.mrb[0].mxu0
      %974 = vmatprep.mubr.f32.mxu0 0.0
      %975 = vmatmul.mubr.f32.gmra.mrb[0].mxu0 %v785
      %v976 = vpop.f32.mrb[0].mxu0
      %v977 = vadd.f32 0.0, %v976
      %v978 = vpop.f32.mrb[0].mxu0
      %979 = vmatprep.mubr.f32.mxu0 0.0
      %980 = vmatmul.mubr.f32.gmra.mrb[0].mxu0 %v786
      %v981 = vpop.f32.mrb[0].mxu0
      %v982 = vadd.f32 0.0, %v981
      %v983 = vpop.f32.mrb[0].mxu0
      %984 = vmatprep.mubr.f32.mxu0 0.0
      %985 = vmatmul.mubr.f32.gmra.mrb[0].mxu0 %v787
      %v986 = vpop.f32.mrb[0].mxu0
      %v987 = vadd.f32 0.0, %v986
      %v988 = vpop.f32.mrb[0].mxu0
      %989 = vmatprep.mubr.f32.mxu0 0.0
      %990 = vmatmul.mubr.f32.gmra.mrb[0].mxu0 %v788
      %v991 = vpop.f32.mrb[0].mxu0
      %v992 = vadd.f32 0.0, %v991
      %v993 = vpop.f32.mrb[0].mxu0
      %994 = vmatprep.mubr.f32.mxu0 0.0
      %995 = vmatmul.mubr.f32.gmra.mrb[0].mxu0 %v789
      %v996 = vpop.f32.mrb[0].mxu0
      %v997 = vadd.f32 0.0, %v996
      %v998 = vpop.f32.mrb[0].mxu0
      %999 = vmatprep.mubr.f32.mxu0 0.0
      %1000 = vmatmul.mubr.f32.gmra.mrb[0].mxu0 %v790
      %v1001 = vpop.f32.mrb[0].mxu0
      %v1002 = vadd.f32 0.0, %v1001
      %v1003 = vpop.f32.mrb[0].mxu0
      %1004 = vmatprep.mubr.f32.mxu0 0.0
      %1005 = vmatmul.mubr.f32.gmra.mrb[0].mxu0 %v791
      %v1006 = vpop.f32.mrb[0].mxu0
      %v1007 = vadd.f32 0.0, %v1006
      %v1008 = vpop.f32.mrb[0].mxu0
      %1009 = vmatprep.mubr.f32.mxu0 0.0
      %1010 = vmatmul.mubr.f32.gmra.mrb[0].mxu0 %v792
      %v1011 = vpop.f32.mrb[0].mxu0
      %v1012 = vadd.f32 0.0, %v1011
      %v1013 = vpop.f32.mrb[0].mxu0
      %1014 = vmatprep.mubr.f32.mxu0 0.0
      %1015 = vmatmul.mubr.f32.gmra.mrb[0].mxu0 %v793
      %v1016 = vpop.f32.mrb[0].mxu0
      %v1017 = vadd.f32 0.0, %v1016
      %v1018 = vpop.f32.mrb[0].mxu0
      %1019 = vmatprep.mubr.f32.mxu0 0.0
      %1020 = vmatmul.mubr.f32.gmra.mrb[0].mxu0 %v794
      %v1021 = vpop.f32.mrb[0].mxu0
      %v1022 = vadd.f32 0.0, %v1021
      %v1023 = vpop.f32.mrb[0].mxu0
      %1024 = vmatprep.mubr.f32.mxu0 0.0
      %1025 = vmatmul.mubr.f32.gmra.mrb[0].mxu0 %v795
      %v1026 = vpop.f32.mrb[0].mxu0
      %v1027 = vadd.f32 0.0, %v1026
      %v1028 = vpop.f32.mrb[0].mxu0
      %1029 = vmatprep.mubr.f32.mxu0 0.0
      %1030 = vmatmul.mubr.f32.gmra.mrb[0].mxu0 %v796
      %v1031 = vpop.f32.mrb[0].mxu0
      %v1032 = vadd.f32 0.0, %v1031
      %v1033 = vpop.f32.mrb[0].mxu0
      %1034 = vmatprep.mubr.f32.mxu0 0.0
      %1035 = vmatmul.mubr.f32.gmra.mrb[0].mxu0 %v797
      %v1036 = vpop.f32.mrb[0].mxu0
      %v1037 = vadd.f32 0.0, %v1036
      %v1038 = vpop.f32.mrb[0].mxu0
      %1039 = vdwg.mxu0
      %v1040 = vadd.f32 %v608, %v882
      %v1041 = vadd.f32 %v613, %v887
      %v1042 = vadd.f32 %v618, %v892
      %v1043 = vadd.f32 %v623, %v897
      %v1044 = vadd.f32 %v628, %v902
      %v1045 = vadd.f32 %v633, %v907
      %v1046 = vadd.f32 %v638, %v912
      %v1047 = vadd.f32 %v643, %v917
      %v1048 = vadd.f32 %v648, %v922
      %v1049 = vadd.f32 %v653, %v927
      %v1050 = vadd.f32 %v658, %v932
      %v1051 = vadd.f32 %v663, %v937
      %v1052 = vadd.f32 %v668, %v942
      %v1053 = vadd.f32 %v673, %v947
      %v1054 = vadd.f32 %v678, %v952
      %v1055 = vadd.f32 %v683, %v957
      %v1056 = vadd.f32 %v688, %v962
      %v1057 = vadd.f32 %v693, %v967
      %v1058 = vadd.f32 %v698, %v972
      %v1059 = vadd.f32 %v703, %v977
      %v1060 = vadd.f32 %v708, %v982
      %v1061 = vadd.f32 %v713, %v987
      %v1062 = vadd.f32 %v718, %v992
      %v1063 = vadd.f32 %v723, %v997
      %v1064 = vadd.f32 %v728, %v1002
      %v1065 = vadd.f32 %v733, %v1007
      %v1066 = vadd.f32 %v738, %v1012
      %v1067 = vadd.f32 %v743, %v1017
      %v1068 = vadd.f32 %v748, %v1022
      %v1069 = vadd.f32 %v753, %v1027
      %v1070 = vadd.f32 %v758, %v1032
      %v1071 = vadd.f32 %v763, %v1037
      %s1072 = scalar_lea.vmem %s205, 24
      %v1073 = vld [vmem:[%s1072] sm:$0xff]
      %v1074 = vld [vmem:[%s1072 + $0x8] sm:$0xff]
      %v1075 = vld [vmem:[%s1072 + $0x18] sm:$0xff]
      %v1076 = vld [vmem:[%s1072 + $0x20] sm:$0xff]
      %v1077 = vld [vmem:[%s1072 + $0x30] sm:$0xff]
      %v1078 = vld [vmem:[%s1072 + $0x38] sm:$0xff]
      %v1079 = vld [vmem:[%s1072 + $0x48] sm:$0xff]
      %v1080 = vld [vmem:[%s1072 + $0x50] sm:$0xff]
      %v1081 = vld [vmem:[%s1072 + $0x60] sm:$0xff]
      %v1082 = vld [vmem:[%s1072 + $0x68] sm:$0xff]
      %v1083 = vld [vmem:[%s1072 + $0x78] sm:$0xff]
      %v1084 = vld [vmem:[%s1072 + $0x80] sm:$0xff]
      %v1085 = vld [vmem:[%s1072 + $0x90] sm:$0xff]
      %v1086 = vld [vmem:[%s1072 + $0x98] sm:$0xff]
      %v1087 = vld [vmem:[%s1072 + $0xa8] sm:$0xff]
      %v1088 = vld [vmem:[%s1072 + $0xb0] sm:$0xff]
      %v1089 = vld [vmem:[%s1072 + $0xc0] sm:$0xff]
      %v1090 = vld [vmem:[%s1072 + $0xc8] sm:$0xff]
      %v1091 = vld [vmem:[%s1072 + $0xd8] sm:$0xff]
      %v1092 = vld [vmem:[%s1072 + $0xe0] sm:$0xff]
      %v1093 = vld [vmem:[%s1072 + $0xf0] sm:$0xff]
      %v1094 = vld [vmem:[%s1072 + $0xf8] sm:$0xff]
      %v1095 = vld [vmem:[%s1072 + $0x108] sm:$0xff]
      %v1096 = vld [vmem:[%s1072 + $0x110] sm:$0xff]
      %v1097 = vld [vmem:[%s1072 + $0x120] sm:$0xff]
      %v1098 = vld [vmem:[%s1072 + $0x128] sm:$0xff]
      %v1099 = vld [vmem:[%s1072 + $0x138] sm:$0xff]
      %v1100 = vld [vmem:[%s1072 + $0x140] sm:$0xff]
      %v1101 = vld [vmem:[%s1072 + $0x150] sm:$0xff]
      %v1102 = vld [vmem:[%s1072 + $0x158] sm:$0xff]
      %v1103 = vld [vmem:[%s1072 + $0x168] sm:$0xff]
      %v1104 = vld [vmem:[%s1072 + $0x170] sm:$0xff]
      %s1105 = scalar_lea.vmem %s1, 384
      %v1106 = vld [vmem:[%s1105] sm:$0xff]
      %v1107 = vld [vmem:[%s1105 + $0x8] sm:$0xff]
      %v1108 = vld [vmem:[%s1105 + $0x10] sm:$0xff]
      %v1109 = vld [vmem:[%s1105 + $0x18] sm:$0xff]
      %v1110 = vld [vmem:[%s1105 + $0x20] sm:$0xff]
      %v1111 = vld [vmem:[%s1105 + $0x28] sm:$0xff]
      %v1112 = vld [vmem:[%s1105 + $0x30] sm:$0xff]
      %v1113 = vld [vmem:[%s1105 + $0x38] sm:$0xff]
      %v1114 = vld [vmem:[%s1105 + $0x40] sm:$0xff]
      %v1115 = vld [vmem:[%s1105 + $0x48] sm:$0xff]
      %v1116 = vld [vmem:[%s1105 + $0x50] sm:$0xff]
      %v1117 = vld [vmem:[%s1105 + $0x58] sm:$0xff]
      %v1118 = vld [vmem:[%s1105 + $0x60] sm:$0xff]
      %v1119 = vld [vmem:[%s1105 + $0x68] sm:$0xff]
      %v1120 = vld [vmem:[%s1105 + $0x70] sm:$0xff]
      %v1121 = vld [vmem:[%s1105 + $0x78] sm:$0xff]
      %1122 = vmatprep.subr.mxu0 0.0
      %1123 = vmatpush1.msra.mxu0 %v1106
      %1124 = vmatprep.subr.mxu0 0.0
      %1125 = vmatpush1.msra.mxu0 %v1107
      %1126 = vmatprep.subr.mxu0 0.0
      %1127 = vmatpush1.msra.mxu0 %v1108
      %1128 = vmatprep.subr.mxu0 0.0
      %1129 = vmatpush1.msra.mxu0 %v1109
      %1130 = vmatprep.subr.mxu0 0.0
      %1131 = vmatpush1.msra.mxu0 %v1110
      %1132 = vmatprep.subr.mxu0 0.0
      %1133 = vmatpush1.msra.mxu0 %v1111
      %1134 = vmatprep.subr.mxu0 0.0
      %1135 = vmatpush1.msra.mxu0 %v1112
      %1136 = vmatprep.subr.mxu0 0.0
      %1137 = vmatpush1.msra.mxu0 %v1113
      %1138 = vmatprep.subr.mxu0 0.0
      %1139 = vmatpush1.msra.mxu0 %v1114
      %1140 = vmatprep.subr.mxu0 0.0
      %1141 = vmatpush1.msra.mxu0 %v1115
      %1142 = vmatprep.subr.mxu0 0.0
      %1143 = vmatpush1.msra.mxu0 %v1116
      %1144 = vmatprep.subr.mxu0 0.0
      %1145 = vmatpush1.msra.mxu0 %v1117
      %1146 = vmatprep.subr.mxu0 0.0
      %1147 = vmatpush1.msra.mxu0 %v1118
      %1148 = vmatprep.subr.mxu0 0.0
      %1149 = vmatpush1.msra.mxu0 %v1119
      %1150 = vmatprep.subr.mxu0 0.0
      %1151 = vmatpush1.msra.mxu0 %v1120
      %1152 = vmatprep.subr.mxu0 0.0
      %1153 = vmatpush1.msra.mxu0 %v1121
      %1154 = vmatprep.subr.mxu0 0.0
      %1155 = vmatpush1.msra.mxu0 0.0
      %1156 = vmatprep.subr.mxu0 0.0
      %1157 = vmatpush1.msra.mxu0 0.0
      %1158 = vmatprep.subr.mxu0 0.0
      %1159 = vmatpush1.msra.mxu0 0.0
      %1160 = vmatprep.subr.mxu0 0.0
      %1161 = vmatpush1.msra.mxu0 0.0
      %1162 = vmatprep.subr.mxu0 0.0
      %1163 = vmatpush1.msra.mxu0 0.0
      %1164 = vmatprep.subr.mxu0 0.0
      %1165 = vmatpush1.msra.mxu0 0.0
      %1166 = vmatprep.subr.mxu0 0.0
      %1167 = vmatpush1.msra.mxu0 0.0
      %1168 = vmatprep.subr.mxu0 0.0
      %1169 = vmatpush1.msra.mxu0 0.0
      %1170 = vmatprep.subr.mxu0 0.0
      %1171 = vmatpush1.msra.mxu0 0.0
      %1172 = vmatprep.subr.mxu0 0.0
      %1173 = vmatpush1.msra.mxu0 0.0
      %1174 = vmatprep.subr.mxu0 0.0
      %1175 = vmatpush1.msra.mxu0 0.0
      %1176 = vmatprep.subr.mxu0 0.0
      %1177 = vmatpush1.msra.mxu0 0.0
      %1178 = vmatprep.subr.mxu0 0.0
      %1179 = vmatpush1.msra.mxu0 0.0
      %1180 = vmatprep.subr.mxu0 0.0
      %1181 = vmatpush1.msra.mxu0 0.0
      %1182 = vmatprep.subr.mxu0 0.0
      %1183 = vmatpush1.msra.mxu0 0.0
      %1184 = vmatprep.subr.mxu0 0.0
      %1185 = vmatpush1.msra.mxu0 0.0
      %1186 = vmatprep.mubr.f32.mxu0 0.0
      %1187 = vmatmul.mubr.f32.gmra.mrb[0].mxu0 %v1073
      %v1188 = vpop.f32.mrb[0].mxu0
      %v1189 = vadd.f32 0.0, %v1188
      %v1190 = vpop.f32.mrb[0].mxu0
      %1191 = vmatprep.mubr.f32.mxu0 0.0
      %1192 = vmatmul.mubr.f32.gmra.mrb[0].mxu0 %v1074
      %v1193 = vpop.f32.mrb[0].mxu0
      %v1194 = vadd.f32 0.0, %v1193
      %v1195 = vpop.f32.mrb[0].mxu0
      %1196 = vmatprep.mubr.f32.mxu0 0.0
      %1197 = vmatmul.mubr.f32.gmra.mrb[0].mxu0 %v1075
      %v1198 = vpop.f32.mrb[0].mxu0
      %v1199 = vadd.f32 0.0, %v1198
      %v1200 = vpop.f32.mrb[0].mxu0
      %1201 = vmatprep.mubr.f32.mxu0 0.0
      %1202 = vmatmul.mubr.f32.gmra.mrb[0].mxu0 %v1076
      %v1203 = vpop.f32.mrb[0].mxu0
      %v1204 = vadd.f32 0.0, %v1203
      %v1205 = vpop.f32.mrb[0].mxu0
      %1206 = vmatprep.mubr.f32.mxu0 0.0
      %1207 = vmatmul.mubr.f32.gmra.mrb[0].mxu0 %v1077
      %v1208 = vpop.f32.mrb[0].mxu0
      %v1209 = vadd.f32 0.0, %v1208
      %v1210 = vpop.f32.mrb[0].mxu0
      %1211 = vmatprep.mubr.f32.mxu0 0.0
      %1212 = vmatmul.mubr.f32.gmra.mrb[0].mxu0 %v1078
      %v1213 = vpop.f32.mrb[0].mxu0
      %v1214 = vadd.f32 0.0, %v1213
      %v1215 = vpop.f32.mrb[0].mxu0
      %1216 = vmatprep.mubr.f32.mxu0 0.0
      %1217 = vmatmul.mubr.f32.gmra.mrb[0].mxu0 %v1079
      %v1218 = vpop.f32.mrb[0].mxu0
      %v1219 = vadd.f32 0.0, %v1218
      %v1220 = vpop.f32.mrb[0].mxu0
      %1221 = vmatprep.mubr.f32.mxu0 0.0
      %1222 = vmatmul.mubr.f32.gmra.mrb[0].mxu0 %v1080
      %v1223 = vpop.f32.mrb[0].mxu0
      %v1224 = vadd.f32 0.0, %v1223
      %v1225 = vpop.f32.mrb[0].mxu0
      %1226 = vmatprep.mubr.f32.mxu0 0.0
      %1227 = vmatmul.mubr.f32.gmra.mrb[0].mxu0 %v1081
      %v1228 = vpop.f32.mrb[0].mxu0
      %v1229 = vadd.f32 0.0, %v1228
      %v1230 = vpop.f32.mrb[0].mxu0
      %1231 = vmatprep.mubr.f32.mxu0 0.0
      %1232 = vmatmul.mubr.f32.gmra.mrb[0].mxu0 %v1082
      %v1233 = vpop.f32.mrb[0].mxu0
      %v1234 = vadd.f32 0.0, %v1233
      %v1235 = vpop.f32.mrb[0].mxu0
      %1236 = vmatprep.mubr.f32.mxu0 0.0
      %1237 = vmatmul.mubr.f32.gmra.mrb[0].mxu0 %v1083
      %v1238 = vpop.f32.mrb[0].mxu0
      %v1239 = vadd.f32 0.0, %v1238
      %v1240 = vpop.f32.mrb[0].mxu0
      %1241 = vmatprep.mubr.f32.mxu0 0.0
      %1242 = vmatmul.mubr.f32.gmra.mrb[0].mxu0 %v1084
      %v1243 = vpop.f32.mrb[0].mxu0
      %v1244 = vadd.f32 0.0, %v1243
      %v1245 = vpop.f32.mrb[0].mxu0
      %1246 = vmatprep.mubr.f32.mxu0 0.0
      %1247 = vmatmul.mubr.f32.gmra.mrb[0].mxu0 %v1085
      %v1248 = vpop.f32.mrb[0].mxu0
      %v1249 = vadd.f32 0.0, %v1248
      %v1250 = vpop.f32.mrb[0].mxu0
      %1251 = vmatprep.mubr.f32.mxu0 0.0
      %1252 = vmatmul.mubr.f32.gmra.mrb[0].mxu0 %v1086
      %v1253 = vpop.f32.mrb[0].mxu0
      %v1254 = vadd.f32 0.0, %v1253
      %v1255 = vpop.f32.mrb[0].mxu0
      %1256 = vmatprep.mubr.f32.mxu0 0.0
      %1257 = vmatmul.mubr.f32.gmra.mrb[0].mxu0 %v1087
      %v1258 = vpop.f32.mrb[0].mxu0
      %v1259 = vadd.f32 0.0, %v1258
      %v1260 = vpop.f32.mrb[0].mxu0
      %1261 = vmatprep.mubr.f32.mxu0 0.0
      %1262 = vmatmul.mubr.f32.gmra.mrb[0].mxu0 %v1088
      %v1263 = vpop.f32.mrb[0].mxu0
      %v1264 = vadd.f32 0.0, %v1263
      %v1265 = vpop.f32.mrb[0].mxu0
      %1266 = vmatprep.mubr.f32.mxu0 0.0
      %1267 = vmatmul.mubr.f32.gmra.mrb[0].mxu0 %v1089
      %v1268 = vpop.f32.mrb[0].mxu0
      %v1269 = vadd.f32 0.0, %v1268
      %v1270 = vpop.f32.mrb[0].mxu0
      %1271 = vmatprep.mubr.f32.mxu0 0.0
      %1272 = vmatmul.mubr.f32.gmra.mrb[0].mxu0 %v1090
      %v1273 = vpop.f32.mrb[0].mxu0
      %v1274 = vadd.f32 0.0, %v1273
      %v1275 = vpop.f32.mrb[0].mxu0
      %1276 = vmatprep.mubr.f32.mxu0 0.0
      %1277 = vmatmul.mubr.f32.gmra.mrb[0].mxu0 %v1091
      %v1278 = vpop.f32.mrb[0].mxu0
      %v1279 = vadd.f32 0.0, %v1278
      %v1280 = vpop.f32.mrb[0].mxu0
      %1281 = vmatprep.mubr.f32.mxu0 0.0
      %1282 = vmatmul.mubr.f32.gmra.mrb[0].mxu0 %v1092
      %v1283 = vpop.f32.mrb[0].mxu0
      %v1284 = vadd.f32 0.0, %v1283
      %v1285 = vpop.f32.mrb[0].mxu0
      %1286 = vmatprep.mubr.f32.mxu0 0.0
      %1287 = vmatmul.mubr.f32.gmra.mrb[0].mxu0 %v1093
      %v1288 = vpop.f32.mrb[0].mxu0
      %v1289 = vadd.f32 0.0, %v1288
      %v1290 = vpop.f32.mrb[0].mxu0
      %1291 = vmatprep.mubr.f32.mxu0 0.0
      %1292 = vmatmul.mubr.f32.gmra.mrb[0].mxu0 %v1094
      %v1293 = vpop.f32.mrb[0].mxu0
      %v1294 = vadd.f32 0.0, %v1293
      %v1295 = vpop.f32.mrb[0].mxu0
      %1296 = vmatprep.mubr.f32.mxu0 0.0
      %1297 = vmatmul.mubr.f32.gmra.mrb[0].mxu0 %v1095
      %v1298 = vpop.f32.mrb[0].mxu0
      %v1299 = vadd.f32 0.0, %v1298
      %v1300 = vpop.f32.mrb[0].mxu0
      %1301 = vmatprep.mubr.f32.mxu0 0.0
      %1302 = vmatmul.mubr.f32.gmra.mrb[0].mxu0 %v1096
      %v1303 = vpop.f32.mrb[0].mxu0
      %v1304 = vadd.f32 0.0, %v1303
      %v1305 = vpop.f32.mrb[0].mxu0
      %1306 = vmatprep.mubr.f32.mxu0 0.0
      %1307 = vmatmul.mubr.f32.gmra.mrb[0].mxu0 %v1097
      %v1308 = vpop.f32.mrb[0].mxu0
      %v1309 = vadd.f32 0.0, %v1308
      %v1310 = vpop.f32.mrb[0].mxu0
      %1311 = vmatprep.mubr.f32.mxu0 0.0
      %1312 = vmatmul.mubr.f32.gmra.mrb[0].mxu0 %v1098
      %v1313 = vpop.f32.mrb[0].mxu0
      %v1314 = vadd.f32 0.0, %v1313
      %v1315 = vpop.f32.mrb[0].mxu0
      %1316 = vmatprep.mubr.f32.mxu0 0.0
      %1317 = vmatmul.mubr.f32.gmra.mrb[0].mxu0 %v1099
      %v1318 = vpop.f32.mrb[0].mxu0
      %v1319 = vadd.f32 0.0, %v1318
      %v1320 = vpop.f32.mrb[0].mxu0
      %1321 = vmatprep.mubr.f32.mxu0 0.0
      %1322 = vmatmul.mubr.f32.gmra.mrb[0].mxu0 %v1100
      %v1323 = vpop.f32.mrb[0].mxu0
      %v1324 = vadd.f32 0.0, %v1323
      %v1325 = vpop.f32.mrb[0].mxu0
      %1326 = vmatprep.mubr.f32.mxu0 0.0
      %1327 = vmatmul.mubr.f32.gmra.mrb[0].mxu0 %v1101
      %v1328 = vpop.f32.mrb[0].mxu0
      %v1329 = vadd.f32 0.0, %v1328
      %v1330 = vpop.f32.mrb[0].mxu0
      %1331 = vmatprep.mubr.f32.mxu0 0.0
      %1332 = vmatmul.mubr.f32.gmra.mrb[0].mxu0 %v1102
      %v1333 = vpop.f32.mrb[0].mxu0
      %v1334 = vadd.f32 0.0, %v1333
      %v1335 = vpop.f32.mrb[0].mxu0
      %1336 = vmatprep.mubr.f32.mxu0 0.0
      %1337 = vmatmul.mubr.f32.gmra.mrb[0].mxu0 %v1103
      %v1338 = vpop.f32.mrb[0].mxu0
      %v1339 = vadd.f32 0.0, %v1338
      %v1340 = vpop.f32.mrb[0].mxu0
      %1341 = vmatprep.mubr.f32.mxu0 0.0
      %1342 = vmatmul.mubr.f32.gmra.mrb[0].mxu0 %v1104
      %v1343 = vpop.f32.mrb[0].mxu0
      %v1344 = vadd.f32 0.0, %v1343
      %v1345 = vpop.f32.mrb[0].mxu0
      %1346 = vdwg.mxu0
      %v1347 = vadd.f32 %v1040, %v1189
      %v1348 = vadd.f32 %v1041, %v1194
      %v1349 = vadd.f32 %v1042, %v1199
      %v1350 = vadd.f32 %v1043, %v1204
      %v1351 = vadd.f32 %v1044, %v1209
      %v1352 = vadd.f32 %v1045, %v1214
      %v1353 = vadd.f32 %v1046, %v1219
      %v1354 = vadd.f32 %v1047, %v1224
      %v1355 = vadd.f32 %v1048, %v1229
      %v1356 = vadd.f32 %v1049, %v1234
      %v1357 = vadd.f32 %v1050, %v1239
      %v1358 = vadd.f32 %v1051, %v1244
      %v1359 = vadd.f32 %v1052, %v1249
      %v1360 = vadd.f32 %v1053, %v1254
      %v1361 = vadd.f32 %v1054, %v1259
      %v1362 = vadd.f32 %v1055, %v1264
      %v1363 = vadd.f32 %v1056, %v1269
      %v1364 = vadd.f32 %v1057, %v1274
      %v1365 = vadd.f32 %v1058, %v1279
      %v1366 = vadd.f32 %v1059, %v1284
      %v1367 = vadd.f32 %v1060, %v1289
      %v1368 = vadd.f32 %v1061, %v1294
      %v1369 = vadd.f32 %v1062, %v1299
      %v1370 = vadd.f32 %v1063, %v1304
      %v1371 = vadd.f32 %v1064, %v1309
      %v1372 = vadd.f32 %v1065, %v1314
      %v1373 = vadd.f32 %v1066, %v1319
      %v1374 = vadd.f32 %v1067, %v1324
      %v1375 = vadd.f32 %v1068, %v1329
      %v1376 = vadd.f32 %v1069, %v1334
      %v1377 = vadd.f32 %v1070, %v1339
      %v1378 = vadd.f32 %v1071, %v1344
      %v1379 = vld [vmem:[%s1072 + $0x1] sm:$0xff]
      %v1380 = vld [vmem:[%s1072 + $0x9] sm:$0xff]
      %v1381 = vld [vmem:[%s1072 + $0x19] sm:$0xff]
      %v1382 = vld [vmem:[%s1072 + $0x21] sm:$0xff]
      %v1383 = vld [vmem:[%s1072 + $0x31] sm:$0xff]
      %v1384 = vld [vmem:[%s1072 + $0x39] sm:$0xff]
      %v1385 = vld [vmem:[%s1072 + $0x49] sm:$0xff]
      %v1386 = vld [vmem:[%s1072 + $0x51] sm:$0xff]
      %v1387 = vld [vmem:[%s1072 + $0x61] sm:$0xff]
      %v1388 = vld [vmem:[%s1072 + $0x69] sm:$0xff]
      %v1389 = vld [vmem:[%s1072 + $0x79] sm:$0xff]
      %v1390 = vld [vmem:[%s1072 + $0x81] sm:$0xff]
      %v1391 = vld [vmem:[%s1072 + $0x91] sm:$0xff]
      %v1392 = vld [vmem:[%s1072 + $0x99] sm:$0xff]
      %v1393 = vld [vmem:[%s1072 + $0xa9] sm:$0xff]
      %v1394 = vld [vmem:[%s1072 + $0xb1] sm:$0xff]
      %v1395 = vld [vmem:[%s1072 + $0xc1] sm:$0xff]
      %v1396 = vld [vmem:[%s1072 + $0xc9] sm:$0xff]
      %v1397 = vld [vmem:[%s1072 + $0xd9] sm:$0xff]
      %v1398 = vld [vmem:[%s1072 + $0xe1] sm:$0xff]
      %v1399 = vld [vmem:[%s1072 + $0xf1] sm:$0xff]
      %v1400 = vld [vmem:[%s1072 + $0xf9] sm:$0xff]
      %v1401 = vld [vmem:[%s1072 + $0x109] sm:$0xff]
      %v1402 = vld [vmem:[%s1072 + $0x111] sm:$0xff]
      %v1403 = vld [vmem:[%s1072 + $0x121] sm:$0xff]
      %v1404 = vld [vmem:[%s1072 + $0x129] sm:$0xff]
      %v1405 = vld [vmem:[%s1072 + $0x139] sm:$0xff]
      %v1406 = vld [vmem:[%s1072 + $0x141] sm:$0xff]
      %v1407 = vld [vmem:[%s1072 + $0x151] sm:$0xff]
      %v1408 = vld [vmem:[%s1072 + $0x159] sm:$0xff]
      %v1409 = vld [vmem:[%s1072 + $0x169] sm:$0xff]
      %v1410 = vld [vmem:[%s1072 + $0x171] sm:$0xff]
      %s1411 = scalar_lea.vmem %s1, 512
      %v1412 = vld [vmem:[%s1411] sm:$0xff]
      %v1413 = vld [vmem:[%s1411 + $0x8] sm:$0xff]
      %v1414 = vld [vmem:[%s1411 + $0x10] sm:$0xff]
      %v1415 = vld [vmem:[%s1411 + $0x18] sm:$0xff]
      %v1416 = vld [vmem:[%s1411 + $0x20] sm:$0xff]
      %v1417 = vld [vmem:[%s1411 + $0x28] sm:$0xff]
      %v1418 = vld [vmem:[%s1411 + $0x30] sm:$0xff]
      %v1419 = vld [vmem:[%s1411 + $0x38] sm:$0xff]
      %v1420 = vld [vmem:[%s1411 + $0x40] sm:$0xff]
      %v1421 = vld [vmem:[%s1411 + $0x48] sm:$0xff]
      %v1422 = vld [vmem:[%s1411 + $0x50] sm:$0xff]
      %v1423 = vld [vmem:[%s1411 + $0x58] sm:$0xff]
      %v1424 = vld [vmem:[%s1411 + $0x60] sm:$0xff]
      %v1425 = vld [vmem:[%s1411 + $0x68] sm:$0xff]
      %v1426 = vld [vmem:[%s1411 + $0x70] sm:$0xff]
      %v1427 = vld [vmem:[%s1411 + $0x78] sm:$0xff]
      %1428 = vmatprep.subr.mxu0 0.0
      %1429 = vmatpush1.msra.mxu0 %v1412
      %1430 = vmatprep.subr.mxu0 0.0
      %1431 = vmatpush1.msra.mxu0 %v1413
      %1432 = vmatprep.subr.mxu0 0.0
      %1433 = vmatpush1.msra.mxu0 %v1414
      %1434 = vmatprep.subr.mxu0 0.0
      %1435 = vmatpush1.msra.mxu0 %v1415
      %1436 = vmatprep.subr.mxu0 0.0
      %1437 = vmatpush1.msra.mxu0 %v1416
      %1438 = vmatprep.subr.mxu0 0.0
      %1439 = vmatpush1.msra.mxu0 %v1417
      %1440 = vmatprep.subr.mxu0 0.0
      %1441 = vmatpush1.msra.mxu0 %v1418
      %1442 = vmatprep.subr.mxu0 0.0
      %1443 = vmatpush1.msra.mxu0 %v1419
      %1444 = vmatprep.subr.mxu0 0.0
      %1445 = vmatpush1.msra.mxu0 %v1420
      %1446 = vmatprep.subr.mxu0 0.0
      %1447 = vmatpush1.msra.mxu0 %v1421
      %1448 = vmatprep.subr.mxu0 0.0
      %1449 = vmatpush1.msra.mxu0 %v1422
      %1450 = vmatprep.subr.mxu0 0.0
      %1451 = vmatpush1.msra.mxu0 %v1423
      %1452 = vmatprep.subr.mxu0 0.0
      %1453 = vmatpush1.msra.mxu0 %v1424
      %1454 = vmatprep.subr.mxu0 0.0
      %1455 = vmatpush1.msra.mxu0 %v1425
      %1456 = vmatprep.subr.mxu0 0.0
      %1457 = vmatpush1.msra.mxu0 %v1426
      %1458 = vmatprep.subr.mxu0 0.0
      %1459 = vmatpush1.msra.mxu0 %v1427
      %1460 = vmatprep.subr.mxu0 0.0
      %1461 = vmatpush1.msra.mxu0 0.0
      %1462 = vmatprep.subr.mxu0 0.0
      %1463 = vmatpush1.msra.mxu0 0.0
      %1464 = vmatprep.subr.mxu0 0.0
      %1465 = vmatpush1.msra.mxu0 0.0
      %1466 = vmatprep.subr.mxu0 0.0
      %1467 = vmatpush1.msra.mxu0 0.0
      %1468 = vmatprep.subr.mxu0 0.0
      %1469 = vmatpush1.msra.mxu0 0.0
      %1470 = vmatprep.subr.mxu0 0.0
      %1471 = vmatpush1.msra.mxu0 0.0
      %1472 = vmatprep.subr.mxu0 0.0
      %1473 = vmatpush1.msra.mxu0 0.0
      %1474 = vmatprep.subr.mxu0 0.0
      %1475 = vmatpush1.msra.mxu0 0.0
      %1476 = vmatprep.subr.mxu0 0.0
      %1477 = vmatpush1.msra.mxu0 0.0
      %1478 = vmatprep.subr.mxu0 0.0
      %1479 = vmatpush1.msra.mxu0 0.0
      %1480 = vmatprep.subr.mxu0 0.0
      %1481 = vmatpush1.msra.mxu0 0.0
      %1482 = vmatprep.subr.mxu0 0.0
      %1483 = vmatpush1.msra.mxu0 0.0
      %1484 = vmatprep.subr.mxu0 0.0
      %1485 = vmatpush1.msra.mxu0 0.0
      %1486 = vmatprep.subr.mxu0 0.0
      %1487 = vmatpush1.msra.mxu0 0.0
      %1488 = vmatprep.subr.mxu0 0.0
      %1489 = vmatpush1.msra.mxu0 0.0
      %1490 = vmatprep.subr.mxu0 0.0
      %1491 = vmatpush1.msra.mxu0 0.0
      %1492 = vmatprep.mubr.f32.mxu0 0.0
      %1493 = vmatmul.mubr.f32.gmra.mrb[0].mxu0 %v1379
      %v1494 = vpop.f32.mrb[0].mxu0
      %v1495 = vadd.f32 0.0, %v1494
      %v1496 = vpop.f32.mrb[0].mxu0
      %1497 = vmatprep.mubr.f32.mxu0 0.0
      %1498 = vmatmul.mubr.f32.gmra.mrb[0].mxu0 %v1380
      %v1499 = vpop.f32.mrb[0].mxu0
      %v1500 = vadd.f32 0.0, %v1499
      %v1501 = vpop.f32.mrb[0].mxu0
      %1502 = vmatprep.mubr.f32.mxu0 0.0
      %1503 = vmatmul.mubr.f32.gmra.mrb[0].mxu0 %v1381
      %v1504 = vpop.f32.mrb[0].mxu0
      %v1505 = vadd.f32 0.0, %v1504
      %v1506 = vpop.f32.mrb[0].mxu0
      %1507 = vmatprep.mubr.f32.mxu0 0.0
      %1508 = vmatmul.mubr.f32.gmra.mrb[0].mxu0 %v1382
      %v1509 = vpop.f32.mrb[0].mxu0
      %v1510 = vadd.f32 0.0, %v1509
      %v1511 = vpop.f32.mrb[0].mxu0
      %1512 = vmatprep.mubr.f32.mxu0 0.0
      %1513 = vmatmul.mubr.f32.gmra.mrb[0].mxu0 %v1383
      %v1514 = vpop.f32.mrb[0].mxu0
      %v1515 = vadd.f32 0.0, %v1514
      %v1516 = vpop.f32.mrb[0].mxu0
      %1517 = vmatprep.mubr.f32.mxu0 0.0
      %1518 = vmatmul.mubr.f32.gmra.mrb[0].mxu0 %v1384
      %v1519 = vpop.f32.mrb[0].mxu0
      %v1520 = vadd.f32 0.0, %v1519
      %v1521 = vpop.f32.mrb[0].mxu0
      %1522 = vmatprep.mubr.f32.mxu0 0.0
      %1523 = vmatmul.mubr.f32.gmra.mrb[0].mxu0 %v1385
      %v1524 = vpop.f32.mrb[0].mxu0
      %v1525 = vadd.f32 0.0, %v1524
      %v1526 = vpop.f32.mrb[0].mxu0
      %1527 = vmatprep.mubr.f32.mxu0 0.0
      %1528 = vmatmul.mubr.f32.gmra.mrb[0].mxu0 %v1386
      %v1529 = vpop.f32.mrb[0].mxu0
      %v1530 = vadd.f32 0.0, %v1529
      %v1531 = vpop.f32.mrb[0].mxu0
      %1532 = vmatprep.mubr.f32.mxu0 0.0
      %1533 = vmatmul.mubr.f32.gmra.mrb[0].mxu0 %v1387
      %v1534 = vpop.f32.mrb[0].mxu0
      %v1535 = vadd.f32 0.0, %v1534
      %v1536 = vpop.f32.mrb[0].mxu0
      %1537 = vmatprep.mubr.f32.mxu0 0.0
      %1538 = vmatmul.mubr.f32.gmra.mrb[0].mxu0 %v1388
      %v1539 = vpop.f32.mrb[0].mxu0
      %v1540 = vadd.f32 0.0, %v1539
      %v1541 = vpop.f32.mrb[0].mxu0
      %1542 = vmatprep.mubr.f32.mxu0 0.0
      %1543 = vmatmul.mubr.f32.gmra.mrb[0].mxu0 %v1389
      %v1544 = vpop.f32.mrb[0].mxu0
      %v1545 = vadd.f32 0.0, %v1544
      %v1546 = vpop.f32.mrb[0].mxu0
      %1547 = vmatprep.mubr.f32.mxu0 0.0
      %1548 = vmatmul.mubr.f32.gmra.mrb[0].mxu0 %v1390
      %v1549 = vpop.f32.mrb[0].mxu0
      %v1550 = vadd.f32 0.0, %v1549
      %v1551 = vpop.f32.mrb[0].mxu0
      %1552 = vmatprep.mubr.f32.mxu0 0.0
      %1553 = vmatmul.mubr.f32.gmra.mrb[0].mxu0 %v1391
      %v1554 = vpop.f32.mrb[0].mxu0
      %v1555 = vadd.f32 0.0, %v1554
      %v1556 = vpop.f32.mrb[0].mxu0
      %1557 = vmatprep.mubr.f32.mxu0 0.0
      %1558 = vmatmul.mubr.f32.gmra.mrb[0].mxu0 %v1392
      %v1559 = vpop.f32.mrb[0].mxu0
      %v1560 = vadd.f32 0.0, %v1559
      %v1561 = vpop.f32.mrb[0].mxu0
      %1562 = vmatprep.mubr.f32.mxu0 0.0
      %1563 = vmatmul.mubr.f32.gmra.mrb[0].mxu0 %v1393
      %v1564 = vpop.f32.mrb[0].mxu0
      %v1565 = vadd.f32 0.0, %v1564
      %v1566 = vpop.f32.mrb[0].mxu0
      %1567 = vmatprep.mubr.f32.mxu0 0.0
      %1568 = vmatmul.mubr.f32.gmra.mrb[0].mxu0 %v1394
      %v1569 = vpop.f32.mrb[0].mxu0
      %v1570 = vadd.f32 0.0, %v1569
      %v1571 = vpop.f32.mrb[0].mxu0
      %1572 = vmatprep.mubr.f32.mxu0 0.0
      %1573 = vmatmul.mubr.f32.gmra.mrb[0].mxu0 %v1395
      %v1574 = vpop.f32.mrb[0].mxu0
      %v1575 = vadd.f32 0.0, %v1574
      %v1576 = vpop.f32.mrb[0].mxu0
      %1577 = vmatprep.mubr.f32.mxu0 0.0
      %1578 = vmatmul.mubr.f32.gmra.mrb[0].mxu0 %v1396
      %v1579 = vpop.f32.mrb[0].mxu0
      %v1580 = vadd.f32 0.0, %v1579
      %v1581 = vpop.f32.mrb[0].mxu0
      %1582 = vmatprep.mubr.f32.mxu0 0.0
      %1583 = vmatmul.mubr.f32.gmra.mrb[0].mxu0 %v1397
      %v1584 = vpop.f32.mrb[0].mxu0
      %v1585 = vadd.f32 0.0, %v1584
      %v1586 = vpop.f32.mrb[0].mxu0
      %1587 = vmatprep.mubr.f32.mxu0 0.0
      %1588 = vmatmul.mubr.f32.gmra.mrb[0].mxu0 %v1398
      %v1589 = vpop.f32.mrb[0].mxu0
      %v1590 = vadd.f32 0.0, %v1589
      %v1591 = vpop.f32.mrb[0].mxu0
      %1592 = vmatprep.mubr.f32.mxu0 0.0
      %1593 = vmatmul.mubr.f32.gmra.mrb[0].mxu0 %v1399
      %v1594 = vpop.f32.mrb[0].mxu0
      %v1595 = vadd.f32 0.0, %v1594
      %v1596 = vpop.f32.mrb[0].mxu0
      %1597 = vmatprep.mubr.f32.mxu0 0.0
      %1598 = vmatmul.mubr.f32.gmra.mrb[0].mxu0 %v1400
      %v1599 = vpop.f32.mrb[0].mxu0
      %v1600 = vadd.f32 0.0, %v1599
      %v1601 = vpop.f32.mrb[0].mxu0
      %1602 = vmatprep.mubr.f32.mxu0 0.0
      %1603 = vmatmul.mubr.f32.gmra.mrb[0].mxu0 %v1401
      %v1604 = vpop.f32.mrb[0].mxu0
      %v1605 = vadd.f32 0.0, %v1604
      %v1606 = vpop.f32.mrb[0].mxu0
      %1607 = vmatprep.mubr.f32.mxu0 0.0
      %1608 = vmatmul.mubr.f32.gmra.mrb[0].mxu0 %v1402
      %v1609 = vpop.f32.mrb[0].mxu0
      %v1610 = vadd.f32 0.0, %v1609
      %v1611 = vpop.f32.mrb[0].mxu0
      %1612 = vmatprep.mubr.f32.mxu0 0.0
      %1613 = vmatmul.mubr.f32.gmra.mrb[0].mxu0 %v1403
      %v1614 = vpop.f32.mrb[0].mxu0
      %v1615 = vadd.f32 0.0, %v1614
      %v1616 = vpop.f32.mrb[0].mxu0
      %1617 = vmatprep.mubr.f32.mxu0 0.0
      %1618 = vmatmul.mubr.f32.gmra.mrb[0].mxu0 %v1404
      %v1619 = vpop.f32.mrb[0].mxu0
      %v1620 = vadd.f32 0.0, %v1619
      %v1621 = vpop.f32.mrb[0].mxu0
      %1622 = vmatprep.mubr.f32.mxu0 0.0
      %1623 = vmatmul.mubr.f32.gmra.mrb[0].mxu0 %v1405
      %v1624 = vpop.f32.mrb[0].mxu0
      %v1625 = vadd.f32 0.0, %v1624
      %v1626 = vpop.f32.mrb[0].mxu0
      %1627 = vmatprep.mubr.f32.mxu0 0.0
      %1628 = vmatmul.mubr.f32.gmra.mrb[0].mxu0 %v1406
      %v1629 = vpop.f32.mrb[0].mxu0
      %v1630 = vadd.f32 0.0, %v1629
      %v1631 = vpop.f32.mrb[0].mxu0
      %1632 = vmatprep.mubr.f32.mxu0 0.0
      %1633 = vmatmul.mubr.f32.gmra.mrb[0].mxu0 %v1407
      %v1634 = vpop.f32.mrb[0].mxu0
      %v1635 = vadd.f32 0.0, %v1634
      %v1636 = vpop.f32.mrb[0].mxu0
      %1637 = vmatprep.mubr.f32.mxu0 0.0
      %1638 = vmatmul.mubr.f32.gmra.mrb[0].mxu0 %v1408
      %v1639 = vpop.f32.mrb[0].mxu0
      %v1640 = vadd.f32 0.0, %v1639
      %v1641 = vpop.f32.mrb[0].mxu0
      %1642 = vmatprep.mubr.f32.mxu0 0.0
      %1643 = vmatmul.mubr.f32.gmra.mrb[0].mxu0 %v1409
      %v1644 = vpop.f32.mrb[0].mxu0
      %v1645 = vadd.f32 0.0, %v1644
      %v1646 = vpop.f32.mrb[0].mxu0
      %1647 = vmatprep.mubr.f32.mxu0 0.0
      %1648 = vmatmul.mubr.f32.gmra.mrb[0].mxu0 %v1410
      %v1649 = vpop.f32.mrb[0].mxu0
      %v1650 = vadd.f32 0.0, %v1649
      %v1651 = vpop.f32.mrb[0].mxu0
      %1652 = vdwg.mxu0
      %v1653 = vadd.f32 %v1347, %v1495
      %v1654 = vadd.f32 %v1348, %v1500
      %v1655 = vadd.f32 %v1349, %v1505
      %v1656 = vadd.f32 %v1350, %v1510
      %v1657 = vadd.f32 %v1351, %v1515
      %v1658 = vadd.f32 %v1352, %v1520
      %v1659 = vadd.f32 %v1353, %v1525
      %v1660 = vadd.f32 %v1354, %v1530
      %v1661 = vadd.f32 %v1355, %v1535
      %v1662 = vadd.f32 %v1356, %v1540
      %v1663 = vadd.f32 %v1357, %v1545
      %v1664 = vadd.f32 %v1358, %v1550
      %v1665 = vadd.f32 %v1359, %v1555
      %v1666 = vadd.f32 %v1360, %v1560
      %v1667 = vadd.f32 %v1361, %v1565
      %v1668 = vadd.f32 %v1362, %v1570
      %v1669 = vadd.f32 %v1363, %v1575
      %v1670 = vadd.f32 %v1364, %v1580
      %v1671 = vadd.f32 %v1365, %v1585
      %v1672 = vadd.f32 %v1366, %v1590
      %v1673 = vadd.f32 %v1367, %v1595
      %v1674 = vadd.f32 %v1368, %v1600
      %v1675 = vadd.f32 %v1369, %v1605
      %v1676 = vadd.f32 %v1370, %v1610
      %v1677 = vadd.f32 %v1371, %v1615
      %v1678 = vadd.f32 %v1372, %v1620
      %v1679 = vadd.f32 %v1373, %v1625
      %v1680 = vadd.f32 %v1374, %v1630
      %v1681 = vadd.f32 %v1375, %v1635
      %v1682 = vadd.f32 %v1376, %v1640
      %v1683 = vadd.f32 %v1377, %v1645
      %v1684 = vadd.f32 %v1378, %v1650
      %v1685 = vld [vmem:[%s1072 + $0x2] sm:$0xff]
      %v1686 = vld [vmem:[%s1072 + $0xa] sm:$0xff]
      %v1687 = vld [vmem:[%s1072 + $0x1a] sm:$0xff]
      %v1688 = vld [vmem:[%s1072 + $0x22] sm:$0xff]
      %v1689 = vld [vmem:[%s1072 + $0x32] sm:$0xff]
      %v1690 = vld [vmem:[%s1072 + $0x3a] sm:$0xff]
      %v1691 = vld [vmem:[%s1072 + $0x4a] sm:$0xff]
      %v1692 = vld [vmem:[%s1072 + $0x52] sm:$0xff]
      %v1693 = vld [vmem:[%s1072 + $0x62] sm:$0xff]
      %v1694 = vld [vmem:[%s1072 + $0x6a] sm:$0xff]
      %v1695 = vld [vmem:[%s1072 + $0x7a] sm:$0xff]
      %v1696 = vld [vmem:[%s1072 + $0x82] sm:$0xff]
      %v1697 = vld [vmem:[%s1072 + $0x92] sm:$0xff]
      %v1698 = vld [vmem:[%s1072 + $0x9a] sm:$0xff]
      %v1699 = vld [vmem:[%s1072 + $0xaa] sm:$0xff]
      %v1700 = vld [vmem:[%s1072 + $0xb2] sm:$0xff]
      %v1701 = vld [vmem:[%s1072 + $0xc2] sm:$0xff]
      %v1702 = vld [vmem:[%s1072 + $0xca] sm:$0xff]
      %v1703 = vld [vmem:[%s1072 + $0xda] sm:$0xff]
      %v1704 = vld [vmem:[%s1072 + $0xe2] sm:$0xff]
      %v1705 = vld [vmem:[%s1072 + $0xf2] sm:$0xff]
      %v1706 = vld [vmem:[%s1072 + $0xfa] sm:$0xff]
      %v1707 = vld [vmem:[%s1072 + $0x10a] sm:$0xff]
      %v1708 = vld [vmem:[%s1072 + $0x112] sm:$0xff]
      %v1709 = vld [vmem:[%s1072 + $0x122] sm:$0xff]
      %v1710 = vld [vmem:[%s1072 + $0x12a] sm:$0xff]
      %v1711 = vld [vmem:[%s1072 + $0x13a] sm:$0xff]
      %v1712 = vld [vmem:[%s1072 + $0x142] sm:$0xff]
      %v1713 = vld [vmem:[%s1072 + $0x152] sm:$0xff]
      %v1714 = vld [vmem:[%s1072 + $0x15a] sm:$0xff]
      %v1715 = vld [vmem:[%s1072 + $0x16a] sm:$0xff]
      %v1716 = vld [vmem:[%s1072 + $0x172] sm:$0xff]
      %s1717 = scalar_lea.vmem %s1, 640
      %v1718 = vld [vmem:[%s1717] sm:$0xff]
      %v1719 = vld [vmem:[%s1717 + $0x8] sm:$0xff]
      %v1720 = vld [vmem:[%s1717 + $0x10] sm:$0xff]
      %v1721 = vld [vmem:[%s1717 + $0x18] sm:$0xff]
      %v1722 = vld [vmem:[%s1717 + $0x20] sm:$0xff]
      %v1723 = vld [vmem:[%s1717 + $0x28] sm:$0xff]
      %v1724 = vld [vmem:[%s1717 + $0x30] sm:$0xff]
      %v1725 = vld [vmem:[%s1717 + $0x38] sm:$0xff]
      %v1726 = vld [vmem:[%s1717 + $0x40] sm:$0xff]
      %v1727 = vld [vmem:[%s1717 + $0x48] sm:$0xff]
      %v1728 = vld [vmem:[%s1717 + $0x50] sm:$0xff]
      %v1729 = vld [vmem:[%s1717 + $0x58] sm:$0xff]
      %v1730 = vld [vmem:[%s1717 + $0x60] sm:$0xff]
      %v1731 = vld [vmem:[%s1717 + $0x68] sm:$0xff]
      %v1732 = vld [vmem:[%s1717 + $0x70] sm:$0xff]
      %v1733 = vld [vmem:[%s1717 + $0x78] sm:$0xff]
      %1734 = vmatprep.subr.mxu0 0.0
      %1735 = vmatpush1.msra.mxu0 %v1718
      %1736 = vmatprep.subr.mxu0 0.0
      %1737 = vmatpush1.msra.mxu0 %v1719
      %1738 = vmatprep.subr.mxu0 0.0
      %1739 = vmatpush1.msra.mxu0 %v1720
      %1740 = vmatprep.subr.mxu0 0.0
      %1741 = vmatpush1.msra.mxu0 %v1721
      %1742 = vmatprep.subr.mxu0 0.0
      %1743 = vmatpush1.msra.mxu0 %v1722
      %1744 = vmatprep.subr.mxu0 0.0
      %1745 = vmatpush1.msra.mxu0 %v1723
      %1746 = vmatprep.subr.mxu0 0.0
      %1747 = vmatpush1.msra.mxu0 %v1724
      %1748 = vmatprep.subr.mxu0 0.0
      %1749 = vmatpush1.msra.mxu0 %v1725
      %1750 = vmatprep.subr.mxu0 0.0
      %1751 = vmatpush1.msra.mxu0 %v1726
      %1752 = vmatprep.subr.mxu0 0.0
      %1753 = vmatpush1.msra.mxu0 %v1727
      %1754 = vmatprep.subr.mxu0 0.0
      %1755 = vmatpush1.msra.mxu0 %v1728
      %1756 = vmatprep.subr.mxu0 0.0
      %1757 = vmatpush1.msra.mxu0 %v1729
      %1758 = vmatprep.subr.mxu0 0.0
      %1759 = vmatpush1.msra.mxu0 %v1730
      %1760 = vmatprep.subr.mxu0 0.0
      %1761 = vmatpush1.msra.mxu0 %v1731
      %1762 = vmatprep.subr.mxu0 0.0
      %1763 = vmatpush1.msra.mxu0 %v1732
      %1764 = vmatprep.subr.mxu0 0.0
      %1765 = vmatpush1.msra.mxu0 %v1733
      %1766 = vmatprep.subr.mxu0 0.0
      %1767 = vmatpush1.msra.mxu0 0.0
      %1768 = vmatprep.subr.mxu0 0.0
      %1769 = vmatpush1.msra.mxu0 0.0
      %1770 = vmatprep.subr.mxu0 0.0
      %1771 = vmatpush1.msra.mxu0 0.0
      %1772 = vmatprep.subr.mxu0 0.0
      %1773 = vmatpush1.msra.mxu0 0.0
      %1774 = vmatprep.subr.mxu0 0.0
      %1775 = vmatpush1.msra.mxu0 0.0
      %1776 = vmatprep.subr.mxu0 0.0
      %1777 = vmatpush1.msra.mxu0 0.0
      %1778 = vmatprep.subr.mxu0 0.0
      %1779 = vmatpush1.msra.mxu0 0.0
      %1780 = vmatprep.subr.mxu0 0.0
      %1781 = vmatpush1.msra.mxu0 0.0
      %1782 = vmatprep.subr.mxu0 0.0
      %1783 = vmatpush1.msra.mxu0 0.0
      %1784 = vmatprep.subr.mxu0 0.0
      %1785 = vmatpush1.msra.mxu0 0.0
      %1786 = vmatprep.subr.mxu0 0.0
      %1787 = vmatpush1.msra.mxu0 0.0
      %1788 = vmatprep.subr.mxu0 0.0
      %1789 = vmatpush1.msra.mxu0 0.0
      %1790 = vmatprep.subr.mxu0 0.0
      %1791 = vmatpush1.msra.mxu0 0.0
      %1792 = vmatprep.subr.mxu0 0.0
      %1793 = vmatpush1.msra.mxu0 0.0
      %1794 = vmatprep.subr.mxu0 0.0
      %1795 = vmatpush1.msra.mxu0 0.0
      %1796 = vmatprep.subr.mxu0 0.0
      %1797 = vmatpush1.msra.mxu0 0.0
      %1798 = vmatprep.mubr.f32.mxu0 0.0
      %1799 = vmatmul.mubr.f32.gmra.mrb[0].mxu0 %v1685
      %v1800 = vpop.f32.mrb[0].mxu0
      %v1801 = vadd.f32 0.0, %v1800
      %v1802 = vpop.f32.mrb[0].mxu0
      %1803 = vmatprep.mubr.f32.mxu0 0.0
      %1804 = vmatmul.mubr.f32.gmra.mrb[0].mxu0 %v1686
      %v1805 = vpop.f32.mrb[0].mxu0
      %v1806 = vadd.f32 0.0, %v1805
      %v1807 = vpop.f32.mrb[0].mxu0
      %1808 = vmatprep.mubr.f32.mxu0 0.0
      %1809 = vmatmul.mubr.f32.gmra.mrb[0].mxu0 %v1687
      %v1810 = vpop.f32.mrb[0].mxu0
      %v1811 = vadd.f32 0.0, %v1810
      %v1812 = vpop.f32.mrb[0].mxu0
      %1813 = vmatprep.mubr.f32.mxu0 0.0
      %1814 = vmatmul.mubr.f32.gmra.mrb[0].mxu0 %v1688
      %v1815 = vpop.f32.mrb[0].mxu0
      %v1816 = vadd.f32 0.0, %v1815
      %v1817 = vpop.f32.mrb[0].mxu0
      %1818 = vmatprep.mubr.f32.mxu0 0.0
      %1819 = vmatmul.mubr.f32.gmra.mrb[0].mxu0 %v1689
      %v1820 = vpop.f32.mrb[0].mxu0
      %v1821 = vadd.f32 0.0, %v1820
      %v1822 = vpop.f32.mrb[0].mxu0
      %1823 = vmatprep.mubr.f32.mxu0 0.0
      %1824 = vmatmul.mubr.f32.gmra.mrb[0].mxu0 %v1690
      %v1825 = vpop.f32.mrb[0].mxu0
      %v1826 = vadd.f32 0.0, %v1825
      %v1827 = vpop.f32.mrb[0].mxu0
      %1828 = vmatprep.mubr.f32.mxu0 0.0
      %1829 = vmatmul.mubr.f32.gmra.mrb[0].mxu0 %v1691
      %v1830 = vpop.f32.mrb[0].mxu0
      %v1831 = vadd.f32 0.0, %v1830
      %v1832 = vpop.f32.mrb[0].mxu0
      %1833 = vmatprep.mubr.f32.mxu0 0.0
      %1834 = vmatmul.mubr.f32.gmra.mrb[0].mxu0 %v1692
      %v1835 = vpop.f32.mrb[0].mxu0
      %v1836 = vadd.f32 0.0, %v1835
      %v1837 = vpop.f32.mrb[0].mxu0
      %1838 = vmatprep.mubr.f32.mxu0 0.0
      %1839 = vmatmul.mubr.f32.gmra.mrb[0].mxu0 %v1693
      %v1840 = vpop.f32.mrb[0].mxu0
      %v1841 = vadd.f32 0.0, %v1840
      %v1842 = vpop.f32.mrb[0].mxu0
      %1843 = vmatprep.mubr.f32.mxu0 0.0
      %1844 = vmatmul.mubr.f32.gmra.mrb[0].mxu0 %v1694
      %v1845 = vpop.f32.mrb[0].mxu0
      %v1846 = vadd.f32 0.0, %v1845
      %v1847 = vpop.f32.mrb[0].mxu0
      %1848 = vmatprep.mubr.f32.mxu0 0.0
      %1849 = vmatmul.mubr.f32.gmra.mrb[0].mxu0 %v1695
      %v1850 = vpop.f32.mrb[0].mxu0
      %v1851 = vadd.f32 0.0, %v1850
      %v1852 = vpop.f32.mrb[0].mxu0
      %1853 = vmatprep.mubr.f32.mxu0 0.0
      %1854 = vmatmul.mubr.f32.gmra.mrb[0].mxu0 %v1696
      %v1855 = vpop.f32.mrb[0].mxu0
      %v1856 = vadd.f32 0.0, %v1855
      %v1857 = vpop.f32.mrb[0].mxu0
      %1858 = vmatprep.mubr.f32.mxu0 0.0
      %1859 = vmatmul.mubr.f32.gmra.mrb[0].mxu0 %v1697
      %v1860 = vpop.f32.mrb[0].mxu0
      %v1861 = vadd.f32 0.0, %v1860
      %v1862 = vpop.f32.mrb[0].mxu0
      %1863 = vmatprep.mubr.f32.mxu0 0.0
      %1864 = vmatmul.mubr.f32.gmra.mrb[0].mxu0 %v1698
      %v1865 = vpop.f32.mrb[0].mxu0
      %v1866 = vadd.f32 0.0, %v1865
      %v1867 = vpop.f32.mrb[0].mxu0
      %1868 = vmatprep.mubr.f32.mxu0 0.0
      %1869 = vmatmul.mubr.f32.gmra.mrb[0].mxu0 %v1699
      %v1870 = vpop.f32.mrb[0].mxu0
      %v1871 = vadd.f32 0.0, %v1870
      %v1872 = vpop.f32.mrb[0].mxu0
      %1873 = vmatprep.mubr.f32.mxu0 0.0
      %1874 = vmatmul.mubr.f32.gmra.mrb[0].mxu0 %v1700
      %v1875 = vpop.f32.mrb[0].mxu0
      %v1876 = vadd.f32 0.0, %v1875
      %v1877 = vpop.f32.mrb[0].mxu0
      %1878 = vmatprep.mubr.f32.mxu0 0.0
      %1879 = vmatmul.mubr.f32.gmra.mrb[0].mxu0 %v1701
      %v1880 = vpop.f32.mrb[0].mxu0
      %v1881 = vadd.f32 0.0, %v1880
      %v1882 = vpop.f32.mrb[0].mxu0
      %1883 = vmatprep.mubr.f32.mxu0 0.0
      %1884 = vmatmul.mubr.f32.gmra.mrb[0].mxu0 %v1702
      %v1885 = vpop.f32.mrb[0].mxu0
      %v1886 = vadd.f32 0.0, %v1885
      %v1887 = vpop.f32.mrb[0].mxu0
      %1888 = vmatprep.mubr.f32.mxu0 0.0
      %1889 = vmatmul.mubr.f32.gmra.mrb[0].mxu0 %v1703
      %v1890 = vpop.f32.mrb[0].mxu0
      %v1891 = vadd.f32 0.0, %v1890
      %v1892 = vpop.f32.mrb[0].mxu0
      %1893 = vmatprep.mubr.f32.mxu0 0.0
      %1894 = vmatmul.mubr.f32.gmra.mrb[0].mxu0 %v1704
      %v1895 = vpop.f32.mrb[0].mxu0
      %v1896 = vadd.f32 0.0, %v1895
      %v1897 = vpop.f32.mrb[0].mxu0
      %1898 = vmatprep.mubr.f32.mxu0 0.0
      %1899 = vmatmul.mubr.f32.gmra.mrb[0].mxu0 %v1705
      %v1900 = vpop.f32.mrb[0].mxu0
      %v1901 = vadd.f32 0.0, %v1900
      %v1902 = vpop.f32.mrb[0].mxu0
      %1903 = vmatprep.mubr.f32.mxu0 0.0
      %1904 = vmatmul.mubr.f32.gmra.mrb[0].mxu0 %v1706
      %v1905 = vpop.f32.mrb[0].mxu0
      %v1906 = vadd.f32 0.0, %v1905
      %v1907 = vpop.f32.mrb[0].mxu0
      %1908 = vmatprep.mubr.f32.mxu0 0.0
      %1909 = vmatmul.mubr.f32.gmra.mrb[0].mxu0 %v1707
      %v1910 = vpop.f32.mrb[0].mxu0
      %v1911 = vadd.f32 0.0, %v1910
      %v1912 = vpop.f32.mrb[0].mxu0
      %1913 = vmatprep.mubr.f32.mxu0 0.0
      %1914 = vmatmul.mubr.f32.gmra.mrb[0].mxu0 %v1708
      %v1915 = vpop.f32.mrb[0].mxu0
      %v1916 = vadd.f32 0.0, %v1915
      %v1917 = vpop.f32.mrb[0].mxu0
      %1918 = vmatprep.mubr.f32.mxu0 0.0
      %1919 = vmatmul.mubr.f32.gmra.mrb[0].mxu0 %v1709
      %v1920 = vpop.f32.mrb[0].mxu0
      %v1921 = vadd.f32 0.0, %v1920
      %v1922 = vpop.f32.mrb[0].mxu0
      %1923 = vmatprep.mubr.f32.mxu0 0.0
      %1924 = vmatmul.mubr.f32.gmra.mrb[0].mxu0 %v1710
      %v1925 = vpop.f32.mrb[0].mxu0
      %v1926 = vadd.f32 0.0, %v1925
      %v1927 = vpop.f32.mrb[0].mxu0
      %1928 = vmatprep.mubr.f32.mxu0 0.0
      %1929 = vmatmul.mubr.f32.gmra.mrb[0].mxu0 %v1711
      %v1930 = vpop.f32.mrb[0].mxu0
      %v1931 = vadd.f32 0.0, %v1930
      %v1932 = vpop.f32.mrb[0].mxu0
      %1933 = vmatprep.mubr.f32.mxu0 0.0
      %1934 = vmatmul.mubr.f32.gmra.mrb[0].mxu0 %v1712
      %v1935 = vpop.f32.mrb[0].mxu0
      %v1936 = vadd.f32 0.0, %v1935
      %v1937 = vpop.f32.mrb[0].mxu0
      %1938 = vmatprep.mubr.f32.mxu0 0.0
      %1939 = vmatmul.mubr.f32.gmra.mrb[0].mxu0 %v1713
      %v1940 = vpop.f32.mrb[0].mxu0
      %v1941 = vadd.f32 0.0, %v1940
      %v1942 = vpop.f32.mrb[0].mxu0
      %1943 = vmatprep.mubr.f32.mxu0 0.0
      %1944 = vmatmul.mubr.f32.gmra.mrb[0].mxu0 %v1714
      %v1945 = vpop.f32.mrb[0].mxu0
      %v1946 = vadd.f32 0.0, %v1945
      %v1947 = vpop.f32.mrb[0].mxu0
      %1948 = vmatprep.mubr.f32.mxu0 0.0
      %1949 = vmatmul.mubr.f32.gmra.mrb[0].mxu0 %v1715
      %v1950 = vpop.f32.mrb[0].mxu0
      %v1951 = vadd.f32 0.0, %v1950
      %v1952 = vpop.f32.mrb[0].mxu0
      %1953 = vmatprep.mubr.f32.mxu0 0.0
      %1954 = vmatmul.mubr.f32.gmra.mrb[0].mxu0 %v1716
      %v1955 = vpop.f32.mrb[0].mxu0
      %v1956 = vadd.f32 0.0, %v1955
      %v1957 = vpop.f32.mrb[0].mxu0
      %1958 = vdwg.mxu0
      %v1959 = vadd.f32 %v1653, %v1801
      %v1960 = vadd.f32 %v1654, %v1806
      %v1961 = vadd.f32 %v1655, %v1811
      %v1962 = vadd.f32 %v1656, %v1816
      %v1963 = vadd.f32 %v1657, %v1821
      %v1964 = vadd.f32 %v1658, %v1826
      %v1965 = vadd.f32 %v1659, %v1831
      %v1966 = vadd.f32 %v1660, %v1836
      %v1967 = vadd.f32 %v1661, %v1841
      %v1968 = vadd.f32 %v1662, %v1846
      %v1969 = vadd.f32 %v1663, %v1851
      %v1970 = vadd.f32 %v1664, %v1856
      %v1971 = vadd.f32 %v1665, %v1861
      %v1972 = vadd.f32 %v1666, %v1866
      %v1973 = vadd.f32 %v1667, %v1871
      %v1974 = vadd.f32 %v1668, %v1876
      %v1975 = vadd.f32 %v1669, %v1881
      %v1976 = vadd.f32 %v1670, %v1886
      %v1977 = vadd.f32 %v1671, %v1891
      %v1978 = vadd.f32 %v1672, %v1896
      %v1979 = vadd.f32 %v1673, %v1901
      %v1980 = vadd.f32 %v1674, %v1906
      %v1981 = vadd.f32 %v1675, %v1911
      %v1982 = vadd.f32 %v1676, %v1916
      %v1983 = vadd.f32 %v1677, %v1921
      %v1984 = vadd.f32 %v1678, %v1926
      %v1985 = vadd.f32 %v1679, %v1931
      %v1986 = vadd.f32 %v1680, %v1936
      %v1987 = vadd.f32 %v1681, %v1941
      %v1988 = vadd.f32 %v1682, %v1946
      %v1989 = vadd.f32 %v1683, %v1951
      %v1990 = vadd.f32 %v1684, %v1956
      %s1991 = scalar_lea.vmem %s205, 48
      %v1992 = vld [vmem:[%s1991] sm:$0xff]
      %v1993 = vld [vmem:[%s1991 + $0x8] sm:$0xff]
      %v1994 = vld [vmem:[%s1991 + $0x18] sm:$0xff]
      %v1995 = vld [vmem:[%s1991 + $0x20] sm:$0xff]
      %v1996 = vld [vmem:[%s1991 + $0x30] sm:$0xff]
      %v1997 = vld [vmem:[%s1991 + $0x38] sm:$0xff]
      %v1998 = vld [vmem:[%s1991 + $0x48] sm:$0xff]
      %v1999 = vld [vmem:[%s1991 + $0x50] sm:$0xff]
      %v2000 = vld [vmem:[%s1991 + $0x60] sm:$0xff]
      %v2001 = vld [vmem:[%s1991 + $0x68] sm:$0xff]
      %v2002 = vld [vmem:[%s1991 + $0x78] sm:$0xff]
      %v2003 = vld [vmem:[%s1991 + $0x80] sm:$0xff]
      %v2004 = vld [vmem:[%s1991 + $0x90] sm:$0xff]
      %v2005 = vld [vmem:[%s1991 + $0x98] sm:$0xff]
      %v2006 = vld [vmem:[%s1991 + $0xa8] sm:$0xff]
      %v2007 = vld [vmem:[%s1991 + $0xb0] sm:$0xff]
      %v2008 = vld [vmem:[%s1991 + $0xc0] sm:$0xff]
      %v2009 = vld [vmem:[%s1991 + $0xc8] sm:$0xff]
      %v2010 = vld [vmem:[%s1991 + $0xd8] sm:$0xff]
      %v2011 = vld [vmem:[%s1991 + $0xe0] sm:$0xff]
      %v2012 = vld [vmem:[%s1991 + $0xf0] sm:$0xff]
      %v2013 = vld [vmem:[%s1991 + $0xf8] sm:$0xff]
      %v2014 = vld [vmem:[%s1991 + $0x108] sm:$0xff]
      %v2015 = vld [vmem:[%s1991 + $0x110] sm:$0xff]
      %v2016 = vld [vmem:[%s1991 + $0x120] sm:$0xff]
      %v2017 = vld [vmem:[%s1991 + $0x128] sm:$0xff]
      %v2018 = vld [vmem:[%s1991 + $0x138] sm:$0xff]
      %v2019 = vld [vmem:[%s1991 + $0x140] sm:$0xff]
      %v2020 = vld [vmem:[%s1991 + $0x150] sm:$0xff]
      %v2021 = vld [vmem:[%s1991 + $0x158] sm:$0xff]
      %v2022 = vld [vmem:[%s1991 + $0x168] sm:$0xff]
      %v2023 = vld [vmem:[%s1991 + $0x170] sm:$0xff]
      %s2024 = scalar_lea.vmem %s1, 768
      %v2025 = vld [vmem:[%s2024] sm:$0xff]
      %v2026 = vld [vmem:[%s2024 + $0x8] sm:$0xff]
      %v2027 = vld [vmem:[%s2024 + $0x10] sm:$0xff]
      %v2028 = vld [vmem:[%s2024 + $0x18] sm:$0xff]
      %v2029 = vld [vmem:[%s2024 + $0x20] sm:$0xff]
      %v2030 = vld [vmem:[%s2024 + $0x28] sm:$0xff]
      %v2031 = vld [vmem:[%s2024 + $0x30] sm:$0xff]
      %v2032 = vld [vmem:[%s2024 + $0x38] sm:$0xff]
      %v2033 = vld [vmem:[%s2024 + $0x40] sm:$0xff]
      %v2034 = vld [vmem:[%s2024 + $0x48] sm:$0xff]
      %v2035 = vld [vmem:[%s2024 + $0x50] sm:$0xff]
      %v2036 = vld [vmem:[%s2024 + $0x58] sm:$0xff]
      %v2037 = vld [vmem:[%s2024 + $0x60] sm:$0xff]
      %v2038 = vld [vmem:[%s2024 + $0x68] sm:$0xff]
      %v2039 = vld [vmem:[%s2024 + $0x70] sm:$0xff]
      %v2040 = vld [vmem:[%s2024 + $0x78] sm:$0xff]
      %2041 = vmatprep.subr.mxu0 0.0
      %2042 = vmatpush1.msra.mxu0 %v2025
      %2043 = vmatprep.subr.mxu0 0.0
      %2044 = vmatpush1.msra.mxu0 %v2026
      %2045 = vmatprep.subr.mxu0 0.0
      %2046 = vmatpush1.msra.mxu0 %v2027
      %2047 = vmatprep.subr.mxu0 0.0
      %2048 = vmatpush1.msra.mxu0 %v2028
      %2049 = vmatprep.subr.mxu0 0.0
      %2050 = vmatpush1.msra.mxu0 %v2029
      %2051 = vmatprep.subr.mxu0 0.0
      %2052 = vmatpush1.msra.mxu0 %v2030
      %2053 = vmatprep.subr.mxu0 0.0
      %2054 = vmatpush1.msra.mxu0 %v2031
      %2055 = vmatprep.subr.mxu0 0.0
      %2056 = vmatpush1.msra.mxu0 %v2032
      %2057 = vmatprep.subr.mxu0 0.0
      %2058 = vmatpush1.msra.mxu0 %v2033
      %2059 = vmatprep.subr.mxu0 0.0
      %2060 = vmatpush1.msra.mxu0 %v2034
      %2061 = vmatprep.subr.mxu0 0.0
      %2062 = vmatpush1.msra.mxu0 %v2035
      %2063 = vmatprep.subr.mxu0 0.0
      %2064 = vmatpush1.msra.mxu0 %v2036
      %2065 = vmatprep.subr.mxu0 0.0
      %2066 = vmatpush1.msra.mxu0 %v2037
      %2067 = vmatprep.subr.mxu0 0.0
      %2068 = vmatpush1.msra.mxu0 %v2038
      %2069 = vmatprep.subr.mxu0 0.0
      %2070 = vmatpush1.msra.mxu0 %v2039
      %2071 = vmatprep.subr.mxu0 0.0
      %2072 = vmatpush1.msra.mxu0 %v2040
      %2073 = vmatprep.subr.mxu0 0.0
      %2074 = vmatpush1.msra.mxu0 0.0
      %2075 = vmatprep.subr.mxu0 0.0
      %2076 = vmatpush1.msra.mxu0 0.0
      %2077 = vmatprep.subr.mxu0 0.0
      %2078 = vmatpush1.msra.mxu0 0.0
      %2079 = vmatprep.subr.mxu0 0.0
      %2080 = vmatpush1.msra.mxu0 0.0
      %2081 = vmatprep.subr.mxu0 0.0
      %2082 = vmatpush1.msra.mxu0 0.0
      %2083 = vmatprep.subr.mxu0 0.0
      %2084 = vmatpush1.msra.mxu0 0.0
      %2085 = vmatprep.subr.mxu0 0.0
      %2086 = vmatpush1.msra.mxu0 0.0
      %2087 = vmatprep.subr.mxu0 0.0
      %2088 = vmatpush1.msra.mxu0 0.0
      %2089 = vmatprep.subr.mxu0 0.0
      %2090 = vmatpush1.msra.mxu0 0.0
      %2091 = vmatprep.subr.mxu0 0.0
      %2092 = vmatpush1.msra.mxu0 0.0
      %2093 = vmatprep.subr.mxu0 0.0
      %2094 = vmatpush1.msra.mxu0 0.0
      %2095 = vmatprep.subr.mxu0 0.0
      %2096 = vmatpush1.msra.mxu0 0.0
      %2097 = vmatprep.subr.mxu0 0.0
      %2098 = vmatpush1.msra.mxu0 0.0
      %2099 = vmatprep.subr.mxu0 0.0
      %2100 = vmatpush1.msra.mxu0 0.0
      %2101 = vmatprep.subr.mxu0 0.0
      %2102 = vmatpush1.msra.mxu0 0.0
      %2103 = vmatprep.subr.mxu0 0.0
      %2104 = vmatpush1.msra.mxu0 0.0
      %2105 = vmatprep.mubr.f32.mxu0 0.0
      %2106 = vmatmul.mubr.f32.gmra.mrb[0].mxu0 %v1992
      %v2107 = vpop.f32.mrb[0].mxu0
      %v2108 = vadd.f32 0.0, %v2107
      %v2109 = vpop.f32.mrb[0].mxu0
      %2110 = vmatprep.mubr.f32.mxu0 0.0
      %2111 = vmatmul.mubr.f32.gmra.mrb[0].mxu0 %v1993
      %v2112 = vpop.f32.mrb[0].mxu0
      %v2113 = vadd.f32 0.0, %v2112
      %v2114 = vpop.f32.mrb[0].mxu0
      %2115 = vmatprep.mubr.f32.mxu0 0.0
      %2116 = vmatmul.mubr.f32.gmra.mrb[0].mxu0 %v1994
      %v2117 = vpop.f32.mrb[0].mxu0
      %v2118 = vadd.f32 0.0, %v2117
      %v2119 = vpop.f32.mrb[0].mxu0
      %2120 = vmatprep.mubr.f32.mxu0 0.0
      %2121 = vmatmul.mubr.f32.gmra.mrb[0].mxu0 %v1995
      %v2122 = vpop.f32.mrb[0].mxu0
      %v2123 = vadd.f32 0.0, %v2122
      %v2124 = vpop.f32.mrb[0].mxu0
      %2125 = vmatprep.mubr.f32.mxu0 0.0
      %2126 = vmatmul.mubr.f32.gmra.mrb[0].mxu0 %v1996
      %v2127 = vpop.f32.mrb[0].mxu0
      %v2128 = vadd.f32 0.0, %v2127
      %v2129 = vpop.f32.mrb[0].mxu0
      %2130 = vmatprep.mubr.f32.mxu0 0.0
      %2131 = vmatmul.mubr.f32.gmra.mrb[0].mxu0 %v1997
      %v2132 = vpop.f32.mrb[0].mxu0
      %v2133 = vadd.f32 0.0, %v2132
      %v2134 = vpop.f32.mrb[0].mxu0
      %2135 = vmatprep.mubr.f32.mxu0 0.0
      %2136 = vmatmul.mubr.f32.gmra.mrb[0].mxu0 %v1998
      %v2137 = vpop.f32.mrb[0].mxu0
      %v2138 = vadd.f32 0.0, %v2137
      %v2139 = vpop.f32.mrb[0].mxu0
      %2140 = vmatprep.mubr.f32.mxu0 0.0
      %2141 = vmatmul.mubr.f32.gmra.mrb[0].mxu0 %v1999
      %v2142 = vpop.f32.mrb[0].mxu0
      %v2143 = vadd.f32 0.0, %v2142
      %v2144 = vpop.f32.mrb[0].mxu0
      %2145 = vmatprep.mubr.f32.mxu0 0.0
      %2146 = vmatmul.mubr.f32.gmra.mrb[0].mxu0 %v2000
      %v2147 = vpop.f32.mrb[0].mxu0
      %v2148 = vadd.f32 0.0, %v2147
      %v2149 = vpop.f32.mrb[0].mxu0
      %2150 = vmatprep.mubr.f32.mxu0 0.0
      %2151 = vmatmul.mubr.f32.gmra.mrb[0].mxu0 %v2001
      %v2152 = vpop.f32.mrb[0].mxu0
      %v2153 = vadd.f32 0.0, %v2152
      %v2154 = vpop.f32.mrb[0].mxu0
      %2155 = vmatprep.mubr.f32.mxu0 0.0
      %2156 = vmatmul.mubr.f32.gmra.mrb[0].mxu0 %v2002
      %v2157 = vpop.f32.mrb[0].mxu0
      %v2158 = vadd.f32 0.0, %v2157
      %v2159 = vpop.f32.mrb[0].mxu0
      %2160 = vmatprep.mubr.f32.mxu0 0.0
      %2161 = vmatmul.mubr.f32.gmra.mrb[0].mxu0 %v2003
      %v2162 = vpop.f32.mrb[0].mxu0
      %v2163 = vadd.f32 0.0, %v2162
      %v2164 = vpop.f32.mrb[0].mxu0
      %2165 = vmatprep.mubr.f32.mxu0 0.0
      %2166 = vmatmul.mubr.f32.gmra.mrb[0].mxu0 %v2004
      %v2167 = vpop.f32.mrb[0].mxu0
      %v2168 = vadd.f32 0.0, %v2167
      %v2169 = vpop.f32.mrb[0].mxu0
      %2170 = vmatprep.mubr.f32.mxu0 0.0
      %2171 = vmatmul.mubr.f32.gmra.mrb[0].mxu0 %v2005
      %v2172 = vpop.f32.mrb[0].mxu0
      %v2173 = vadd.f32 0.0, %v2172
      %v2174 = vpop.f32.mrb[0].mxu0
      %2175 = vmatprep.mubr.f32.mxu0 0.0
      %2176 = vmatmul.mubr.f32.gmra.mrb[0].mxu0 %v2006
      %v2177 = vpop.f32.mrb[0].mxu0
      %v2178 = vadd.f32 0.0, %v2177
      %v2179 = vpop.f32.mrb[0].mxu0
      %2180 = vmatprep.mubr.f32.mxu0 0.0
      %2181 = vmatmul.mubr.f32.gmra.mrb[0].mxu0 %v2007
      %v2182 = vpop.f32.mrb[0].mxu0
      %v2183 = vadd.f32 0.0, %v2182
      %v2184 = vpop.f32.mrb[0].mxu0
      %2185 = vmatprep.mubr.f32.mxu0 0.0
      %2186 = vmatmul.mubr.f32.gmra.mrb[0].mxu0 %v2008
      %v2187 = vpop.f32.mrb[0].mxu0
      %v2188 = vadd.f32 0.0, %v2187
      %v2189 = vpop.f32.mrb[0].mxu0
      %2190 = vmatprep.mubr.f32.mxu0 0.0
      %2191 = vmatmul.mubr.f32.gmra.mrb[0].mxu0 %v2009
      %v2192 = vpop.f32.mrb[0].mxu0
      %v2193 = vadd.f32 0.0, %v2192
      %v2194 = vpop.f32.mrb[0].mxu0
      %2195 = vmatprep.mubr.f32.mxu0 0.0
      %2196 = vmatmul.mubr.f32.gmra.mrb[0].mxu0 %v2010
      %v2197 = vpop.f32.mrb[0].mxu0
      %v2198 = vadd.f32 0.0, %v2197
      %v2199 = vpop.f32.mrb[0].mxu0
      %2200 = vmatprep.mubr.f32.mxu0 0.0
      %2201 = vmatmul.mubr.f32.gmra.mrb[0].mxu0 %v2011
      %v2202 = vpop.f32.mrb[0].mxu0
      %v2203 = vadd.f32 0.0, %v2202
      %v2204 = vpop.f32.mrb[0].mxu0
      %2205 = vmatprep.mubr.f32.mxu0 0.0
      %2206 = vmatmul.mubr.f32.gmra.mrb[0].mxu0 %v2012
      %v2207 = vpop.f32.mrb[0].mxu0
      %v2208 = vadd.f32 0.0, %v2207
      %v2209 = vpop.f32.mrb[0].mxu0
      %2210 = vmatprep.mubr.f32.mxu0 0.0
      %2211 = vmatmul.mubr.f32.gmra.mrb[0].mxu0 %v2013
      %v2212 = vpop.f32.mrb[0].mxu0
      %v2213 = vadd.f32 0.0, %v2212
      %v2214 = vpop.f32.mrb[0].mxu0
      %2215 = vmatprep.mubr.f32.mxu0 0.0
      %2216 = vmatmul.mubr.f32.gmra.mrb[0].mxu0 %v2014
      %v2217 = vpop.f32.mrb[0].mxu0
      %v2218 = vadd.f32 0.0, %v2217
      %v2219 = vpop.f32.mrb[0].mxu0
      %2220 = vmatprep.mubr.f32.mxu0 0.0
      %2221 = vmatmul.mubr.f32.gmra.mrb[0].mxu0 %v2015
      %v2222 = vpop.f32.mrb[0].mxu0
      %v2223 = vadd.f32 0.0, %v2222
      %v2224 = vpop.f32.mrb[0].mxu0
      %2225 = vmatprep.mubr.f32.mxu0 0.0
      %2226 = vmatmul.mubr.f32.gmra.mrb[0].mxu0 %v2016
      %v2227 = vpop.f32.mrb[0].mxu0
      %v2228 = vadd.f32 0.0, %v2227
      %v2229 = vpop.f32.mrb[0].mxu0
      %2230 = vmatprep.mubr.f32.mxu0 0.0
      %2231 = vmatmul.mubr.f32.gmra.mrb[0].mxu0 %v2017
      %v2232 = vpop.f32.mrb[0].mxu0
      %v2233 = vadd.f32 0.0, %v2232
      %v2234 = vpop.f32.mrb[0].mxu0
      %2235 = vmatprep.mubr.f32.mxu0 0.0
      %2236 = vmatmul.mubr.f32.gmra.mrb[0].mxu0 %v2018
      %v2237 = vpop.f32.mrb[0].mxu0
      %v2238 = vadd.f32 0.0, %v2237
      %v2239 = vpop.f32.mrb[0].mxu0
      %2240 = vmatprep.mubr.f32.mxu0 0.0
      %2241 = vmatmul.mubr.f32.gmra.mrb[0].mxu0 %v2019
      %v2242 = vpop.f32.mrb[0].mxu0
      %v2243 = vadd.f32 0.0, %v2242
      %v2244 = vpop.f32.mrb[0].mxu0
      %2245 = vmatprep.mubr.f32.mxu0 0.0
      %2246 = vmatmul.mubr.f32.gmra.mrb[0].mxu0 %v2020
      %v2247 = vpop.f32.mrb[0].mxu0
      %v2248 = vadd.f32 0.0, %v2247
      %v2249 = vpop.f32.mrb[0].mxu0
      %2250 = vmatprep.mubr.f32.mxu0 0.0
      %2251 = vmatmul.mubr.f32.gmra.mrb[0].mxu0 %v2021
      %v2252 = vpop.f32.mrb[0].mxu0
      %v2253 = vadd.f32 0.0, %v2252
      %v2254 = vpop.f32.mrb[0].mxu0
      %2255 = vmatprep.mubr.f32.mxu0 0.0
      %2256 = vmatmul.mubr.f32.gmra.mrb[0].mxu0 %v2022
      %v2257 = vpop.f32.mrb[0].mxu0
      %v2258 = vadd.f32 0.0, %v2257
      %v2259 = vpop.f32.mrb[0].mxu0
      %2260 = vmatprep.mubr.f32.mxu0 0.0
      %2261 = vmatmul.mubr.f32.gmra.mrb[0].mxu0 %v2023
      %v2262 = vpop.f32.mrb[0].mxu0
      %v2263 = vadd.f32 0.0, %v2262
      %v2264 = vpop.f32.mrb[0].mxu0
      %2265 = vdwg.mxu0
      %v2266 = vadd.f32 %v1959, %v2108
      %v2267 = vadd.f32 %v1960, %v2113
      %v2268 = vadd.f32 %v1961, %v2118
      %v2269 = vadd.f32 %v1962, %v2123
      %v2270 = vadd.f32 %v1963, %v2128
      %v2271 = vadd.f32 %v1964, %v2133
      %v2272 = vadd.f32 %v1965, %v2138
      %v2273 = vadd.f32 %v1966, %v2143
      %v2274 = vadd.f32 %v1967, %v2148
      %v2275 = vadd.f32 %v1968, %v2153
      %v2276 = vadd.f32 %v1969, %v2158
      %v2277 = vadd.f32 %v1970, %v2163
      %v2278 = vadd.f32 %v1971, %v2168
      %v2279 = vadd.f32 %v1972, %v2173
      %v2280 = vadd.f32 %v1973, %v2178
      %v2281 = vadd.f32 %v1974, %v2183
      %v2282 = vadd.f32 %v1975, %v2188
      %v2283 = vadd.f32 %v1976, %v2193
      %v2284 = vadd.f32 %v1977, %v2198
      %v2285 = vadd.f32 %v1978, %v2203
      %v2286 = vadd.f32 %v1979, %v2208
      %v2287 = vadd.f32 %v1980, %v2213
      %v2288 = vadd.f32 %v1981, %v2218
      %v2289 = vadd.f32 %v1982, %v2223
      %v2290 = vadd.f32 %v1983, %v2228
      %v2291 = vadd.f32 %v1984, %v2233
      %v2292 = vadd.f32 %v1985, %v2238
      %v2293 = vadd.f32 %v1986, %v2243
      %v2294 = vadd.f32 %v1987, %v2248
      %v2295 = vadd.f32 %v1988, %v2253
      %v2296 = vadd.f32 %v1989, %v2258
      %v2297 = vadd.f32 %v1990, %v2263
      %v2298 = vld [vmem:[%s1991 + $0x1] sm:$0xff]
      %v2299 = vld [vmem:[%s1991 + $0x9] sm:$0xff]
      %v2300 = vld [vmem:[%s1991 + $0x19] sm:$0xff]
      %v2301 = vld [vmem:[%s1991 + $0x21] sm:$0xff]
      %v2302 = vld [vmem:[%s1991 + $0x31] sm:$0xff]
      %v2303 = vld [vmem:[%s1991 + $0x39] sm:$0xff]
      %v2304 = vld [vmem:[%s1991 + $0x49] sm:$0xff]
      %v2305 = vld [vmem:[%s1991 + $0x51] sm:$0xff]
      %v2306 = vld [vmem:[%s1991 + $0x61] sm:$0xff]
      %v2307 = vld [vmem:[%s1991 + $0x69] sm:$0xff]
      %v2308 = vld [vmem:[%s1991 + $0x79] sm:$0xff]
      %v2309 = vld [vmem:[%s1991 + $0x81] sm:$0xff]
      %v2310 = vld [vmem:[%s1991 + $0x91] sm:$0xff]
      %v2311 = vld [vmem:[%s1991 + $0x99] sm:$0xff]
      %v2312 = vld [vmem:[%s1991 + $0xa9] sm:$0xff]
      %v2313 = vld [vmem:[%s1991 + $0xb1] sm:$0xff]
      %v2314 = vld [vmem:[%s1991 + $0xc1] sm:$0xff]
      %v2315 = vld [vmem:[%s1991 + $0xc9] sm:$0xff]
      %v2316 = vld [vmem:[%s1991 + $0xd9] sm:$0xff]
      %v2317 = vld [vmem:[%s1991 + $0xe1] sm:$0xff]
      %v2318 = vld [vmem:[%s1991 + $0xf1] sm:$0xff]
      %v2319 = vld [vmem:[%s1991 + $0xf9] sm:$0xff]
      %v2320 = vld [vmem:[%s1991 + $0x109] sm:$0xff]
      %v2321 = vld [vmem:[%s1991 + $0x111] sm:$0xff]
      %v2322 = vld [vmem:[%s1991 + $0x121] sm:$0xff]
      %v2323 = vld [vmem:[%s1991 + $0x129] sm:$0xff]
      %v2324 = vld [vmem:[%s1991 + $0x139] sm:$0xff]
      %v2325 = vld [vmem:[%s1991 + $0x141] sm:$0xff]
      %v2326 = vld [vmem:[%s1991 + $0x151] sm:$0xff]
      %v2327 = vld [vmem:[%s1991 + $0x159] sm:$0xff]
      %v2328 = vld [vmem:[%s1991 + $0x169] sm:$0xff]
      %v2329 = vld [vmem:[%s1991 + $0x171] sm:$0xff]
      %s2330 = scalar_lea.vmem %s1, 896
      %v2331 = vld [vmem:[%s2330] sm:$0xff]
      %v2332 = vld [vmem:[%s2330 + $0x8] sm:$0xff]
      %v2333 = vld [vmem:[%s2330 + $0x10] sm:$0xff]
      %v2334 = vld [vmem:[%s2330 + $0x18] sm:$0xff]
      %v2335 = vld [vmem:[%s2330 + $0x20] sm:$0xff]
      %v2336 = vld [vmem:[%s2330 + $0x28] sm:$0xff]
      %v2337 = vld [vmem:[%s2330 + $0x30] sm:$0xff]
      %v2338 = vld [vmem:[%s2330 + $0x38] sm:$0xff]
      %v2339 = vld [vmem:[%s2330 + $0x40] sm:$0xff]
      %v2340 = vld [vmem:[%s2330 + $0x48] sm:$0xff]
      %v2341 = vld [vmem:[%s2330 + $0x50] sm:$0xff]
      %v2342 = vld [vmem:[%s2330 + $0x58] sm:$0xff]
      %v2343 = vld [vmem:[%s2330 + $0x60] sm:$0xff]
      %v2344 = vld [vmem:[%s2330 + $0x68] sm:$0xff]
      %v2345 = vld [vmem:[%s2330 + $0x70] sm:$0xff]
      %v2346 = vld [vmem:[%s2330 + $0x78] sm:$0xff]
      %2347 = vmatprep.subr.mxu0 0.0
      %2348 = vmatpush1.msra.mxu0 %v2331
      %2349 = vmatprep.subr.mxu0 0.0
      %2350 = vmatpush1.msra.mxu0 %v2332
      %2351 = vmatprep.subr.mxu0 0.0
      %2352 = vmatpush1.msra.mxu0 %v2333
      %2353 = vmatprep.subr.mxu0 0.0
      %2354 = vmatpush1.msra.mxu0 %v2334
      %2355 = vmatprep.subr.mxu0 0.0
      %2356 = vmatpush1.msra.mxu0 %v2335
      %2357 = vmatprep.subr.mxu0 0.0
      %2358 = vmatpush1.msra.mxu0 %v2336
      %2359 = vmatprep.subr.mxu0 0.0
      %2360 = vmatpush1.msra.mxu0 %v2337
      %2361 = vmatprep.subr.mxu0 0.0
      %2362 = vmatpush1.msra.mxu0 %v2338
      %2363 = vmatprep.subr.mxu0 0.0
      %2364 = vmatpush1.msra.mxu0 %v2339
      %2365 = vmatprep.subr.mxu0 0.0
      %2366 = vmatpush1.msra.mxu0 %v2340
      %2367 = vmatprep.subr.mxu0 0.0
      %2368 = vmatpush1.msra.mxu0 %v2341
      %2369 = vmatprep.subr.mxu0 0.0
      %2370 = vmatpush1.msra.mxu0 %v2342
      %2371 = vmatprep.subr.mxu0 0.0
      %2372 = vmatpush1.msra.mxu0 %v2343
      %2373 = vmatprep.subr.mxu0 0.0
      %2374 = vmatpush1.msra.mxu0 %v2344
      %2375 = vmatprep.subr.mxu0 0.0
      %2376 = vmatpush1.msra.mxu0 %v2345
      %2377 = vmatprep.subr.mxu0 0.0
      %2378 = vmatpush1.msra.mxu0 %v2346
      %2379 = vmatprep.subr.mxu0 0.0
      %2380 = vmatpush1.msra.mxu0 0.0
      %2381 = vmatprep.subr.mxu0 0.0
      %2382 = vmatpush1.msra.mxu0 0.0
      %2383 = vmatprep.subr.mxu0 0.0
      %2384 = vmatpush1.msra.mxu0 0.0
      %2385 = vmatprep.subr.mxu0 0.0
      %2386 = vmatpush1.msra.mxu0 0.0
      %2387 = vmatprep.subr.mxu0 0.0
      %2388 = vmatpush1.msra.mxu0 0.0
      %2389 = vmatprep.subr.mxu0 0.0
      %2390 = vmatpush1.msra.mxu0 0.0
      %2391 = vmatprep.subr.mxu0 0.0
      %2392 = vmatpush1.msra.mxu0 0.0
      %2393 = vmatprep.subr.mxu0 0.0
      %2394 = vmatpush1.msra.mxu0 0.0
      %2395 = vmatprep.subr.mxu0 0.0
      %2396 = vmatpush1.msra.mxu0 0.0
      %2397 = vmatprep.subr.mxu0 0.0
      %2398 = vmatpush1.msra.mxu0 0.0
      %2399 = vmatprep.subr.mxu0 0.0
      %2400 = vmatpush1.msra.mxu0 0.0
      %2401 = vmatprep.subr.mxu0 0.0
      %2402 = vmatpush1.msra.mxu0 0.0
      %2403 = vmatprep.subr.mxu0 0.0
      %2404 = vmatpush1.msra.mxu0 0.0
      %2405 = vmatprep.subr.mxu0 0.0
      %2406 = vmatpush1.msra.mxu0 0.0
      %2407 = vmatprep.subr.mxu0 0.0
      %2408 = vmatpush1.msra.mxu0 0.0
      %2409 = vmatprep.subr.mxu0 0.0
      %2410 = vmatpush1.msra.mxu0 0.0
      %2411 = vmatprep.mubr.f32.mxu0 0.0
      %2412 = vmatmul.mubr.f32.gmra.mrb[0].mxu0 %v2298
      %v2413 = vpop.f32.mrb[0].mxu0
      %v2414 = vadd.f32 0.0, %v2413
      %v2415 = vpop.f32.mrb[0].mxu0
      %2416 = vmatprep.mubr.f32.mxu0 0.0
      %2417 = vmatmul.mubr.f32.gmra.mrb[0].mxu0 %v2299
      %v2418 = vpop.f32.mrb[0].mxu0
      %v2419 = vadd.f32 0.0, %v2418
      %v2420 = vpop.f32.mrb[0].mxu0
      %2421 = vmatprep.mubr.f32.mxu0 0.0
      %2422 = vmatmul.mubr.f32.gmra.mrb[0].mxu0 %v2300
      %v2423 = vpop.f32.mrb[0].mxu0
      %v2424 = vadd.f32 0.0, %v2423
      %v2425 = vpop.f32.mrb[0].mxu0
      %2426 = vmatprep.mubr.f32.mxu0 0.0
      %2427 = vmatmul.mubr.f32.gmra.mrb[0].mxu0 %v2301
      %v2428 = vpop.f32.mrb[0].mxu0
      %v2429 = vadd.f32 0.0, %v2428
      %v2430 = vpop.f32.mrb[0].mxu0
      %2431 = vmatprep.mubr.f32.mxu0 0.0
      %2432 = vmatmul.mubr.f32.gmra.mrb[0].mxu0 %v2302
      %v2433 = vpop.f32.mrb[0].mxu0
      %v2434 = vadd.f32 0.0, %v2433
      %v2435 = vpop.f32.mrb[0].mxu0
      %2436 = vmatprep.mubr.f32.mxu0 0.0
      %2437 = vmatmul.mubr.f32.gmra.mrb[0].mxu0 %v2303
      %v2438 = vpop.f32.mrb[0].mxu0
      %v2439 = vadd.f32 0.0, %v2438
      %v2440 = vpop.f32.mrb[0].mxu0
      %2441 = vmatprep.mubr.f32.mxu0 0.0
      %2442 = vmatmul.mubr.f32.gmra.mrb[0].mxu0 %v2304
      %v2443 = vpop.f32.mrb[0].mxu0
      %v2444 = vadd.f32 0.0, %v2443
      %v2445 = vpop.f32.mrb[0].mxu0
      %2446 = vmatprep.mubr.f32.mxu0 0.0
      %2447 = vmatmul.mubr.f32.gmra.mrb[0].mxu0 %v2305
      %v2448 = vpop.f32.mrb[0].mxu0
      %v2449 = vadd.f32 0.0, %v2448
      %v2450 = vpop.f32.mrb[0].mxu0
      %2451 = vmatprep.mubr.f32.mxu0 0.0
      %2452 = vmatmul.mubr.f32.gmra.mrb[0].mxu0 %v2306
      %v2453 = vpop.f32.mrb[0].mxu0
      %v2454 = vadd.f32 0.0, %v2453
      %v2455 = vpop.f32.mrb[0].mxu0
      %2456 = vmatprep.mubr.f32.mxu0 0.0
      %2457 = vmatmul.mubr.f32.gmra.mrb[0].mxu0 %v2307
      %v2458 = vpop.f32.mrb[0].mxu0
      %v2459 = vadd.f32 0.0, %v2458
      %v2460 = vpop.f32.mrb[0].mxu0
      %2461 = vmatprep.mubr.f32.mxu0 0.0
      %2462 = vmatmul.mubr.f32.gmra.mrb[0].mxu0 %v2308
      %v2463 = vpop.f32.mrb[0].mxu0
      %v2464 = vadd.f32 0.0, %v2463
      %v2465 = vpop.f32.mrb[0].mxu0
      %2466 = vmatprep.mubr.f32.mxu0 0.0
      %2467 = vmatmul.mubr.f32.gmra.mrb[0].mxu0 %v2309
      %v2468 = vpop.f32.mrb[0].mxu0
      %v2469 = vadd.f32 0.0, %v2468
      %v2470 = vpop.f32.mrb[0].mxu0
      %2471 = vmatprep.mubr.f32.mxu0 0.0
      %2472 = vmatmul.mubr.f32.gmra.mrb[0].mxu0 %v2310
      %v2473 = vpop.f32.mrb[0].mxu0
      %v2474 = vadd.f32 0.0, %v2473
      %v2475 = vpop.f32.mrb[0].mxu0
      %2476 = vmatprep.mubr.f32.mxu0 0.0
      %2477 = vmatmul.mubr.f32.gmra.mrb[0].mxu0 %v2311
      %v2478 = vpop.f32.mrb[0].mxu0
      %v2479 = vadd.f32 0.0, %v2478
      %v2480 = vpop.f32.mrb[0].mxu0
      %2481 = vmatprep.mubr.f32.mxu0 0.0
      %2482 = vmatmul.mubr.f32.gmra.mrb[0].mxu0 %v2312
      %v2483 = vpop.f32.mrb[0].mxu0
      %v2484 = vadd.f32 0.0, %v2483
      %v2485 = vpop.f32.mrb[0].mxu0
      %2486 = vmatprep.mubr.f32.mxu0 0.0
      %2487 = vmatmul.mubr.f32.gmra.mrb[0].mxu0 %v2313
      %v2488 = vpop.f32.mrb[0].mxu0
      %v2489 = vadd.f32 0.0, %v2488
      %v2490 = vpop.f32.mrb[0].mxu0
      %2491 = vmatprep.mubr.f32.mxu0 0.0
      %2492 = vmatmul.mubr.f32.gmra.mrb[0].mxu0 %v2314
      %v2493 = vpop.f32.mrb[0].mxu0
      %v2494 = vadd.f32 0.0, %v2493
      %v2495 = vpop.f32.mrb[0].mxu0
      %2496 = vmatprep.mubr.f32.mxu0 0.0
      %2497 = vmatmul.mubr.f32.gmra.mrb[0].mxu0 %v2315
      %v2498 = vpop.f32.mrb[0].mxu0
      %v2499 = vadd.f32 0.0, %v2498
      %v2500 = vpop.f32.mrb[0].mxu0
      %2501 = vmatprep.mubr.f32.mxu0 0.0
      %2502 = vmatmul.mubr.f32.gmra.mrb[0].mxu0 %v2316
      %v2503 = vpop.f32.mrb[0].mxu0
      %v2504 = vadd.f32 0.0, %v2503
      %v2505 = vpop.f32.mrb[0].mxu0
      %2506 = vmatprep.mubr.f32.mxu0 0.0
      %2507 = vmatmul.mubr.f32.gmra.mrb[0].mxu0 %v2317
      %v2508 = vpop.f32.mrb[0].mxu0
      %v2509 = vadd.f32 0.0, %v2508
      %v2510 = vpop.f32.mrb[0].mxu0
      %2511 = vmatprep.mubr.f32.mxu0 0.0
      %2512 = vmatmul.mubr.f32.gmra.mrb[0].mxu0 %v2318
      %v2513 = vpop.f32.mrb[0].mxu0
      %v2514 = vadd.f32 0.0, %v2513
      %v2515 = vpop.f32.mrb[0].mxu0
      %2516 = vmatprep.mubr.f32.mxu0 0.0
      %2517 = vmatmul.mubr.f32.gmra.mrb[0].mxu0 %v2319
      %v2518 = vpop.f32.mrb[0].mxu0
      %v2519 = vadd.f32 0.0, %v2518
      %v2520 = vpop.f32.mrb[0].mxu0
      %2521 = vmatprep.mubr.f32.mxu0 0.0
      %2522 = vmatmul.mubr.f32.gmra.mrb[0].mxu0 %v2320
      %v2523 = vpop.f32.mrb[0].mxu0
      %v2524 = vadd.f32 0.0, %v2523
      %v2525 = vpop.f32.mrb[0].mxu0
      %2526 = vmatprep.mubr.f32.mxu0 0.0
      %2527 = vmatmul.mubr.f32.gmra.mrb[0].mxu0 %v2321
      %v2528 = vpop.f32.mrb[0].mxu0
      %v2529 = vadd.f32 0.0, %v2528
      %v2530 = vpop.f32.mrb[0].mxu0
      %2531 = vmatprep.mubr.f32.mxu0 0.0
      %2532 = vmatmul.mubr.f32.gmra.mrb[0].mxu0 %v2322
      %v2533 = vpop.f32.mrb[0].mxu0
      %v2534 = vadd.f32 0.0, %v2533
      %v2535 = vpop.f32.mrb[0].mxu0
      %2536 = vmatprep.mubr.f32.mxu0 0.0
      %2537 = vmatmul.mubr.f32.gmra.mrb[0].mxu0 %v2323
      %v2538 = vpop.f32.mrb[0].mxu0
      %v2539 = vadd.f32 0.0, %v2538
      %v2540 = vpop.f32.mrb[0].mxu0
      %2541 = vmatprep.mubr.f32.mxu0 0.0
      %2542 = vmatmul.mubr.f32.gmra.mrb[0].mxu0 %v2324
      %v2543 = vpop.f32.mrb[0].mxu0
      %v2544 = vadd.f32 0.0, %v2543
      %v2545 = vpop.f32.mrb[0].mxu0
      %2546 = vmatprep.mubr.f32.mxu0 0.0
      %2547 = vmatmul.mubr.f32.gmra.mrb[0].mxu0 %v2325
      %v2548 = vpop.f32.mrb[0].mxu0
      %v2549 = vadd.f32 0.0, %v2548
      %v2550 = vpop.f32.mrb[0].mxu0
      %2551 = vmatprep.mubr.f32.mxu0 0.0
      %2552 = vmatmul.mubr.f32.gmra.mrb[0].mxu0 %v2326
      %v2553 = vpop.f32.mrb[0].mxu0
      %v2554 = vadd.f32 0.0, %v2553
      %v2555 = vpop.f32.mrb[0].mxu0
      %2556 = vmatprep.mubr.f32.mxu0 0.0
      %2557 = vmatmul.mubr.f32.gmra.mrb[0].mxu0 %v2327
      %v2558 = vpop.f32.mrb[0].mxu0
      %v2559 = vadd.f32 0.0, %v2558
      %v2560 = vpop.f32.mrb[0].mxu0
      %2561 = vmatprep.mubr.f32.mxu0 0.0
      %2562 = vmatmul.mubr.f32.gmra.mrb[0].mxu0 %v2328
      %v2563 = vpop.f32.mrb[0].mxu0
      %v2564 = vadd.f32 0.0, %v2563
      %v2565 = vpop.f32.mrb[0].mxu0
      %2566 = vmatprep.mubr.f32.mxu0 0.0
      %2567 = vmatmul.mubr.f32.gmra.mrb[0].mxu0 %v2329
      %v2568 = vpop.f32.mrb[0].mxu0
      %v2569 = vadd.f32 0.0, %v2568
      %v2570 = vpop.f32.mrb[0].mxu0
      %2571 = vdwg.mxu0
      %v2572 = vadd.f32 %v2266, %v2414
      %v2573 = vadd.f32 %v2267, %v2419
      %v2574 = vadd.f32 %v2268, %v2424
      %v2575 = vadd.f32 %v2269, %v2429
      %v2576 = vadd.f32 %v2270, %v2434
      %v2577 = vadd.f32 %v2271, %v2439
      %v2578 = vadd.f32 %v2272, %v2444
      %v2579 = vadd.f32 %v2273, %v2449
      %v2580 = vadd.f32 %v2274, %v2454
      %v2581 = vadd.f32 %v2275, %v2459
      %v2582 = vadd.f32 %v2276, %v2464
      %v2583 = vadd.f32 %v2277, %v2469
      %v2584 = vadd.f32 %v2278, %v2474
      %v2585 = vadd.f32 %v2279, %v2479
      %v2586 = vadd.f32 %v2280, %v2484
      %v2587 = vadd.f32 %v2281, %v2489
      %v2588 = vadd.f32 %v2282, %v2494
      %v2589 = vadd.f32 %v2283, %v2499
      %v2590 = vadd.f32 %v2284, %v2504
      %v2591 = vadd.f32 %v2285, %v2509
      %v2592 = vadd.f32 %v2286, %v2514
      %v2593 = vadd.f32 %v2287, %v2519
      %v2594 = vadd.f32 %v2288, %v2524
      %v2595 = vadd.f32 %v2289, %v2529
      %v2596 = vadd.f32 %v2290, %v2534
      %v2597 = vadd.f32 %v2291, %v2539
      %v2598 = vadd.f32 %v2292, %v2544
      %v2599 = vadd.f32 %v2293, %v2549
      %v2600 = vadd.f32 %v2294, %v2554
      %v2601 = vadd.f32 %v2295, %v2559
      %v2602 = vadd.f32 %v2296, %v2564
      %v2603 = vadd.f32 %v2297, %v2569
      %v2604 = vld [vmem:[%s1991 + $0x2] sm:$0xff]
      %v2605 = vld [vmem:[%s1991 + $0xa] sm:$0xff]
      %v2606 = vld [vmem:[%s1991 + $0x1a] sm:$0xff]
      %v2607 = vld [vmem:[%s1991 + $0x22] sm:$0xff]
      %v2608 = vld [vmem:[%s1991 + $0x32] sm:$0xff]
      %v2609 = vld [vmem:[%s1991 + $0x3a] sm:$0xff]
      %v2610 = vld [vmem:[%s1991 + $0x4a] sm:$0xff]
      %v2611 = vld [vmem:[%s1991 + $0x52] sm:$0xff]
      %v2612 = vld [vmem:[%s1991 + $0x62] sm:$0xff]
      %v2613 = vld [vmem:[%s1991 + $0x6a] sm:$0xff]
      %v2614 = vld [vmem:[%s1991 + $0x7a] sm:$0xff]
      %v2615 = vld [vmem:[%s1991 + $0x82] sm:$0xff]
      %v2616 = vld [vmem:[%s1991 + $0x92] sm:$0xff]
      %v2617 = vld [vmem:[%s1991 + $0x9a] sm:$0xff]
      %v2618 = vld [vmem:[%s1991 + $0xaa] sm:$0xff]
      %v2619 = vld [vmem:[%s1991 + $0xb2] sm:$0xff]
      %v2620 = vld [vmem:[%s1991 + $0xc2] sm:$0xff]
      %v2621 = vld [vmem:[%s1991 + $0xca] sm:$0xff]
      %v2622 = vld [vmem:[%s1991 + $0xda] sm:$0xff]
      %v2623 = vld [vmem:[%s1991 + $0xe2] sm:$0xff]
      %v2624 = vld [vmem:[%s1991 + $0xf2] sm:$0xff]
      %v2625 = vld [vmem:[%s1991 + $0xfa] sm:$0xff]
      %v2626 = vld [vmem:[%s1991 + $0x10a] sm:$0xff]
      %v2627 = vld [vmem:[%s1991 + $0x112] sm:$0xff]
      %v2628 = vld [vmem:[%s1991 + $0x122] sm:$0xff]
      %v2629 = vld [vmem:[%s1991 + $0x12a] sm:$0xff]
      %v2630 = vld [vmem:[%s1991 + $0x13a] sm:$0xff]
      %v2631 = vld [vmem:[%s1991 + $0x142] sm:$0xff]
      %v2632 = vld [vmem:[%s1991 + $0x152] sm:$0xff]
      %v2633 = vld [vmem:[%s1991 + $0x15a] sm:$0xff]
      %v2634 = vld [vmem:[%s1991 + $0x16a] sm:$0xff]
      %v2635 = vld [vmem:[%s1991 + $0x172] sm:$0xff]
      %s2636 = scalar_lea.vmem %s1, 1024
      %v2637 = vld [vmem:[%s2636] sm:$0xff]
      %v2638 = vld [vmem:[%s2636 + $0x8] sm:$0xff]
      %v2639 = vld [vmem:[%s2636 + $0x10] sm:$0xff]
      %v2640 = vld [vmem:[%s2636 + $0x18] sm:$0xff]
      %v2641 = vld [vmem:[%s2636 + $0x20] sm:$0xff]
      %v2642 = vld [vmem:[%s2636 + $0x28] sm:$0xff]
      %v2643 = vld [vmem:[%s2636 + $0x30] sm:$0xff]
      %v2644 = vld [vmem:[%s2636 + $0x38] sm:$0xff]
      %v2645 = vld [vmem:[%s2636 + $0x40] sm:$0xff]
      %v2646 = vld [vmem:[%s2636 + $0x48] sm:$0xff]
      %v2647 = vld [vmem:[%s2636 + $0x50] sm:$0xff]
      %v2648 = vld [vmem:[%s2636 + $0x58] sm:$0xff]
      %v2649 = vld [vmem:[%s2636 + $0x60] sm:$0xff]
      %v2650 = vld [vmem:[%s2636 + $0x68] sm:$0xff]
      %v2651 = vld [vmem:[%s2636 + $0x70] sm:$0xff]
      %v2652 = vld [vmem:[%s2636 + $0x78] sm:$0xff]
      %2653 = vmatprep.subr.mxu0 0.0
      %2654 = vmatpush1.msra.mxu0 %v2637
      %2655 = vmatprep.subr.mxu0 0.0
      %2656 = vmatpush1.msra.mxu0 %v2638
      %2657 = vmatprep.subr.mxu0 0.0
      %2658 = vmatpush1.msra.mxu0 %v2639
      %2659 = vmatprep.subr.mxu0 0.0
      %2660 = vmatpush1.msra.mxu0 %v2640
      %2661 = vmatprep.subr.mxu0 0.0
      %2662 = vmatpush1.msra.mxu0 %v2641
      %2663 = vmatprep.subr.mxu0 0.0
      %2664 = vmatpush1.msra.mxu0 %v2642
      %2665 = vmatprep.subr.mxu0 0.0
      %2666 = vmatpush1.msra.mxu0 %v2643
      %2667 = vmatprep.subr.mxu0 0.0
      %2668 = vmatpush1.msra.mxu0 %v2644
      %2669 = vmatprep.subr.mxu0 0.0
      %2670 = vmatpush1.msra.mxu0 %v2645
      %2671 = vmatprep.subr.mxu0 0.0
      %2672 = vmatpush1.msra.mxu0 %v2646
      %2673 = vmatprep.subr.mxu0 0.0
      %2674 = vmatpush1.msra.mxu0 %v2647
      %2675 = vmatprep.subr.mxu0 0.0
      %2676 = vmatpush1.msra.mxu0 %v2648
      %2677 = vmatprep.subr.mxu0 0.0
      %2678 = vmatpush1.msra.mxu0 %v2649
      %2679 = vmatprep.subr.mxu0 0.0
      %2680 = vmatpush1.msra.mxu0 %v2650
      %2681 = vmatprep.subr.mxu0 0.0
      %2682 = vmatpush1.msra.mxu0 %v2651
      %2683 = vmatprep.subr.mxu0 0.0
      %2684 = vmatpush1.msra.mxu0 %v2652
      %2685 = vmatprep.subr.mxu0 0.0
      %2686 = vmatpush1.msra.mxu0 0.0
      %2687 = vmatprep.subr.mxu0 0.0
      %2688 = vmatpush1.msra.mxu0 0.0
      %2689 = vmatprep.subr.mxu0 0.0
      %2690 = vmatpush1.msra.mxu0 0.0
      %2691 = vmatprep.subr.mxu0 0.0
      %2692 = vmatpush1.msra.mxu0 0.0
      %2693 = vmatprep.subr.mxu0 0.0
      %2694 = vmatpush1.msra.mxu0 0.0
      %2695 = vmatprep.subr.mxu0 0.0
      %2696 = vmatpush1.msra.mxu0 0.0
      %2697 = vmatprep.subr.mxu0 0.0
      %2698 = vmatpush1.msra.mxu0 0.0
      %2699 = vmatprep.subr.mxu0 0.0
      %2700 = vmatpush1.msra.mxu0 0.0
      %2701 = vmatprep.subr.mxu0 0.0
      %2702 = vmatpush1.msra.mxu0 0.0
      %2703 = vmatprep.subr.mxu0 0.0
      %2704 = vmatpush1.msra.mxu0 0.0
      %2705 = vmatprep.subr.mxu0 0.0
      %2706 = vmatpush1.msra.mxu0 0.0
      %2707 = vmatprep.subr.mxu0 0.0
      %2708 = vmatpush1.msra.mxu0 0.0
      %2709 = vmatprep.subr.mxu0 0.0
      %2710 = vmatpush1.msra.mxu0 0.0
      %2711 = vmatprep.subr.mxu0 0.0
      %2712 = vmatpush1.msra.mxu0 0.0
      %2713 = vmatprep.subr.mxu0 0.0
      %2714 = vmatpush1.msra.mxu0 0.0
      %2715 = vmatprep.subr.mxu0 0.0
      %2716 = vmatpush1.msra.mxu0 0.0
      %2717 = vmatprep.mubr.f32.mxu0 0.0
      %2718 = vmatmul.mubr.f32.gmra.mrb[0].mxu0 %v2604
      %v2719 = vpop.f32.mrb[0].mxu0
      %v2720 = vadd.f32 0.0, %v2719
      %v2721 = vpop.f32.mrb[0].mxu0
      %2722 = vmatprep.mubr.f32.mxu0 0.0
      %2723 = vmatmul.mubr.f32.gmra.mrb[0].mxu0 %v2605
      %v2724 = vpop.f32.mrb[0].mxu0
      %v2725 = vadd.f32 0.0, %v2724
      %v2726 = vpop.f32.mrb[0].mxu0
      %2727 = vmatprep.mubr.f32.mxu0 0.0
      %2728 = vmatmul.mubr.f32.gmra.mrb[0].mxu0 %v2606
      %v2729 = vpop.f32.mrb[0].mxu0
      %v2730 = vadd.f32 0.0, %v2729
      %v2731 = vpop.f32.mrb[0].mxu0
      %2732 = vmatprep.mubr.f32.mxu0 0.0
      %2733 = vmatmul.mubr.f32.gmra.mrb[0].mxu0 %v2607
      %v2734 = vpop.f32.mrb[0].mxu0
      %v2735 = vadd.f32 0.0, %v2734
      %v2736 = vpop.f32.mrb[0].mxu0
      %2737 = vmatprep.mubr.f32.mxu0 0.0
      %2738 = vmatmul.mubr.f32.gmra.mrb[0].mxu0 %v2608
      %v2739 = vpop.f32.mrb[0].mxu0
      %v2740 = vadd.f32 0.0, %v2739
      %v2741 = vpop.f32.mrb[0].mxu0
      %2742 = vmatprep.mubr.f32.mxu0 0.0
      %2743 = vmatmul.mubr.f32.gmra.mrb[0].mxu0 %v2609
      %v2744 = vpop.f32.mrb[0].mxu0
      %v2745 = vadd.f32 0.0, %v2744
      %v2746 = vpop.f32.mrb[0].mxu0
      %2747 = vmatprep.mubr.f32.mxu0 0.0
      %2748 = vmatmul.mubr.f32.gmra.mrb[0].mxu0 %v2610
      %v2749 = vpop.f32.mrb[0].mxu0
      %v2750 = vadd.f32 0.0, %v2749
      %v2751 = vpop.f32.mrb[0].mxu0
      %2752 = vmatprep.mubr.f32.mxu0 0.0
      %2753 = vmatmul.mubr.f32.gmra.mrb[0].mxu0 %v2611
      %v2754 = vpop.f32.mrb[0].mxu0
      %v2755 = vadd.f32 0.0, %v2754
      %v2756 = vpop.f32.mrb[0].mxu0
      %2757 = vmatprep.mubr.f32.mxu0 0.0
      %2758 = vmatmul.mubr.f32.gmra.mrb[0].mxu0 %v2612
      %v2759 = vpop.f32.mrb[0].mxu0
      %v2760 = vadd.f32 0.0, %v2759
      %v2761 = vpop.f32.mrb[0].mxu0
      %2762 = vmatprep.mubr.f32.mxu0 0.0
      %2763 = vmatmul.mubr.f32.gmra.mrb[0].mxu0 %v2613
      %v2764 = vpop.f32.mrb[0].mxu0
      %v2765 = vadd.f32 0.0, %v2764
      %v2766 = vpop.f32.mrb[0].mxu0
      %2767 = vmatprep.mubr.f32.mxu0 0.0
      %2768 = vmatmul.mubr.f32.gmra.mrb[0].mxu0 %v2614
      %v2769 = vpop.f32.mrb[0].mxu0
      %v2770 = vadd.f32 0.0, %v2769
      %v2771 = vpop.f32.mrb[0].mxu0
      %2772 = vmatprep.mubr.f32.mxu0 0.0
      %2773 = vmatmul.mubr.f32.gmra.mrb[0].mxu0 %v2615
      %v2774 = vpop.f32.mrb[0].mxu0
      %v2775 = vadd.f32 0.0, %v2774
      %v2776 = vpop.f32.mrb[0].mxu0
      %2777 = vmatprep.mubr.f32.mxu0 0.0
      %2778 = vmatmul.mubr.f32.gmra.mrb[0].mxu0 %v2616
      %v2779 = vpop.f32.mrb[0].mxu0
      %v2780 = vadd.f32 0.0, %v2779
      %v2781 = vpop.f32.mrb[0].mxu0
      %2782 = vmatprep.mubr.f32.mxu0 0.0
      %2783 = vmatmul.mubr.f32.gmra.mrb[0].mxu0 %v2617
      %v2784 = vpop.f32.mrb[0].mxu0
      %v2785 = vadd.f32 0.0, %v2784
      %v2786 = vpop.f32.mrb[0].mxu0
      %2787 = vmatprep.mubr.f32.mxu0 0.0
      %2788 = vmatmul.mubr.f32.gmra.mrb[0].mxu0 %v2618
      %v2789 = vpop.f32.mrb[0].mxu0
      %v2790 = vadd.f32 0.0, %v2789
      %v2791 = vpop.f32.mrb[0].mxu0
      %2792 = vmatprep.mubr.f32.mxu0 0.0
      %2793 = vmatmul.mubr.f32.gmra.mrb[0].mxu0 %v2619
      %v2794 = vpop.f32.mrb[0].mxu0
      %v2795 = vadd.f32 0.0, %v2794
      %v2796 = vpop.f32.mrb[0].mxu0
      %2797 = vmatprep.mubr.f32.mxu0 0.0
      %2798 = vmatmul.mubr.f32.gmra.mrb[0].mxu0 %v2620
      %v2799 = vpop.f32.mrb[0].mxu0
      %v2800 = vadd.f32 0.0, %v2799
      %v2801 = vpop.f32.mrb[0].mxu0
      %2802 = vmatprep.mubr.f32.mxu0 0.0
      %2803 = vmatmul.mubr.f32.gmra.mrb[0].mxu0 %v2621
      %v2804 = vpop.f32.mrb[0].mxu0
      %v2805 = vadd.f32 0.0, %v2804
      %v2806 = vpop.f32.mrb[0].mxu0
      %2807 = vmatprep.mubr.f32.mxu0 0.0
      %2808 = vmatmul.mubr.f32.gmra.mrb[0].mxu0 %v2622
      %v2809 = vpop.f32.mrb[0].mxu0
      %v2810 = vadd.f32 0.0, %v2809
      %v2811 = vpop.f32.mrb[0].mxu0
      %2812 = vmatprep.mubr.f32.mxu0 0.0
      %2813 = vmatmul.mubr.f32.gmra.mrb[0].mxu0 %v2623
      %v2814 = vpop.f32.mrb[0].mxu0
      %v2815 = vadd.f32 0.0, %v2814
      %v2816 = vpop.f32.mrb[0].mxu0
      %2817 = vmatprep.mubr.f32.mxu0 0.0
      %2818 = vmatmul.mubr.f32.gmra.mrb[0].mxu0 %v2624
      %v2819 = vpop.f32.mrb[0].mxu0
      %v2820 = vadd.f32 0.0, %v2819
      %v2821 = vpop.f32.mrb[0].mxu0
      %2822 = vmatprep.mubr.f32.mxu0 0.0
      %2823 = vmatmul.mubr.f32.gmra.mrb[0].mxu0 %v2625
      %v2824 = vpop.f32.mrb[0].mxu0
      %v2825 = vadd.f32 0.0, %v2824
      %v2826 = vpop.f32.mrb[0].mxu0
      %2827 = vmatprep.mubr.f32.mxu0 0.0
      %2828 = vmatmul.mubr.f32.gmra.mrb[0].mxu0 %v2626
      %v2829 = vpop.f32.mrb[0].mxu0
      %v2830 = vadd.f32 0.0, %v2829
      %v2831 = vpop.f32.mrb[0].mxu0
      %2832 = vmatprep.mubr.f32.mxu0 0.0
      %2833 = vmatmul.mubr.f32.gmra.mrb[0].mxu0 %v2627
      %v2834 = vpop.f32.mrb[0].mxu0
      %v2835 = vadd.f32 0.0, %v2834
      %v2836 = vpop.f32.mrb[0].mxu0
      %2837 = vmatprep.mubr.f32.mxu0 0.0
      %2838 = vmatmul.mubr.f32.gmra.mrb[0].mxu0 %v2628
      %v2839 = vpop.f32.mrb[0].mxu0
      %v2840 = vadd.f32 0.0, %v2839
      %v2841 = vpop.f32.mrb[0].mxu0
      %2842 = vmatprep.mubr.f32.mxu0 0.0
      %2843 = vmatmul.mubr.f32.gmra.mrb[0].mxu0 %v2629
      %v2844 = vpop.f32.mrb[0].mxu0
      %v2845 = vadd.f32 0.0, %v2844
      %v2846 = vpop.f32.mrb[0].mxu0
      %2847 = vmatprep.mubr.f32.mxu0 0.0
      %2848 = vmatmul.mubr.f32.gmra.mrb[0].mxu0 %v2630
      %v2849 = vpop.f32.mrb[0].mxu0
      %v2850 = vadd.f32 0.0, %v2849
      %v2851 = vpop.f32.mrb[0].mxu0
      %2852 = vmatprep.mubr.f32.mxu0 0.0
      %2853 = vmatmul.mubr.f32.gmra.mrb[0].mxu0 %v2631
      %v2854 = vpop.f32.mrb[0].mxu0
      %v2855 = vadd.f32 0.0, %v2854
      %v2856 = vpop.f32.mrb[0].mxu0
      %2857 = vmatprep.mubr.f32.mxu0 0.0
      %2858 = vmatmul.mubr.f32.gmra.mrb[0].mxu0 %v2632
      %v2859 = vpop.f32.mrb[0].mxu0
      %v2860 = vadd.f32 0.0, %v2859
      %v2861 = vpop.f32.mrb[0].mxu0
      %2862 = vmatprep.mubr.f32.mxu0 0.0
      %2863 = vmatmul.mubr.f32.gmra.mrb[0].mxu0 %v2633
      %v2864 = vpop.f32.mrb[0].mxu0
      %v2865 = vadd.f32 0.0, %v2864
      %v2866 = vpop.f32.mrb[0].mxu0
      %2867 = vmatprep.mubr.f32.mxu0 0.0
      %2868 = vmatmul.mubr.f32.gmra.mrb[0].mxu0 %v2634
      %v2869 = vpop.f32.mrb[0].mxu0
      %v2870 = vadd.f32 0.0, %v2869
      %v2871 = vpop.f32.mrb[0].mxu0
      %2872 = vmatprep.mubr.f32.mxu0 0.0
      %2873 = vmatmul.mubr.f32.gmra.mrb[0].mxu0 %v2635
      %v2874 = vpop.f32.mrb[0].mxu0
      %v2875 = vadd.f32 0.0, %v2874
      %v2876 = vpop.f32.mrb[0].mxu0
      %2877 = vdwg.mxu0
      %v2878 = vadd.f32 %v2572, %v2720
      %v2879 = vadd.f32 %v2573, %v2725
      %v2880 = vadd.f32 %v2574, %v2730
      %v2881 = vadd.f32 %v2575, %v2735
      %v2882 = vadd.f32 %v2576, %v2740
      %v2883 = vadd.f32 %v2577, %v2745
      %v2884 = vadd.f32 %v2578, %v2750
      %v2885 = vadd.f32 %v2579, %v2755
      %v2886 = vadd.f32 %v2580, %v2760
      %v2887 = vadd.f32 %v2581, %v2765
      %v2888 = vadd.f32 %v2582, %v2770
      %v2889 = vadd.f32 %v2583, %v2775
      %v2890 = vadd.f32 %v2584, %v2780
      %v2891 = vadd.f32 %v2585, %v2785
      %v2892 = vadd.f32 %v2586, %v2790
      %v2893 = vadd.f32 %v2587, %v2795
      %v2894 = vadd.f32 %v2588, %v2800
      %v2895 = vadd.f32 %v2589, %v2805
      %v2896 = vadd.f32 %v2590, %v2810
      %v2897 = vadd.f32 %v2591, %v2815
      %v2898 = vadd.f32 %v2592, %v2820
      %v2899 = vadd.f32 %v2593, %v2825
      %v2900 = vadd.f32 %v2594, %v2830
      %v2901 = vadd.f32 %v2595, %v2835
      %v2902 = vadd.f32 %v2596, %v2840
      %v2903 = vadd.f32 %v2597, %v2845
      %v2904 = vadd.f32 %v2598, %v2850
      %v2905 = vadd.f32 %v2599, %v2855
      %v2906 = vadd.f32 %v2600, %v2860
      %v2907 = vadd.f32 %v2601, %v2865
      %v2908 = vadd.f32 %v2602, %v2870
      %v2909 = vadd.f32 %v2603, %v2875
      %2910 = vst [vmem:[%s210] sm:$0xff] %v2878
      %2911 = vst [vmem:[%s210 + $0x8] sm:$0xff] %v2879
      %2912 = vst [vmem:[%s210 + $0x10] sm:$0xff] %v2880
      %2913 = vst [vmem:[%s210 + $0x18] sm:$0xff] %v2881
      %2914 = vst [vmem:[%s210 + $0x20] sm:$0xff] %v2882
      %2915 = vst [vmem:[%s210 + $0x28] sm:$0xff] %v2883
      %2916 = vst [vmem:[%s210 + $0x30] sm:$0xff] %v2884
      %2917 = vst [vmem:[%s210 + $0x38] sm:$0xff] %v2885
      %2918 = vst [vmem:[%s210 + $0x40] sm:$0xff] %v2886
      %2919 = vst [vmem:[%s210 + $0x48] sm:$0xff] %v2887
      %2920 = vst [vmem:[%s210 + $0x50] sm:$0xff] %v2888
      %2921 = vst [vmem:[%s210 + $0x58] sm:$0xff] %v2889
      %2922 = vst [vmem:[%s210 + $0x60] sm:$0xff] %v2890
      %2923 = vst [vmem:[%s210 + $0x68] sm:$0xff] %v2891
      %2924 = vst [vmem:[%s210 + $0x70] sm:$0xff] %v2892
      %2925 = vst [vmem:[%s210 + $0x78] sm:$0xff] %v2893
      %2926 = vst [vmem:[%s210 + $0x80] sm:$0xff] %v2894
      %2927 = vst [vmem:[%s210 + $0x88] sm:$0xff] %v2895
      %2928 = vst [vmem:[%s210 + $0x90] sm:$0xff] %v2896
      %2929 = vst [vmem:[%s210 + $0x98] sm:$0xff] %v2897
      %2930 = vst [vmem:[%s210 + $0xa0] sm:$0xff] %v2898
      %2931 = vst [vmem:[%s210 + $0xa8] sm:$0xff] %v2899
      %2932 = vst [vmem:[%s210 + $0xb0] sm:$0xff] %v2900
      %2933 = vst [vmem:[%s210 + $0xb8] sm:$0xff] %v2901
      %2934 = vst [vmem:[%s210 + $0xc0] sm:$0xff] %v2902
      %2935 = vst [vmem:[%s210 + $0xc8] sm:$0xff] %v2903
      %2936 = vst [vmem:[%s210 + $0xd0] sm:$0xff] %v2904
      %2937 = vst [vmem:[%s210 + $0xd8] sm:$0xff] %v2905
      %2938 = vst [vmem:[%s210 + $0xe0] sm:$0xff] %v2906
      %2939 = vst [vmem:[%s210 + $0xe8] sm:$0xff] %v2907
      %2940 = vst [vmem:[%s210 + $0xf0] sm:$0xff] %v2908
      %2941 = vst [vmem:[%s210 + $0xf8] sm:$0xff] %v2909
      %v2942 = vadd.f32 %v2878, %v2879
      %v2943 = vadd.f32 %v2942, %v2880
      %v2944 = vadd.f32 %v2943, %v2881
      %v2945 = vadd.f32 %v2944, %v2882
      %v2946 = vadd.f32 %v2945, %v2883
      %v2947 = vadd.f32 %v2946, %v2884
      %v2948 = vadd.f32 %v2947, %v2885
      %v2949 = vadd.f32 %v2948, %v2886
      %v2950 = vadd.f32 %v2949, %v2887
      %v2951 = vadd.f32 %v2950, %v2888
      %v2952 = vadd.f32 %v2951, %v2889
      %v2953 = vadd.f32 %v2952, %v2890
      %v2954 = vadd.f32 %v2953, %v2891
      %v2955 = vadd.f32 %v2954, %v2892
      %v2956 = vadd.f32 %v2955, %v2893
      %v2957 = vadd.f32 %v2956, %v2894
      %v2958 = vadd.f32 %v2957, %v2895
      %v2959 = vadd.f32 %v2958, %v2896
      %v2960 = vadd.f32 %v2959, %v2897
      %v2961 = vadd.f32 %v2960, %v2898
      %v2962 = vadd.f32 %v2961, %v2899
      %v2963 = vadd.f32 %v2962, %v2900
      %v2964 = vadd.f32 %v2963, %v2901
      %v2965 = vadd.f32 %v2964, %v2902
      %v2966 = vadd.f32 %v2965, %v2903
      %v2967 = vadd.f32 %v2966, %v2904
      %v2968 = vadd.f32 %v2967, %v2905
      %v2969 = vadd.f32 %v2968, %v2906
      %v2970 = vadd.f32 %v2969, %v2907
      %v2971 = vadd.f32 %v2970, %v2908
      %v2972 = vadd.f32 %v2971, %v2909
      %v2973 = vrot.slane %v2972, 4
      %v2974 = vadd.f32 %v2972, %v2973
      %v2975 = vrot.slane %v2974, 2
      %v2976 = vadd.f32 %v2974, %v2975
      %v2977 = vrot.slane %v2976, 1
      %v2978 = vadd.f32 %v2976, %v2977
      %v2979 = vmul.f32 %v2878, %v2878
      %v2980 = vmul.f32 %v2879, %v2879
      %v2981 = vmul.f32 %v2880, %v2880
      %v2982 = vmul.f32 %v2881, %v2881
      %v2983 = vmul.f32 %v2882, %v2882
      %v2984 = vmul.f32 %v2883, %v2883
      %v2985 = vmul.f32 %v2884, %v2884
      %v2986 = vmul.f32 %v2885, %v2885
      %v2987 = vmul.f32 %v2886, %v2886
      %v2988 = vmul.f32 %v2887, %v2887
      %v2989 = vmul.f32 %v2888, %v2888
      %v2990 = vmul.f32 %v2889, %v2889
      %v2991 = vmul.f32 %v2890, %v2890
      %v2992 = vmul.f32 %v2891, %v2891
      %v2993 = vmul.f32 %v2892, %v2892
      %v2994 = vmul.f32 %v2893, %v2893
      %v2995 = vmul.f32 %v2894, %v2894
      %v2996 = vmul.f32 %v2895, %v2895
      %v2997 = vmul.f32 %v2896, %v2896
      %v2998 = vmul.f32 %v2897, %v2897
      %v2999 = vmul.f32 %v2898, %v2898
      %v3000 = vmul.f32 %v2899, %v2899
      %v3001 = vmul.f32 %v2900, %v2900
      %v3002 = vmul.f32 %v2901, %v2901
      %v3003 = vmul.f32 %v2902, %v2902
      %v3004 = vmul.f32 %v2903, %v2903
      %v3005 = vmul.f32 %v2904, %v2904
      %v3006 = vmul.f32 %v2905, %v2905
      %v3007 = vmul.f32 %v2906, %v2906
      %v3008 = vmul.f32 %v2907, %v2907
      %v3009 = vmul.f32 %v2908, %v2908
      %v3010 = vmul.f32 %v2909, %v2909
      %v3011 = vadd.f32 %v2979, %v2980
      %v3012 = vadd.f32 %v3011, %v2981
      %v3013 = vadd.f32 %v3012, %v2982
      %v3014 = vadd.f32 %v3013, %v2983
      %v3015 = vadd.f32 %v3014, %v2984
      %v3016 = vadd.f32 %v3015, %v2985
      %v3017 = vadd.f32 %v3016, %v2986
      %v3018 = vadd.f32 %v3017, %v2987
      %v3019 = vadd.f32 %v3018, %v2988
      %v3020 = vadd.f32 %v3019, %v2989
      %v3021 = vadd.f32 %v3020, %v2990
      %v3022 = vadd.f32 %v3021, %v2991
      %v3023 = vadd.f32 %v3022, %v2992
      %v3024 = vadd.f32 %v3023, %v2993
      %v3025 = vadd.f32 %v3024, %v2994
      %v3026 = vadd.f32 %v3025, %v2995
      %v3027 = vadd.f32 %v3026, %v2996
      %v3028 = vadd.f32 %v3027, %v2997
      %v3029 = vadd.f32 %v3028, %v2998
      %v3030 = vadd.f32 %v3029, %v2999
      %v3031 = vadd.f32 %v3030, %v3000
      %v3032 = vadd.f32 %v3031, %v3001
      %v3033 = vadd.f32 %v3032, %v3002
      %v3034 = vadd.f32 %v3033, %v3003
      %v3035 = vadd.f32 %v3034, %v3004
      %v3036 = vadd.f32 %v3035, %v3005
      %v3037 = vadd.f32 %v3036, %v3006
      %v3038 = vadd.f32 %v3037, %v3007
      %v3039 = vadd.f32 %v3038, %v3008
      %v3040 = vadd.f32 %v3039, %v3009
      %v3041 = vadd.f32 %v3040, %v3010
      %v3042 = vrot.slane %v3041, 4
      %v3043 = vadd.f32 %v3041, %v3042
      %v3044 = vrot.slane %v3043, 2
      %v3045 = vadd.f32 %v3043, %v3044
      %v3046 = vrot.slane %v3045, 1
      %v3047 = vadd.f32 %v3045, %v3046
      %3048 = vst [vmem:[%s214] sm:$0xff] %v2978
      %3049 = vst [vmem:[%s218] sm:$0xff] %v3047
      %p3050 = scmp.lt.s32.totalorder %s16, 1
      %s3051 = scalar_select %p3050, %s16, 1
      %s3052 = smul.addr %s3051, 32
      %s3053 = smul.addr %s3052, 8
      %s3054 = scalar_lea.vmem %s2, %s3053
      %p3055 = scmp.lt.s32.totalorder %s16, 1
      %s3056 = scalar_select %p3055, %s16, 1
      %s3057 = smul.addr %s3056, 8
      %s3058 = scalar_lea.vmem %s3, %s3057
      %p3059 = scmp.lt.s32.totalorder %s16, 1
      %s3060 = scalar_select %p3059, %s16, 1
      %s3061 = smul.addr %s3060, 8
      %s3062 = scalar_lea.vmem %s4, %s3061
      // Predicated region
      $region29: #{residual_block.4} parent=27 // pred_check
        %p3063 = pneg %p81
      $region30: #{residual_block.4} parent=27 // pred_check_branch
        %3065 = sbr.rel (%p3063) target = $region32
      $region31: #{residual_block.4} parent=27 // pred_region
        _
      $region32: #{residual_block.4} parent=27 // pred_fallthru
        _
      // Predicated region
      $region33: #{residual_block.4} parent=27 // pred_check
        %p3066 = pneg %p107
      $region34: #{residual_block.4} parent=27 // pred_check_branch
        %3068 = sbr.rel (%p3066) target = $region36
      $region35: #{residual_block.4} parent=27 // pred_region
        _
      $region36: #{residual_block.4} parent=27 // pred_fallthru
        _
      // Predicated region
      $region37: #{residual_block.4} parent=27 // pred_check
        %p3069 = pneg %p133
      $region38: #{residual_block.4} parent=27 // pred_check_branch
        %3071 = sbr.rel (%p3069) target = $region40
      $region39: #{residual_block.4} parent=27 // pred_region
        _
      $region40: #{residual_block.4} parent=27 // pred_fallthru
        _
    $region28: #{residual_block.4} parent=5 // pred_fallthru
      _
    %p3072 = scmp.le.s32.totalorder 2, %s11
    // Predicated region
    $region41: #{residual_block.4} parent=5 // pred_check
      %p3073 = pneg %p3072
    $region42: #{residual_block.4} parent=5 // pred_check_branch
      %3075 = sbr.rel (%p3073) target = $region44
    $region43: #{residual_block.4} parent=5 // pred_region
      %s3076 = ssub.s32 %s11, 2
      // Predicated region
      $region45: #{residual_block.4} parent=43 // pred_check
        %p3077 = pneg %p87
      $region46: #{residual_block.4} parent=43 // pred_check_branch
        %3079 = sbr.rel (%p3077) target = $region48
      $region47: #{residual_block.4} parent=43 // pred_region
        %p3080 = scmp.lt.s32.totalorder %s17, 1
        %s3081 = scalar_select %p3080, %s17, 1
        %s3082 = smul.addr %s3081, 32
        %s3083 = smul.addr %s3082, 8
        %s3084 = scalar_lea.vmem %s2, %s3083
      $region48: #{residual_block.4} parent=43 // pred_fallthru
        _
      // Predicated region
      $region49: #{residual_block.4} parent=43 // pred_check
        %p3085 = pneg %p113
      $region50: #{residual_block.4} parent=43 // pred_check_branch
        %3087 = sbr.rel (%p3085) target = $region52
      $region51: #{residual_block.4} parent=43 // pred_region
        %p3088 = scmp.lt.s32.totalorder %s17, 1
        %s3089 = scalar_select %p3088, %s17, 1
        %s3090 = smul.addr %s3089, 8
        %s3091 = scalar_lea.vmem %s3, %s3090
      $region52: #{residual_block.4} parent=43 // pred_fallthru
        _
      // Predicated region
      $region53: #{residual_block.4} parent=43 // pred_check
        %p3092 = pneg %p139
      $region54: #{residual_block.4} parent=43 // pred_check_branch
        %3094 = sbr.rel (%p3092) target = $region56
      $region55: #{residual_block.4} parent=43 // pred_region
        %p3095 = scmp.lt.s32.totalorder %s17, 1
        %s3096 = scalar_select %p3095, %s17, 1
        %s3097 = smul.addr %s3096, 8
        %s3098 = scalar_lea.vmem %s4, %s3097
      $region56: #{residual_block.4} parent=43 // pred_fallthru
        _
    $region44: #{residual_block.4} parent=5 // pred_fallthru
      _
  $region6: #{residual_block.4} parent=0 // loop_footer
    %s15 = sadd.s32 1, %s11
  $region7: #{residual_block.4} parent=0 // loop_footer_branch
    %10 = sbr.rel target = $region3
  $region8: #{residual_block.4} parent=0 // loop_exit
    _

</llo_original>
